<compile_context>
chip_gen: v6e
topology: v6e:2x2x1
jax: 0.10.0
libtpu: 0.0.40
codegen_flags: <defaults>
</compile_context>

<pallas_src>
import functools
import math

import jax
import jax.numpy as jnp
from jax.experimental import pallas as pl
from jax.experimental.pallas import tpu as pltpu


def _round_up(x, m):
    return (x + m - 1) // m * m


def _device_defaults():
    """(block_v, vmem_limit_bytes) per TPU generation; conservative fallback."""
    try:
        kind = jax.devices()[0].device_kind.lower()
    except Exception:
        kind = ""
    if "v5" in kind or "v6" in kind:
        return 4096, 96 * 1024 * 1024      # 128 MiB physical VMEM: go wide
    return 2048, 48 * 1024 * 1024          # v7x (64 MiB VMEM) / unknown: safe


# --------------------------------------------------------------------------- #
# Kernel 1: recurrent state + memory attention (runs once per batch tile)
# --------------------------------------------------------------------------- #
def rmr_state_kernel(M,
                     cat_ref, rmn_h_ref, rmn_c_ref, in_mem_ref, out_mem_ref,
                     rmr_h_ref, rmr_c_ref,
                     lstm_wih_ref, lstm_whh_ref, attn_w_ref,
                     gru_wih_ref, gru_whh_ref, rmr_wih_ref, rmr_whh_ref,
                     bias_ref,
                     lstm_h_out, cell_out, rmr_h_out, rmr_c_out, cat2_out):
    f32 = jnp.float32
    Hp = rmn_c_ref.shape[1]
    Ms = in_mem_ref.shape[1]
    Mp = attn_w_ref.shape[1]

    cat_x = cat_ref[...]                                # (bb, 2Hp) f32: [relu(emb)|ctx]
    ctx = cat_x[:, Hp:2 * Hp]

    # packed biases: [lstm(4Hp) | gru_ih(3Hp) | gru_hh(3Hp) | rmr(4Hp) | attn(Mp)]
    lstm_b = bias_ref[:, 0:4 * Hp]
    gru_bih = bias_ref[:, 4 * Hp:7 * Hp]
    gru_bhh = bias_ref[:, 7 * Hp:10 * Hp]
    rmr_b = bias_ref[:, 10 * Hp:14 * Hp]
    attn_b = bias_ref[:, 14 * Hp:14 * Hp + Mp]

    # ----- LSTMCell(2H -> H): fused matmul over concatenated input (i,f,g,o) -----
    gates = (jnp.dot(cat_x, lstm_wih_ref[...], preferred_element_type=f32)
             + jnp.dot(rmn_h_ref[...], lstm_whh_ref[...], preferred_element_type=f32)
             + lstm_b)
    i_g = jax.nn.sigmoid(gates[:, 0:Hp])
    f_g = jax.nn.sigmoid(gates[:, Hp:2 * Hp])
    g_g = jnp.tanh(gates[:, 2 * Hp:3 * Hp])
    o_g = jax.nn.sigmoid(gates[:, 3 * Hp:4 * Hp])
    cell_new = f_g * rmn_c_ref[...] + i_g * g_g
    lstm_h = o_g * jnp.tanh(cell_new)
    lstm_h_out[...] = lstm_h
    cell_out[...] = cell_new

    # ----- memory attention (f32; reference applies LogSoftmax to the scores) -----
    scores = jnp.einsum('bqh,bmh->bqm', lstm_h[:, None, :], in_mem_ref[...],
                        preferred_element_type=f32)[:, 0, :]          # (bb, Ms)
    attn = (jnp.dot(scores, attn_w_ref[...], preferred_element_type=f32)
            + attn_b)                                                 # (bb, Mp)
    m_lane = jax.lax.broadcasted_iota(jnp.int32, attn.shape, 1)
    attn = jnp.where(m_lane < M, attn, -1e30)
    amax = jnp.max(attn, axis=-1, keepdims=True)
    attn_log = attn - amax - jnp.log(
        jnp.sum(jnp.exp(attn - amax), axis=-1, keepdims=True))
    attn_log = jnp.where(m_lane < M, attn_log, 0.0)    # drop padded memory slots
    w_mem = attn_log[:, 0:Ms]                                         # (bb, Ms)
    mem_ctx = jnp.einsum('bqm,bmh->bqh', w_mem[:, None, :], out_mem_ref[...],
                         preferred_element_type=f32)[:, 0, :]         # (bb, Hp)

    # ----- GRUCell(H -> H), gate order r,z,n -----
    gi = jnp.dot(mem_ctx, gru_wih_ref[...], preferred_element_type=f32) + gru_bih
    gh = jnp.dot(lstm_h, gru_whh_ref[...], preferred_element_type=f32) + gru_bhh
    r = jax.nn.sigmoid(gi[:, 0:Hp] + gh[:, 0:Hp])
    z = jax.nn.sigmoid(gi[:, Hp:2 * Hp] + gh[:, Hp:2 * Hp])
    n = jnp.tanh(gi[:, 2 * Hp:3 * Hp] + r * gh[:, 2 * Hp:3 * Hp])
    mb_out = (1.0 - z) * n + z * lstm_h

    # ----- rmr LSTMCell(H -> H) -----
    gates2 = (jnp.dot(mb_out, rmr_wih_ref[...], preferred_element_type=f32)
              + jnp.dot(rmr_h_ref[...], rmr_whh_ref[...], preferred_element_type=f32)
              + rmr_b)
    i2 = jax.nn.sigmoid(gates2[:, 0:Hp])
    f2 = jax.nn.sigmoid(gates2[:, Hp:2 * Hp])
    g2 = jnp.tanh(gates2[:, 2 * Hp:3 * Hp])
    o2 = jax.nn.sigmoid(gates2[:, 3 * Hp:4 * Hp])
    rmr_c_new = f2 * rmr_c_ref[...] + i2 * g2
    rmr_h_new = o2 * jnp.tanh(rmr_c_new)
    rmr_h_out[...] = rmr_h_new
    rmr_c_out[...] = rmr_c_new

    # concat([rmr_hidden, ctx]) (bf16) consumed by the V-tiled projection kernel
    cat2_out[:, 0:Hp] = rmr_h_new.astype(cat2_out.dtype)
    cat2_out[:, Hp:2 * Hp] = ctx.astype(cat2_out.dtype)


# --------------------------------------------------------------------------- #
# Kernel 2: Linear(2H -> V) + in-kernel log-softmax (two-phase V sweep)
#   phase 0: stream out_w tiles, accumulate running max / sum-exp in scratch
#   phase 1: stream out_w tiles again, write logits - logsumexp
# The output block index is pinned to (b, 0) during phase 0 so the pipeline
# never writes back an un-stored buffer.
# --------------------------------------------------------------------------- #
def rmr_proj_kernel(V, block_v, cat2_ref, out_w_ref, out_b_ref, logits_out,
                    m_sc, l_sc):
    f32 = jnp.float32
    p = pl.program_id(1)
    v = pl.program_id(2)

    @pl.when(jnp.logical_and(p == 0, v == 0))
    def _init():
        m_sc[...] = jnp.full(m_sc.shape, -1e30, f32)
        l_sc[...] = jnp.zeros(l_sc.shape, f32)

    logits = (jnp.dot(cat2_ref[...], out_w_ref[...], preferred_element_type=f32)
              + out_b_ref[...])                                   # (bb, block_v)
    col = v * block_v + jax.lax.broadcasted_iota(jnp.int32, logits.shape, 1)
    logits = jnp.where(col < V, logits, -1e30)

    @pl.when(p == 0)
    def _accumulate_lse():
        t_max = jnp.max(logits, axis=-1, keepdims=True)
        m_new = jnp.maximum(m_sc[...], t_max)
        l_sc[...] = (l_sc[...] * jnp.exp(m_sc[...] - m_new)
                     + jnp.sum(jnp.exp(logits - m_new), axis=-1, keepdims=True))
        m_sc[...] = m_new

    @pl.when(p == 1)
    def _write_normalized():
        lse = m_sc[...] + jnp.log(l_sc[...])
        logits_out[...] = logits - lse


# --------------------------------------------------------------------------- #
# Parameters (PyTorch layout) and kernel-friendly padded repack
# --------------------------------------------------------------------------- #
def init_params(key, hidden_size, output_size, memory_size):
    """Deterministic synthetic parameters matching the PyTorch module's shapes."""
    H, V, M = hidden_size, output_size, memory_size
    ks = jax.random.split(key, 19)

    def u(k, shape, fan):
        bound = 1.0 / math.sqrt(fan)
        return jax.random.uniform(k, shape, jnp.float32, -bound, bound)

    return dict(
        embedding=jax.random.normal(ks[0], (V, H), jnp.float32),
        m_embedding=jax.random.normal(ks[1], (V, H), jnp.float32),
        c_embedding=jax.random.normal(ks[2], (V, H), jnp.float32),
        # nn.LSTMCell(2H, H): weight_(ih|hh) are (4H, in), gate order i,f,g,o
        lstm_w_ih=u(ks[3], (4 * H, 2 * H), H),
        lstm_w_hh=u(ks[4], (4 * H, H), H),
        lstm_b_ih=u(ks[5], (4 * H,), H),
        lstm_b_hh=u(ks[6], (4 * H,), H),
        # nn.Linear(M, M)
        attn_w=u(ks[7], (M, M), M),
        attn_b=u(ks[8], (M,), M),
        # nn.GRUCell(H, H), gate order r,z,n
        gru_w_ih=u(ks[9], (3 * H, H), H),
        gru_w_hh=u(ks[10], (3 * H, H), H),
        gru_b_ih=u(ks[11], (3 * H,), H),
        gru_b_hh=u(ks[12], (3 * H,), H),
        # nn.LSTMCell(H, H)
        rmr_w_ih=u(ks[13], (4 * H, H), H),
        rmr_w_hh=u(ks[14], (4 * H, H), H),
        rmr_b_ih=u(ks[15], (4 * H,), H),
        rmr_b_hh=u(ks[16], (4 * H,), H),
        # nn.Linear(2H, V)
        out_w=u(ks[17], (V, 2 * H), 2 * H),
        out_b=u(ks[18], (V,), 2 * H),
    )


def _gate_weight(w, n_gates, n_parts, H, Hp):
    """PyTorch (n_gates*H, n_parts*H) -> kernel (n_parts*Hp, n_gates*Hp) f32,
    each gate / input part landing on its own 128-lane-aligned block."""
    w = w.reshape(n_gates, H, n_parts, H)
    w = jnp.transpose(w, (2, 3, 0, 1))                 # (part, h_in, gate, h_out)
    out = jnp.zeros((n_parts, Hp, n_gates, Hp), jnp.float32)
    out = out.at[:, :H, :, :H].set(w)
    return out.reshape(n_parts * Hp, n_gates * Hp)


def _gate_bias(b, n_gates, H, Hp):
    out = jnp.zeros((n_gates, Hp), jnp.float32)
    out = out.at[:, :H].set(b.reshape(n_gates, H))
    return out.reshape(n_gates * Hp)


def prepare_weights(params, hidden_size, output_size, memory_size):
    """One-time repack: pad to lane/sublane multiples, transpose to right-multiply
    layout.  State-path weights stay f32 (precision fidelity); only the big
    output projection is stored bf16."""
    H, V, M = hidden_size, output_size, memory_size
    Hp = _round_up(H, 128)
    Ms = _round_up(M, 8)        # M on the sublane axis (memory tensors, attn_w rows)
    Mp = _round_up(M, 128)      # M on the lane axis (attention scores, attn_w cols)
    block_v_target, vmem_limit = _device_defaults()
    v128 = _round_up(V, 128)
    block_v = min(block_v_target, v128)
    Vp = _round_up(v128, block_v)

    # packed biases: [lstm(4Hp) | gru_ih(3Hp) | gru_hh(3Hp) | rmr(4Hp) | attn(Mp)]
    biases = jnp.concatenate([
        _gate_bias(params["lstm_b_ih"] + params["lstm_b_hh"], 4, H, Hp),
        _gate_bias(params["gru_b_ih"], 3, H, Hp),
        _gate_bias(params["gru_b_hh"], 3, H, Hp),
        _gate_bias(params["rmr_b_ih"] + params["rmr_b_hh"], 4, H, Hp),
        jnp.zeros((Mp,), jnp.float32).at[:M].set(params["attn_b"]),
    ])[None, :]                                                     # (1, 14Hp+Mp)

    out_w = jnp.transpose(params["out_w"].reshape(V, 2, H), (1, 2, 0))  # (2, H, V)
    out_w_k = jnp.zeros((2, Hp, Vp), jnp.float32).at[:, :H, :V].set(out_w)
    out_w_k = out_w_k.reshape(2 * Hp, Vp).astype(jnp.bfloat16)

    return dict(
        embedding=jnp.pad(params["embedding"], ((0, 0), (0, Hp - H))),
        m_embedding=jnp.pad(params["m_embedding"], ((0, 0), (0, Hp - H))),
        c_embedding=jnp.pad(params["c_embedding"], ((0, 0), (0, Hp - H))),
        lstm_wih=_gate_weight(params["lstm_w_ih"], 4, 2, H, Hp),
        lstm_whh=_gate_weight(params["lstm_w_hh"], 4, 1, H, Hp),
        attn_w=jnp.zeros((Ms, Mp), jnp.float32).at[:M, :M].set(params["attn_w"].T),
        gru_wih=_gate_weight(params["gru_w_ih"], 3, 1, H, Hp),
        gru_whh=_gate_weight(params["gru_w_hh"], 3, 1, H, Hp),
        rmr_wih=_gate_weight(params["rmr_w_ih"], 4, 1, H, Hp),
        rmr_whh=_gate_weight(params["rmr_w_hh"], 4, 1, H, Hp),
        biases=biases,
        out_w=out_w_k,
        out_b=jnp.zeros((1, Vp), jnp.float32).at[0, :V].set(params["out_b"]),
        block_v=block_v,            # python int (static config)
        vmem_limit=vmem_limit,      # python int (static config)
    )


# --------------------------------------------------------------------------- #
# Forward (JAX glue + two pallas_calls)
# --------------------------------------------------------------------------- #
def rmr_forward(kparams, input_tokens, rmn_hidden, cell, context, batch_size,
                memory_tensor, memory_size, rmr_hidden, rmr_cell,
                hidden_size, n_layers=1):
    f32, bf16 = jnp.float32, jnp.bfloat16
    H, B, M = hidden_size, batch_size, memory_size
    V = kparams["embedding"].shape[0]
    Hp = kparams["embedding"].shape[1]
    Ms, Mp = kparams["attn_w"].shape
    Vp = kparams["out_w"].shape[1]
    block_v = kparams["block_v"]
    vmem_limit = kparams["vmem_limit"]
    gv = Vp // block_v

    # batch tiling; bb=64 when 64 < B <= 128 gives gb=2 so both v7x TCs get work
    bb = min(_round_up(B, 8), 128)
    if 64 < B <= 128:
        bb = 64
    Bp = _round_up(B, bb)
    gb = Bp // bb

    # ---- glue: embedding gathers + padding (batch-major, lane-padded layout) ----
    emb_x = jnp.take(kparams["embedding"], input_tokens.reshape(-1), axis=0)  # (B, Hp)
    x = jnp.maximum(emb_x, 0.0)                                               # relu
    ctx = context.reshape(n_layers, B, H)[0]                                  # (B, H)
    output_cat = jnp.concatenate([x[:, :H], ctx], axis=-1)     # returned `output` (B, 2H)

    ctx_p = jnp.pad(ctx, ((0, Bp - B), (0, Hp - H)))
    cat_p = jnp.concatenate([jnp.pad(x, ((0, Bp - B), (0, 0))), ctx_p], axis=-1)

    rmn_h_p = jnp.pad(rmn_hidden.reshape(B, H), ((0, Bp - B), (0, Hp - H)))
    rmn_c_p = jnp.pad(cell.reshape(B, H), ((0, Bp - B), (0, Hp - H)))
    rmr_h_p = jnp.pad(rmr_hidden.reshape(B, H), ((0, Bp - B), (0, Hp - H)))
    rmr_c_p = jnp.pad(rmr_cell.reshape(B, H), ((0, Bp - B), (0, Hp - H)))

    # memory embeddings gathered in batch-major order, M padded only to sublanes
    mem_idx = memory_tensor.T                                                 # (B, M)
    in_mem = jnp.pad(jnp.take(kparams["m_embedding"], mem_idx, axis=0),
                     ((0, Bp - B), (0, Ms - M), (0, 0)))                      # (Bp,Ms,Hp)
    out_mem = jnp.pad(jnp.take(kparams["c_embedding"], mem_idx, axis=0),
                      ((0, Bp - B), (0, Ms - M), (0, 0)))

    # ---------------- kernel 1: recurrent state + memory attention --------------
    bmap = lambda b: (b, 0)
    bmap3 = lambda b: (b, 0, 0)
    wmap = lambda b: (0, 0)

    state_grid_spec = pltpu.PrefetchScalarGridSpec(
        num_scalar_prefetch=0,
        grid=(gb,),
        in_specs=[
            pl.BlockSpec((bb, 2 * Hp), bmap),          # cat = [relu(emb) | ctx]
            pl.BlockSpec((bb, Hp), bmap),              # rmn_hidden
            pl.BlockSpec((bb, Hp), bmap),              # cell
            pl.BlockSpec((bb, Ms, Hp), bmap3),         # input_memory
            pl.BlockSpec((bb, Ms, Hp), bmap3),         # output_memory
            pl.BlockSpec((bb, Hp), bmap),              # rmr_hidden
            pl.BlockSpec((bb, Hp), bmap),              # rmr_cell
            pl.BlockSpec((2 * Hp, 4 * Hp), wmap),      # lstm_wih
            pl.BlockSpec((Hp, 4 * Hp), wmap),          # lstm_whh
            pl.BlockSpec((Ms, Mp), wmap),              # attn_w
            pl.BlockSpec((Hp, 3 * Hp), wmap),          # gru_wih
            pl.BlockSpec((Hp, 3 * Hp), wmap),          # gru_whh
            pl.BlockSpec((Hp, 4 * Hp), wmap),          # rmr_wih
            pl.BlockSpec((Hp, 4 * Hp), wmap),          # rmr_whh
            pl.BlockSpec((1, 14 * Hp + Mp), wmap),     # packed biases
        ],
        out_specs=[
            pl.BlockSpec((bb, Hp), bmap),              # lstm_hidden
            pl.BlockSpec((bb, Hp), bmap),              # cell
            pl.BlockSpec((bb, Hp), bmap),              # rmr_hidden
            pl.BlockSpec((bb, Hp), bmap),              # rmr_cell
            pl.BlockSpec((bb, 2 * Hp), bmap),          # concat([rmr_hidden, ctx]) bf16
        ],
    )

    (lstm_h_p, cell_out_p, rmr_h_out_p, rmr_c_out_p, cat2_p) = pl.pallas_call(
        functools.partial(rmr_state_kernel, M),
        out_shape=(
            jax.ShapeDtypeStruct((Bp, Hp), f32),
            jax.ShapeDtypeStruct((Bp, Hp), f32),
            jax.ShapeDtypeStruct((Bp, Hp), f32),
            jax.ShapeDtypeStruct((Bp, Hp), f32),
            jax.ShapeDtypeStruct((Bp, 2 * Hp), bf16),
        ),
        grid_spec=state_grid_spec,
        compiler_params=pltpu.CompilerParams(
            dimension_semantics=("parallel",),
            vmem_limit_bytes=vmem_limit,
        ),
    )(cat_p, rmn_h_p, rmn_c_p, in_mem, out_mem, rmr_h_p, rmr_c_p,
      kparams["lstm_wih"], kparams["lstm_whh"], kparams["attn_w"],
      kparams["gru_wih"], kparams["gru_whh"], kparams["rmr_wih"],
      kparams["rmr_whh"], kparams["biases"])

    # -------- kernel 2: V-tiled output projection + in-kernel log-softmax -------
    proj_grid_spec = pltpu.PrefetchScalarGridSpec(
        num_scalar_prefetch=0,
        grid=(gb, 2, gv),                              # (batch, phase, V tile)
        in_specs=[
            pl.BlockSpec((bb, 2 * Hp), lambda b, p, v: (b, 0)),      # cat2 (bf16)
            pl.BlockSpec((2 * Hp, block_v), lambda b, p, v: (0, v)),  # out_w tile
            pl.BlockSpec((1, block_v), lambda b, p, v: (0, v)),       # out_b tile
        ],
        out_specs=[
            # pinned to (b, 0) during phase 0 (no stores there), streamed in phase 1
            pl.BlockSpec((bb, block_v), lambda b, p, v: (b, p * v)),
        ],
        scratch_shapes=[
            pltpu.VMEM((bb, 1), f32),                  # running max
            pltpu.VMEM((bb, 1), f32),                  # running sum
        ],
    )

    (logprobs_p,) = pl.pallas_call(
        functools.partial(rmr_proj_kernel, V, block_v),
        out_shape=(jax.ShapeDtypeStruct((Bp, Vp), f32),),
        grid_spec=proj_grid_spec,
        compiler_params=pltpu.CompilerParams(
            dimension_semantics=("parallel", "arbitrary", "arbitrary"),
            vmem_limit_bytes=vmem_limit,
        ),
    )(cat2_p, kparams["out_w"], kparams["out_b"])

    rmr_output = logprobs_p[:B, :V]                    # already log-softmaxed

    # re-add the leading n_layers/seq dim where the PyTorch forward keeps it
    return (output_cat,                    # (B, 2H)
            lstm_h_p[:B, :H],              # (B, H)
            cell_out_p[:B, :H][None],      # (1, B, H)
            rmr_output,                    # (B, V) log-softmax
            rmr_h_out_p[:B, :H][None],     # (1, B, H)
            rmr_c_out_p[:B, :H][None])     # (1, B, H)


if __name__ == "__main__":
    hidden_size, output_size, memory_size = 32, 16, 8
    batch_size, n_layers = 2, 1

    key = jax.random.PRNGKey(0)
    kp, k1, k2, k3, k4, k5, k6, k7 = jax.random.split(key, 8)
    params = init_params(kp, hidden_size, output_size, memory_size)
    kparams = prepare_weights(params, hidden_size, output_size, memory_size)

    input_tokens = jax.random.randint(k1, (1, batch_size), 0, output_size,
                                      dtype=jnp.int32)
    rmn_hidden = jax.random.normal(k2, (1, batch_size, hidden_size), jnp.float32)
    cell = jax.random.normal(k3, (1, batch_size, hidden_size), jnp.float32)
    context = jax.random.normal(k4, (1, batch_size, hidden_size), jnp.float32)
    memory_tensor = jax.random.randint(k5, (memory_size, batch_size), 0, output_size,
                                       dtype=jnp.int32)
    rmr_hidden = jax.random.normal(k6, (1, batch_size, hidden_size), jnp.float32)
    rmr_cell = jax.random.normal(k7, (1, batch_size, hidden_size), jnp.float32)

    outs = rmr_forward(kparams, input_tokens, rmn_hidden, cell, context, batch_size,
                       memory_tensor, memory_size, rmr_hidden, rmr_cell,
                       hidden_size, n_layers)
    jax.block_until_ready(outs)
    print("KERNEL_OK")
</pallas_src>

<mosaic_0001>
module attributes {stable_mosaic.version = 11 : i64} {
  func.func @rmr_state_kernel(%arg0: i32, %arg1: memref<8x256xf32, #tpu.memory_space<vmem>>, %arg2: memref<8x128xf32, #tpu.memory_space<vmem>>, %arg3: memref<8x128xf32, #tpu.memory_space<vmem>>, %arg4: memref<8x8x128xf32, #tpu.memory_space<vmem>>, %arg5: memref<8x8x128xf32, #tpu.memory_space<vmem>>, %arg6: memref<8x128xf32, #tpu.memory_space<vmem>>, %arg7: memref<8x128xf32, #tpu.memory_space<vmem>>, %arg8: memref<256x512xf32, #tpu.memory_space<vmem>>, %arg9: memref<128x512xf32, #tpu.memory_space<vmem>>, %arg10: memref<8x128xf32, #tpu.memory_space<vmem>>, %arg11: memref<128x384xf32, #tpu.memory_space<vmem>>, %arg12: memref<128x384xf32, #tpu.memory_space<vmem>>, %arg13: memref<128x512xf32, #tpu.memory_space<vmem>>, %arg14: memref<128x512xf32, #tpu.memory_space<vmem>>, %arg15: memref<1x1920xf32, #tpu.memory_space<vmem>>, %arg16: memref<8x128xf32, #tpu.memory_space<vmem>>, %arg17: memref<8x128xf32, #tpu.memory_space<vmem>>, %arg18: memref<8x128xf32, #tpu.memory_space<vmem>>, %arg19: memref<8x128xf32, #tpu.memory_space<vmem>>, %arg20: memref<8x256xbf16, #tpu.memory_space<vmem>>) attributes {dimension_semantics = [#tpu.dimension_semantics<parallel>], iteration_bounds = array<i64: 1>, scalar_prefetch = 0 : i64, scratch_operands = 0 : i64, tpu.core_type = #tpu.core_type<tc>, window_params = [{transform_indices = @transform_0, window_bounds = array<i64: 8, 256>}, {transform_indices = @transform_1, window_bounds = array<i64: 8, 128>}, {transform_indices = @transform_2, window_bounds = array<i64: 8, 128>}, {transform_indices = @transform_3, window_bounds = array<i64: 8, 8, 128>}, {transform_indices = @transform_4, window_bounds = array<i64: 8, 8, 128>}, {transform_indices = @transform_5, window_bounds = array<i64: 8, 128>}, {transform_indices = @transform_6, window_bounds = array<i64: 8, 128>}, {pipeline_mode = #tpu.pipeline_mode<synchronous>, transform_indices = @transform_7, window_bounds = array<i64: 256, 512>}, {pipeline_mode = #tpu.pipeline_mode<synchronous>, transform_indices = @transform_8, window_bounds = array<i64: 128, 512>}, {pipeline_mode = #tpu.pipeline_mode<synchronous>, transform_indices = @transform_9, window_bounds = array<i64: 8, 128>}, {pipeline_mode = #tpu.pipeline_mode<synchronous>, transform_indices = @transform_10, window_bounds = array<i64: 128, 384>}, {pipeline_mode = #tpu.pipeline_mode<synchronous>, transform_indices = @transform_11, window_bounds = array<i64: 128, 384>}, {pipeline_mode = #tpu.pipeline_mode<synchronous>, transform_indices = @transform_12, window_bounds = array<i64: 128, 512>}, {pipeline_mode = #tpu.pipeline_mode<synchronous>, transform_indices = @transform_13, window_bounds = array<i64: 128, 512>}, {pipeline_mode = #tpu.pipeline_mode<synchronous>, transform_indices = @transform_14, window_bounds = array<i64: 1, 1920>}, {transform_indices = @transform_15, window_bounds = array<i64: 8, 128>}, {transform_indices = @transform_16, window_bounds = array<i64: 8, 128>}, {transform_indices = @transform_17, window_bounds = array<i64: 8, 128>}, {transform_indices = @transform_18, window_bounds = array<i64: 8, 128>}, {transform_indices = @transform_19, window_bounds = array<i64: 8, 256>}]} {
    %c0 = arith.constant 0 : index
    %c0_0 = arith.constant 0 : index
    %0 = vector.load %arg1[%c0, %c0_0] : memref<8x256xf32, #tpu.memory_space<vmem>>, vector<8x256xf32>
    %1 = vector.extract_strided_slice %0 {offsets = [0, 128], sizes = [8, 128], strides = [1, 1]} : vector<8x256xf32> to vector<8x128xf32>
    %c0_1 = arith.constant 0 : index
    %c0_2 = arith.constant 0 : index
    %2 = vector.load %arg15[%c0_1, %c0_2] : memref<1x1920xf32, #tpu.memory_space<vmem>>, vector<1x512xf32>
    %c0_3 = arith.constant 0 : index
    %c512 = arith.constant 512 : index
    %3 = vector.load %arg15[%c0_3, %c512] : memref<1x1920xf32, #tpu.memory_space<vmem>>, vector<1x384xf32>
    %c0_4 = arith.constant 0 : index
    %c896 = arith.constant 896 : index
    %4 = vector.load %arg15[%c0_4, %c896] : memref<1x1920xf32, #tpu.memory_space<vmem>>, vector<1x384xf32>
    %c0_5 = arith.constant 0 : index
    %c1280 = arith.constant 1280 : index
    %5 = vector.load %arg15[%c0_5, %c1280] : memref<1x1920xf32, #tpu.memory_space<vmem>>, vector<1x512xf32>
    %c0_6 = arith.constant 0 : index
    %c1792 = arith.constant 1792 : index
    %6 = vector.load %arg15[%c0_6, %c1792] : memref<1x1920xf32, #tpu.memory_space<vmem>>, vector<1x128xf32>
    %c0_7 = arith.constant 0 : index
    %c0_8 = arith.constant 0 : index
    %7 = vector.load %arg8[%c0_7, %c0_8] : memref<256x512xf32, #tpu.memory_space<vmem>>, vector<256x512xf32>
    %cst = arith.constant dense<0.000000e+00> : vector<8x512xf32>
    %8 = tpu.matmul %0, %7, %cst {dimension_numbers = #tpu.dot_dimension_numbers<[1], [0], [0], [1], [0, 0, 1, 1], [], []>} : vector<8x256xf32>, vector<256x512xf32>, vector<8x512xf32> -> vector<8x512xf32>
    %c0_9 = arith.constant 0 : index
    %c0_10 = arith.constant 0 : index
    %9 = vector.load %arg2[%c0_9, %c0_10] : memref<8x128xf32, #tpu.memory_space<vmem>>, vector<8x128xf32>
    %c0_11 = arith.constant 0 : index
    %c0_12 = arith.constant 0 : index
    %10 = vector.load %arg9[%c0_11, %c0_12] : memref<128x512xf32, #tpu.memory_space<vmem>>, vector<128x512xf32>
    %cst_13 = arith.constant dense<0.000000e+00> : vector<8x512xf32>
    %11 = tpu.matmul %9, %10, %cst_13 {dimension_numbers = #tpu.dot_dimension_numbers<[1], [0], [0], [1], [0, 0, 1, 1], [], []>} : vector<8x128xf32>, vector<128x512xf32>, vector<8x512xf32> -> vector<8x512xf32>
    %12 = arith.addf %8, %11 : vector<8x512xf32>
    %13 = vector.broadcast %2 : vector<1x512xf32> to vector<8x512xf32>
    %14 = arith.addf %12, %13 : vector<8x512xf32>
    %15 = vector.extract_strided_slice %14 {offsets = [0, 0], sizes = [8, 128], strides = [1, 1]} : vector<8x512xf32> to vector<8x128xf32>
    %16 = arith.negf %15 : vector<8x128xf32>
    %17 = math.exp %16 : vector<8x128xf32>
    %cst_14 = arith.constant 1.000000e+00 : f32
    %18 = vector.broadcast %cst_14 : f32 to vector<8x128xf32>
    %19 = arith.addf %18, %17 : vector<8x128xf32>
    %20 = arith.divf %18, %19 : vector<8x128xf32>
    %21 = vector.extract_strided_slice %14 {offsets = [0, 128], sizes = [8, 128], strides = [1, 1]} : vector<8x512xf32> to vector<8x128xf32>
    %22 = arith.negf %21 : vector<8x128xf32>
    %23 = math.exp %22 : vector<8x128xf32>
    %cst_15 = arith.constant 1.000000e+00 : f32
    %24 = vector.broadcast %cst_15 : f32 to vector<8x128xf32>
    %25 = arith.addf %24, %23 : vector<8x128xf32>
    %26 = arith.divf %24, %25 : vector<8x128xf32>
    %27 = vector.extract_strided_slice %14 {offsets = [0, 256], sizes = [8, 128], strides = [1, 1]} : vector<8x512xf32> to vector<8x128xf32>
    %28 = math.tanh %27 : vector<8x128xf32>
    %29 = vector.extract_strided_slice %14 {offsets = [0, 384], sizes = [8, 128], strides = [1, 1]} : vector<8x512xf32> to vector<8x128xf32>
    %30 = arith.negf %29 : vector<8x128xf32>
    %31 = math.exp %30 : vector<8x128xf32>
    %cst_16 = arith.constant 1.000000e+00 : f32
    %32 = vector.broadcast %cst_16 : f32 to vector<8x128xf32>
    %33 = arith.addf %32, %31 : vector<8x128xf32>
    %34 = arith.divf %32, %33 : vector<8x128xf32>
    %c0_17 = arith.constant 0 : index
    %c0_18 = arith.constant 0 : index
    %35 = vector.load %arg3[%c0_17, %c0_18] : memref<8x128xf32, #tpu.memory_space<vmem>>, vector<8x128xf32>
    %36 = arith.mulf %26, %35 : vector<8x128xf32>
    %37 = arith.mulf %20, %28 : vector<8x128xf32>
    %38 = arith.addf %36, %37 : vector<8x128xf32>
    %39 = math.tanh %38 : vector<8x128xf32>
    %40 = arith.mulf %34, %39 : vector<8x128xf32>
    %c0_19 = arith.constant 0 : index
    %c0_20 = arith.constant 0 : index
    %41 = vector.load %arg16[%c0_19, %c0_20] : memref<8x128xf32, #tpu.memory_space<vmem>>, vector<8x128xf32>
    tpu.vector_store %arg16[%c0_19, %c0_20], %40 {strides = array<i32>} : memref<8x128xf32, #tpu.memory_space<vmem>>, vector<8x128xf32>,
    %c0_21 = arith.constant 0 : index
    %c0_22 = arith.constant 0 : index
    %42 = vector.load %arg17[%c0_21, %c0_22] : memref<8x128xf32, #tpu.memory_space<vmem>>, vector<8x128xf32>
    tpu.vector_store %arg17[%c0_21, %c0_22], %38 {strides = array<i32>} : memref<8x128xf32, #tpu.memory_space<vmem>>, vector<8x128xf32>,
    %43 = vector.shape_cast %40 : vector<8x128xf32> to vector<8x1x128xf32>
    %c0_23 = arith.constant 0 : index
    %c0_24 = arith.constant 0 : index
    %c0_25 = arith.constant 0 : index
    %44 = vector.load %arg4[%c0_23, %c0_24, %c0_25] : memref<8x8x128xf32, #tpu.memory_space<vmem>>, vector<8x8x128xf32>
    "tpu.trace_start"() <{level = 10 : i32, message = "bqh,bmh->bqm"}> : () -> ()
    %cst_26 = arith.constant dense<0.000000e+00> : vector<8x1x8xf32>
    %45 = tpu.matmul %43, %44, %cst_26 {dimension_numbers = #tpu.dot_dimension_numbers<[2], [2], [1], [1], [0, 0, 0, 1, 1, 1], [0], [0]>} : vector<8x1x128xf32>, vector<8x8x128xf32>, vector<8x1x8xf32> -> vector<8x1x8xf32>
    "tpu.trace_stop"() : () -> ()
    %46 = vector.shape_cast %45 : vector<8x1x8xf32> to vector<8x8xf32>
    %c0_27 = arith.constant 0 : index
    %c0_28 = arith.constant 0 : index
    %47 = vector.load %arg10[%c0_27, %c0_28] : memref<8x128xf32, #tpu.memory_space<vmem>>, vector<8x128xf32>
    %cst_29 = arith.constant dense<0.000000e+00> : vector<8x128xf32>
    %48 = tpu.matmul %46, %47, %cst_29 {dimension_numbers = #tpu.dot_dimension_numbers<[1], [0], [0], [1], [0, 0, 1, 1], [], []>} : vector<8x8xf32>, vector<8x128xf32>, vector<8x128xf32> -> vector<8x128xf32>
    %49 = vector.broadcast %6 : vector<1x128xf32> to vector<8x128xf32>
    %50 = arith.addf %48, %49 : vector<8x128xf32>
    %51 = tpu.iota {dimensions = array<i32: 1>} : vector<8x128xi32>
    %c8_i32 = arith.constant 8 : i32
    %52 = vector.broadcast %c8_i32 : i32 to vector<8x128xi32>
    %53 = arith.cmpi slt, %51, %52 : vector<8x128xi32>
    %cst_30 = arith.constant -1.000000e+30 : f32
    %54 = vector.broadcast %cst_30 : f32 to vector<8x128xf32>
    %55 = arith.select %53, %50, %54 : vector<8x128xi1>, vector<8x128xf32>
    %cst_31 = arith.constant dense<0xFF800000> : vector<8xf32>
    %56 = vector.multi_reduction <maximumf>, %55, %cst_31 [1] : vector<8x128xf32> to vector<8xf32>
    %57 = vector.shape_cast %56 : vector<8xf32> to vector<8x1xf32>
    %58 = vector.broadcast %57 : vector<8x1xf32> to vector<8x128xf32>
    %59 = arith.subf %55, %58 : vector<8x128xf32>
    %60 = vector.broadcast %57 : vector<8x1xf32> to vector<8x128xf32>
    %61 = arith.subf %55, %60 : vector<8x128xf32>
    %62 = math.exp %61 : vector<8x128xf32>
    %cst_32 = arith.constant dense<0.000000e+00> : vector<8xf32>
    %63 = vector.multi_reduction <add>, %62, %cst_32 [1] : vector<8x128xf32> to vector<8xf32>
    %64 = vector.shape_cast %63 : vector<8xf32> to vector<8x1xf32>
    %65 = math.log %64 : vector<8x1xf32>
    %66 = vector.broadcast %65 : vector<8x1xf32> to vector<8x128xf32>
    %67 = arith.subf %59, %66 : vector<8x128xf32>
    %c8_i32_33 = arith.constant 8 : i32
    %68 = vector.broadcast %c8_i32_33 : i32 to vector<8x128xi32>
    %69 = arith.cmpi slt, %51, %68 : vector<8x128xi32>
    %cst_34 = arith.constant 0.000000e+00 : f32
    %70 = vector.broadcast %cst_34 : f32 to vector<8x128xf32>
    %71 = arith.select %69, %67, %70 : vector<8x128xi1>, vector<8x128xf32>
    %72 = vector.extract_strided_slice %71 {offsets = [0, 0], sizes = [8, 8], strides = [1, 1]} : vector<8x128xf32> to vector<8x8xf32>
    %73 = vector.shape_cast %72 : vector<8x8xf32> to vector<8x1x8xf32>
    %c0_35 = arith.constant 0 : index
    %c0_36 = arith.constant 0 : index
    %c0_37 = arith.constant 0 : index
    %74 = vector.load %arg5[%c0_35, %c0_36, %c0_37] : memref<8x8x128xf32, #tpu.memory_space<vmem>>, vector<8x8x128xf32>
    "tpu.trace_start"() <{level = 10 : i32, message = "bqm,bmh->bqh"}> : () -> ()
    %cst_38 = arith.constant dense<0.000000e+00> : vector<8x1x128xf32>
    %75 = tpu.matmul %73, %74, %cst_38 {dimension_numbers = #tpu.dot_dimension_numbers<[2], [1], [1], [2], [0, 0, 0, 1, 1, 2], [0], [0]>} : vector<8x1x8xf32>, vector<8x8x128xf32>, vector<8x1x128xf32> -> vector<8x1x128xf32>
    "tpu.trace_stop"() : () -> ()
    %76 = vector.shape_cast %75 : vector<8x1x128xf32> to vector<8x128xf32>
    %c0_39 = arith.constant 0 : index
    %c0_40 = arith.constant 0 : index
    %77 = vector.load %arg11[%c0_39, %c0_40] : memref<128x384xf32, #tpu.memory_space<vmem>>, vector<128x384xf32>
    %cst_41 = arith.constant dense<0.000000e+00> : vector<8x384xf32>
    %78 = tpu.matmul %76, %77, %cst_41 {dimension_numbers = #tpu.dot_dimension_numbers<[1], [0], [0], [1], [0, 0, 1, 1], [], []>} : vector<8x128xf32>, vector<128x384xf32>, vector<8x384xf32> -> vector<8x384xf32>
    %79 = vector.broadcast %3 : vector<1x384xf32> to vector<8x384xf32>
    %80 = arith.addf %78, %79 : vector<8x384xf32>
    %c0_42 = arith.constant 0 : index
    %c0_43 = arith.constant 0 : index
    %81 = vector.load %arg12[%c0_42, %c0_43] : memref<128x384xf32, #tpu.memory_space<vmem>>, vector<128x384xf32>
    %cst_44 = arith.constant dense<0.000000e+00> : vector<8x384xf32>
    %82 = tpu.matmul %40, %81, %cst_44 {dimension_numbers = #tpu.dot_dimension_numbers<[1], [0], [0], [1], [0, 0, 1, 1], [], []>} : vector<8x128xf32>, vector<128x384xf32>, vector<8x384xf32> -> vector<8x384xf32>
    %83 = vector.broadcast %4 : vector<1x384xf32> to vector<8x384xf32>
    %84 = arith.addf %82, %83 : vector<8x384xf32>
    %85 = vector.extract_strided_slice %80 {offsets = [0, 0], sizes = [8, 128], strides = [1, 1]} : vector<8x384xf32> to vector<8x128xf32>
    %86 = vector.extract_strided_slice %84 {offsets = [0, 0], sizes = [8, 128], strides = [1, 1]} : vector<8x384xf32> to vector<8x128xf32>
    %87 = arith.addf %85, %86 : vector<8x128xf32>
    %88 = arith.negf %87 : vector<8x128xf32>
    %89 = math.exp %88 : vector<8x128xf32>
    %cst_45 = arith.constant 1.000000e+00 : f32
    %90 = vector.broadcast %cst_45 : f32 to vector<8x128xf32>
    %91 = arith.addf %90, %89 : vector<8x128xf32>
    %92 = arith.divf %90, %91 : vector<8x128xf32>
    %93 = vector.extract_strided_slice %80 {offsets = [0, 128], sizes = [8, 128], strides = [1, 1]} : vector<8x384xf32> to vector<8x128xf32>
    %94 = vector.extract_strided_slice %84 {offsets = [0, 128], sizes = [8, 128], strides = [1, 1]} : vector<8x384xf32> to vector<8x128xf32>
    %95 = arith.addf %93, %94 : vector<8x128xf32>
    %96 = arith.negf %95 : vector<8x128xf32>
    %97 = math.exp %96 : vector<8x128xf32>
    %cst_46 = arith.constant 1.000000e+00 : f32
    %98 = vector.broadcast %cst_46 : f32 to vector<8x128xf32>
    %99 = arith.addf %98, %97 : vector<8x128xf32>
    %100 = arith.divf %98, %99 : vector<8x128xf32>
    %101 = vector.extract_strided_slice %80 {offsets = [0, 256], sizes = [8, 128], strides = [1, 1]} : vector<8x384xf32> to vector<8x128xf32>
    %102 = vector.extract_strided_slice %84 {offsets = [0, 256], sizes = [8, 128], strides = [1, 1]} : vector<8x384xf32> to vector<8x128xf32>
    %103 = arith.mulf %92, %102 : vector<8x128xf32>
    %104 = arith.addf %101, %103 : vector<8x128xf32>
    %105 = math.tanh %104 : vector<8x128xf32>
    %cst_47 = arith.constant 1.000000e+00 : f32
    %106 = vector.broadcast %cst_47 : f32 to vector<8x128xf32>
    %107 = arith.subf %106, %100 : vector<8x128xf32>
    %108 = arith.mulf %107, %105 : vector<8x128xf32>
    %109 = arith.mulf %100, %40 : vector<8x128xf32>
    %110 = arith.addf %108, %109 : vector<8x128xf32>
    %c0_48 = arith.constant 0 : index
    %c0_49 = arith.constant 0 : index
    %111 = vector.load %arg13[%c0_48, %c0_49] : memref<128x512xf32, #tpu.memory_space<vmem>>, vector<128x512xf32>
    %cst_50 = arith.constant dense<0.000000e+00> : vector<8x512xf32>
    %112 = tpu.matmul %110, %111, %cst_50 {dimension_numbers = #tpu.dot_dimension_numbers<[1], [0], [0], [1], [0, 0, 1, 1], [], []>} : vector<8x128xf32>, vector<128x512xf32>, vector<8x512xf32> -> vector<8x512xf32>
    %c0_51 = arith.constant 0 : index
    %c0_52 = arith.constant 0 : index
    %113 = vector.load %arg6[%c0_51, %c0_52] : memref<8x128xf32, #tpu.memory_space<vmem>>, vector<8x128xf32>
    %c0_53 = arith.constant 0 : index
    %c0_54 = arith.constant 0 : index
    %114 = vector.load %arg14[%c0_53, %c0_54] : memref<128x512xf32, #tpu.memory_space<vmem>>, vector<128x512xf32>
    %cst_55 = arith.constant dense<0.000000e+00> : vector<8x512xf32>
    %115 = tpu.matmul %113, %114, %cst_55 {dimension_numbers = #tpu.dot_dimension_numbers<[1], [0], [0], [1], [0, 0, 1, 1], [], []>} : vector<8x128xf32>, vector<128x512xf32>, vector<8x512xf32> -> vector<8x512xf32>
    %116 = arith.addf %112, %115 : vector<8x512xf32>
    %117 = vector.broadcast %5 : vector<1x512xf32> to vector<8x512xf32>
    %118 = arith.addf %116, %117 : vector<8x512xf32>
    %119 = vector.extract_strided_slice %118 {offsets = [0, 0], sizes = [8, 128], strides = [1, 1]} : vector<8x512xf32> to vector<8x128xf32>
    %120 = arith.negf %119 : vector<8x128xf32>
    %121 = math.exp %120 : vector<8x128xf32>
    %cst_56 = arith.constant 1.000000e+00 : f32
    %122 = vector.broadcast %cst_56 : f32 to vector<8x128xf32>
    %123 = arith.addf %122, %121 : vector<8x128xf32>
    %124 = arith.divf %122, %123 : vector<8x128xf32>
    %125 = vector.extract_strided_slice %118 {offsets = [0, 128], sizes = [8, 128], strides = [1, 1]} : vector<8x512xf32> to vector<8x128xf32>
    %126 = arith.negf %125 : vector<8x128xf32>
    %127 = math.exp %126 : vector<8x128xf32>
    %cst_57 = arith.constant 1.000000e+00 : f32
    %128 = vector.broadcast %cst_57 : f32 to vector<8x128xf32>
    %129 = arith.addf %128, %127 : vector<8x128xf32>
    %130 = arith.divf %128, %129 : vector<8x128xf32>
    %131 = vector.extract_strided_slice %118 {offsets = [0, 256], sizes = [8, 128], strides = [1, 1]} : vector<8x512xf32> to vector<8x128xf32>
    %132 = math.tanh %131 : vector<8x128xf32>
    %133 = vector.extract_strided_slice %118 {offsets = [0, 384], sizes = [8, 128], strides = [1, 1]} : vector<8x512xf32> to vector<8x128xf32>
    %134 = arith.negf %133 : vector<8x128xf32>
    %135 = math.exp %134 : vector<8x128xf32>
    %cst_58 = arith.constant 1.000000e+00 : f32
    %136 = vector.broadcast %cst_58 : f32 to vector<8x128xf32>
    %137 = arith.addf %136, %135 : vector<8x128xf32>
    %138 = arith.divf %136, %137 : vector<8x128xf32>
    %c0_59 = arith.constant 0 : index
    %c0_60 = arith.constant 0 : index
    %139 = vector.load %arg7[%c0_59, %c0_60] : memref<8x128xf32, #tpu.memory_space<vmem>>, vector<8x128xf32>
    %140 = arith.mulf %130, %139 : vector<8x128xf32>
    %141 = arith.mulf %124, %132 : vector<8x128xf32>
    %142 = arith.addf %140, %141 : vector<8x128xf32>
    %143 = math.tanh %142 : vector<8x128xf32>
    %144 = arith.mulf %138, %143 : vector<8x128xf32>
    %c0_61 = arith.constant 0 : index
    %c0_62 = arith.constant 0 : index
    %145 = vector.load %arg18[%c0_61, %c0_62] : memref<8x128xf32, #tpu.memory_space<vmem>>, vector<8x128xf32>
    tpu.vector_store %arg18[%c0_61, %c0_62], %144 {strides = array<i32>} : memref<8x128xf32, #tpu.memory_space<vmem>>, vector<8x128xf32>,
    %c0_63 = arith.constant 0 : index
    %c0_64 = arith.constant 0 : index
    %146 = vector.load %arg19[%c0_63, %c0_64] : memref<8x128xf32, #tpu.memory_space<vmem>>, vector<8x128xf32>
    tpu.vector_store %arg19[%c0_63, %c0_64], %142 {strides = array<i32>} : memref<8x128xf32, #tpu.memory_space<vmem>>, vector<8x128xf32>,
    %147 = arith.truncf %144 : vector<8x128xf32> to vector<8x128xbf16>
    %c0_65 = arith.constant 0 : index
    %c0_66 = arith.constant 0 : index
    %148 = vector.load %arg20[%c0_65, %c0_66] : memref<8x256xbf16, #tpu.memory_space<vmem>>, vector<8x128xbf16>
    tpu.vector_store %arg20[%c0_65, %c0_66], %147 {strides = array<i32>} : memref<8x256xbf16, #tpu.memory_space<vmem>>, vector<8x128xbf16>,
    %149 = arith.truncf %1 : vector<8x128xf32> to vector<8x128xbf16>
    %c0_67 = arith.constant 0 : index
    %c128 = arith.constant 128 : index
    %150 = vector.load %arg20[%c0_67, %c128] : memref<8x256xbf16, #tpu.memory_space<vmem>>, vector<8x128xbf16>
    tpu.vector_store %arg20[%c0_67, %c128], %149 {strides = array<i32>} : memref<8x256xbf16, #tpu.memory_space<vmem>>, vector<8x128xbf16>,
    return
  }
  func.func @transform_0(%arg0: i32) -> (i32, i32) {
    %c0_i32 = arith.constant 0 : i32
    %c0_i32_0 = arith.constant 0 : i32
    return %arg0, %c0_i32 : i32, i32
  }
  func.func @transform_1(%arg0: i32) -> (i32, i32) {
    %c0_i32 = arith.constant 0 : i32
    %c0_i32_0 = arith.constant 0 : i32
    return %arg0, %c0_i32 : i32, i32
  }
  func.func @transform_2(%arg0: i32) -> (i32, i32) {
    %c0_i32 = arith.constant 0 : i32
    %c0_i32_0 = arith.constant 0 : i32
    return %arg0, %c0_i32 : i32, i32
  }
  func.func @transform_3(%arg0: i32) -> (i32, i32, i32) {
    %c0_i32 = arith.constant 0 : i32
    %c0_i32_0 = arith.constant 0 : i32
    %c0_i32_1 = arith.constant 0 : i32
    return %arg0, %c0_i32, %c0_i32_0 : i32, i32, i32
  }
  func.func @transform_4(%arg0: i32) -> (i32, i32, i32) {
    %c0_i32 = arith.constant 0 : i32
    %c0_i32_0 = arith.constant 0 : i32
    %c0_i32_1 = arith.constant 0 : i32
    return %arg0, %c0_i32, %c0_i32_0 : i32, i32, i32
  }
  func.func @transform_5(%arg0: i32) -> (i32, i32) {
    %c0_i32 = arith.constant 0 : i32
    %c0_i32_0 = arith.constant 0 : i32
    return %arg0, %c0_i32 : i32, i32
  }
  func.func @transform_6(%arg0: i32) -> (i32, i32) {
    %c0_i32 = arith.constant 0 : i32
    %c0_i32_0 = arith.constant 0 : i32
    return %arg0, %c0_i32 : i32, i32
  }
  func.func @transform_7(%arg0: i32) -> (i32, i32) {
    %c0_i32 = arith.constant 0 : i32
    %c0_i32_0 = arith.constant 0 : i32
    %c0_i32_1 = arith.constant 0 : i32
    return %c0_i32, %c0_i32_0 : i32, i32
  }
  func.func @transform_8(%arg0: i32) -> (i32, i32) {
    %c0_i32 = arith.constant 0 : i32
    %c0_i32_0 = arith.constant 0 : i32
    %c0_i32_1 = arith.constant 0 : i32
    return %c0_i32, %c0_i32_0 : i32, i32
  }
  func.func @transform_9(%arg0: i32) -> (i32, i32) {
    %c0_i32 = arith.constant 0 : i32
    %c0_i32_0 = arith.constant 0 : i32
    %c0_i32_1 = arith.constant 0 : i32
    return %c0_i32, %c0_i32_0 : i32, i32
  }
  func.func @transform_10(%arg0: i32) -> (i32, i32) {
    %c0_i32 = arith.constant 0 : i32
    %c0_i32_0 = arith.constant 0 : i32
    %c0_i32_1 = arith.constant 0 : i32
    return %c0_i32, %c0_i32_0 : i32, i32
  }
  func.func @transform_11(%arg0: i32) -> (i32, i32) {
    %c0_i32 = arith.constant 0 : i32
    %c0_i32_0 = arith.constant 0 : i32
    %c0_i32_1 = arith.constant 0 : i32
    return %c0_i32, %c0_i32_0 : i32, i32
  }
  func.func @transform_12(%arg0: i32) -> (i32, i32) {
    %c0_i32 = arith.constant 0 : i32
    %c0_i32_0 = arith.constant 0 : i32
    %c0_i32_1 = arith.constant 0 : i32
    return %c0_i32, %c0_i32_0 : i32, i32
  }
  func.func @transform_13(%arg0: i32) -> (i32, i32) {
    %c0_i32 = arith.constant 0 : i32
    %c0_i32_0 = arith.constant 0 : i32
    %c0_i32_1 = arith.constant 0 : i32
    return %c0_i32, %c0_i32_0 : i32, i32
  }
  func.func @transform_14(%arg0: i32) -> (i32, i32) {
    %c0_i32 = arith.constant 0 : i32
    %c0_i32_0 = arith.constant 0 : i32
    %c0_i32_1 = arith.constant 0 : i32
    return %c0_i32, %c0_i32_0 : i32, i32
  }
  func.func @transform_15(%arg0: i32) -> (i32, i32) {
    %c0_i32 = arith.constant 0 : i32
    %c0_i32_0 = arith.constant 0 : i32
    return %arg0, %c0_i32 : i32, i32
  }
  func.func @transform_16(%arg0: i32) -> (i32, i32) {
    %c0_i32 = arith.constant 0 : i32
    %c0_i32_0 = arith.constant 0 : i32
    return %arg0, %c0_i32 : i32, i32
  }
  func.func @transform_17(%arg0: i32) -> (i32, i32) {
    %c0_i32 = arith.constant 0 : i32
    %c0_i32_0 = arith.constant 0 : i32
    return %arg0, %c0_i32 : i32, i32
  }
  func.func @transform_18(%arg0: i32) -> (i32, i32) {
    %c0_i32 = arith.constant 0 : i32
    %c0_i32_0 = arith.constant 0 : i32
    return %arg0, %c0_i32 : i32, i32
  }
  func.func @transform_19(%arg0: i32) -> (i32, i32) {
    %c0_i32 = arith.constant 0 : i32
    %c0_i32_0 = arith.constant 0 : i32
    return %arg0, %c0_i32 : i32, i32
  }
}

</mosaic_0001>

<llo_original>
// kernel: tpu_custom_call.1
$region0: #{tpu_custom_call.1}
  #allocation0 [shape = 'u32[]', space=smem, size = 0x4, offset = 0x4, fixed_abs, tag = 'smem constant byte address 0x4 - core index']
  #allocation1 [shape = 'u32[144,128]{1,0:T(1,128)}', space=vmem, size = 0x12000, scoped, tag = 'internal scratch']
  %s0 = inlined_call_operand.hbm [shape: f32[8,256], index: 0, kind: input, shape index: {}]
  %s1 = inlined_call_operand.hbm [shape: f32[8,128], index: 1, kind: input, shape index: {}]
  %s2 = inlined_call_operand.hbm [shape: f32[8,128], index: 2, kind: input, shape index: {}]
  %s3 = inlined_call_operand.hbm [shape: f32[8,8,128], index: 3, kind: input, shape index: {}]
  %s4 = inlined_call_operand.hbm [shape: f32[8,8,128], index: 4, kind: input, shape index: {}]
  %s5 = inlined_call_operand.vmem [shape: f32[8,128], index: 5, kind: input, shape index: {}]
  %s6 = inlined_call_operand.hbm [shape: f32[8,128], index: 6, kind: input, shape index: {}]
  %s7 = inlined_call_operand.hbm [shape: f32[256,512], index: 7, kind: input, shape index: {}]
  %s8 = inlined_call_operand.hbm [shape: f32[128,512], index: 8, kind: input, shape index: {}]
  %s9 = inlined_call_operand.hbm [shape: f32[8,128], index: 9, kind: input, shape index: {}]
  %s10 = inlined_call_operand.hbm [shape: f32[128,384], index: 10, kind: input, shape index: {}]
  %s11 = inlined_call_operand.hbm [shape: f32[128,384], index: 11, kind: input, shape index: {}]
  %s12 = inlined_call_operand.hbm [shape: f32[128,512], index: 12, kind: input, shape index: {}]
  %s13 = inlined_call_operand.hbm [shape: f32[128,512], index: 13, kind: input, shape index: {}]
  %s14 = inlined_call_operand.vmem [shape: f32[1,1920], index: 14, kind: input, shape index: {}]
  %s15 = inlined_call_operand.hbm [shape: f32[8,128], index: 15, kind: output, shape index: {0}]
  %s16 = inlined_call_operand.hbm [shape: f32[8,128], index: 16, kind: output, shape index: {1}]
  %s17 = inlined_call_operand.hbm [shape: f32[8,128], index: 17, kind: output, shape index: {2}]
  %s18 = inlined_call_operand.hbm [shape: f32[8,128], index: 18, kind: output, shape index: {3}]
  %s19 = inlined_call_operand.hbm [shape: bf16[8,256], index: 19, kind: output, shape index: {4}]
  %20 = xla_tuple %s15, %s16, %s17, %s18, %s19
  %s21 = sld [smem:[#allocation0]]
  $region154: #{tpu_custom_call.1} parent=0
    _
  %s23 = ssub.s32 1, %s21
  %s24 = scalar_select 0, %s23, %s21
  $region1: #{tpu_custom_call.1} parent=0
    #allocation2 [shape = 'u8[8192]{0}', space=vmem, size = 0x2000, scoped, tag = 'input window, operand 0, single buffered']
    #allocation3 [shape = 's32[1]{0}', space=sflag, size = 0x4, scoped, tag = 'scoped memory for tpu_custom_call.1']
    #allocation4 [shape = 's32[1]{0}', space=sflag, size = 0x4, scoped, tag = 'scoped memory for tpu_custom_call.1']
    #allocation5 [shape = 'u8[4096]{0}', space=vmem, size = 0x1000, scoped, tag = 'input window, operand 1, single buffered']
    #allocation6 [shape = 's32[1]{0}', space=sflag, size = 0x4, scoped, tag = 'scoped memory for tpu_custom_call.1']
    #allocation7 [shape = 'u8[4096]{0}', space=vmem, size = 0x1000, scoped, tag = 'input window, operand 2, single buffered']
    #allocation8 [shape = 'u8[32768]{0}', space=vmem, size = 0x8000, scoped, tag = 'input window, operand 3, single buffered']
    #allocation9 [shape = 's32[1]{0}', space=sflag, size = 0x4, scoped, tag = 'scoped memory for tpu_custom_call.1']
    #allocation10 [shape = 'u8[32768]{0}', space=vmem, size = 0x8000, scoped, tag = 'input window, operand 4, single buffered']
    #allocation11 [shape = 'u8[4096]{0}', space=vmem, size = 0x1000, scoped, tag = 'input window, operand 6, single buffered']
    #allocation12 [shape = 's32[1]{0}', space=sflag, size = 0x4, scoped, tag = 'scoped memory for tpu_custom_call.1']
    #allocation13 [shape = 'u8[524288]{0}', space=vmem, size = 0x80000, scoped, tag = 'input window, operand 7, single buffered']
    #allocation14 [shape = 'u8[262144]{0}', space=vmem, size = 0x40000, scoped, tag = 'input window, operand 8, single buffered']
    #allocation15 [shape = 's32[1]{0}', space=sflag, size = 0x4, scoped, tag = 'scoped memory for tpu_custom_call.1']
    #allocation16 [shape = 'u8[4096]{0}', space=vmem, size = 0x1000, scoped, tag = 'input window, operand 9, single buffered']
    #allocation17 [shape = 'u8[196608]{0}', space=vmem, size = 0x30000, scoped, tag = 'input window, operand 10, single buffered']
    #allocation18 [shape = 's32[1]{0}', space=sflag, size = 0x4, scoped, tag = 'scoped memory for tpu_custom_call.1']
    #allocation19 [shape = 'u8[196608]{0}', space=vmem, size = 0x30000, scoped, tag = 'input window, operand 11, single buffered']
    #allocation20 [shape = 'u8[262144]{0}', space=vmem, size = 0x40000, scoped, tag = 'input window, operand 12, single buffered']
    #allocation21 [shape = 's32[1]{0}', space=sflag, size = 0x4, scoped, tag = 'scoped memory for tpu_custom_call.1']
    #allocation22 [shape = 'u8[262144]{0}', space=vmem, size = 0x40000, scoped, tag = 'input window, operand 13, single buffered']
    #allocation23 [shape = 'u8[4096]{0}', space=vmem, size = 0x1000, scoped, tag = 'output window, operand 0, single buffered']
    #allocation24 [shape = 'u8[4096]{0}', space=vmem, size = 0x1000, scoped, tag = 'output window, operand 1, single buffered']
    #allocation25 [shape = 's32[1]{0}', space=sflag, size = 0x4, scoped, tag = 'scoped memory for tpu_custom_call.1']
    #allocation26 [shape = 'u8[4096]{0}', space=vmem, size = 0x1000, scoped, tag = 'output window, operand 2, single buffered']
    #allocation27 [shape = 'u8[4096]{0}', space=vmem, size = 0x1000, scoped, tag = 'output window, operand 3, single buffered']
    #allocation28 [shape = 's32[1]{0}', space=sflag, size = 0x4, scoped, tag = 'scoped memory for tpu_custom_call.1']
    #allocation29 [shape = 'u8[4096]{0}', space=vmem, size = 0x1000, scoped, tag = 'output window, operand 4, single buffered']
    %25 = vsyncpa [#allocation3], 0
    %26 = vsyncpa [#allocation6], 0
    %27 = vsyncpa [#allocation9], 0
    %28 = vsyncpa [#allocation12], 0
    %29 = vsyncpa [#allocation15], 0
    %30 = vsyncpa [#allocation18], 0
    %31 = vsyncpa [#allocation21], 0
    %32 = vsyncpa [#allocation4], 0
    %33 = vsyncpa [#allocation25], 0
    %34 = vsyncpa [#allocation28], 0
    // Predicated region
    $region2: #{tpu_custom_call.1} parent=1 // pred_check
      _
    $region3: #{tpu_custom_call.1} parent=1 // pred_check_branch
      %36 = sbr.rel (0) target = $region5
    $region4: #{tpu_custom_call.1} parent=1 // pred_region
      %s38 = ssub.s32 256, 256
      %39 = vsyncadd [#allocation3], %s38
      %s41 = sshll.u32 [#allocation2], 4
      %s42 = int_to_ptr.vmem [resolvable:$true] %s41
      %44 = dma.hbm_to_vmem [thread:$0]  %s0, 256, %s42, [#allocation3]
    $region5: #{tpu_custom_call.1} parent=1 // pred_fallthru
      _
    // Predicated region
    $region6: #{tpu_custom_call.1} parent=1 // pred_check
      _
    $region7: #{tpu_custom_call.1} parent=1 // pred_check_branch
      %46 = sbr.rel (0) target = $region9
    $region8: #{tpu_custom_call.1} parent=1 // pred_region
      %s48 = ssub.s32 128, 128
      %49 = vsyncadd [#allocation6], %s48
      %s51 = sshll.u32 [#allocation5], 4
      %s52 = int_to_ptr.vmem [resolvable:$true] %s51
      %54 = dma.hbm_to_vmem [thread:$0]  %s1, 128, %s52, [#allocation6]
    $region9: #{tpu_custom_call.1} parent=1 // pred_fallthru
      _
    // Predicated region
    $region10: #{tpu_custom_call.1} parent=1 // pred_check
      _
    $region11: #{tpu_custom_call.1} parent=1 // pred_check_branch
      %56 = sbr.rel (0) target = $region13
    $region12: #{tpu_custom_call.1} parent=1 // pred_region
      %s58 = ssub.s32 128, 128
      %59 = vsyncadd [#allocation6], %s58
      %s61 = sshll.u32 [#allocation7], 4
      %s62 = int_to_ptr.vmem [resolvable:$true] %s61
      %64 = dma.hbm_to_vmem [thread:$0]  %s2, 128, %s62, [#allocation6]
    $region13: #{tpu_custom_call.1} parent=1 // pred_fallthru
      _
    // Predicated region
    $region14: #{tpu_custom_call.1} parent=1 // pred_check
      _
    $region15: #{tpu_custom_call.1} parent=1 // pred_check_branch
      %66 = sbr.rel (0) target = $region17
    $region16: #{tpu_custom_call.1} parent=1 // pred_region
      %s68 = ssub.s32 1024, 1024
      %69 = vsyncadd [#allocation9], %s68
      %s70 = sshll.u32 [#allocation8], 4
      %s71 = int_to_ptr.vmem [resolvable:$true] %s70
      %76 = dma.hbm_to_vmem [thread:$0]  %s3, 1024, %s71, [#allocation9], 128, 128, 8
    $region17: #{tpu_custom_call.1} parent=1 // pred_fallthru
      _
    // Predicated region
    $region18: #{tpu_custom_call.1} parent=1 // pred_check
      _
    $region19: #{tpu_custom_call.1} parent=1 // pred_check_branch
      %78 = sbr.rel (0) target = $region21
    $region20: #{tpu_custom_call.1} parent=1 // pred_region
      %s80 = ssub.s32 1024, 1024
      %81 = vsyncadd [#allocation9], %s80
      %s82 = sshll.u32 [#allocation10], 4
      %s83 = int_to_ptr.vmem [resolvable:$true] %s82
      %88 = dma.hbm_to_vmem [thread:$0]  %s4, 1024, %s83, [#allocation9], 128, 128, 8
    $region21: #{tpu_custom_call.1} parent=1 // pred_fallthru
      _
    // Predicated region
    $region22: #{tpu_custom_call.1} parent=1 // pred_check
      _
    $region23: #{tpu_custom_call.1} parent=1 // pred_check_branch
      %90 = sbr.rel (0) target = $region25
    $region24: #{tpu_custom_call.1} parent=1 // pred_region
      _
    $region25: #{tpu_custom_call.1} parent=1 // pred_fallthru
      _
    // Predicated region
    $region26: #{tpu_custom_call.1} parent=1 // pred_check
      _
    $region27: #{tpu_custom_call.1} parent=1 // pred_check_branch
      %92 = sbr.rel (0) target = $region29
    $region28: #{tpu_custom_call.1} parent=1 // pred_region
      %s94 = ssub.s32 128, 128
      %95 = vsyncadd [#allocation12], %s94
      %s97 = sshll.u32 [#allocation11], 4
      %s98 = int_to_ptr.vmem [resolvable:$true] %s97
      %100 = dma.hbm_to_vmem [thread:$0]  %s6, 128, %s98, [#allocation12]
    $region29: #{tpu_custom_call.1} parent=1 // pred_fallthru
      _
    // Predicated region
    $region30: #{tpu_custom_call.1} parent=1 // pred_check
      _
    $region31: #{tpu_custom_call.1} parent=1 // pred_check_branch
      %102 = sbr.rel (0) target = $region33
    $region32: #{tpu_custom_call.1} parent=1 // pred_region
      %s104 = ssub.s32 16384, 16384
      %105 = vsyncadd [#allocation12], %s104
      %s106 = sshll.u32 [#allocation13], 4
      %s107 = int_to_ptr.vmem [resolvable:$true] %s106
      %112 = dma.hbm_to_vmem [thread:$0]  %s7, 16384, %s107, [#allocation12], 512, 512, 32
    $region33: #{tpu_custom_call.1} parent=1 // pred_fallthru
      _
    // Predicated region
    $region34: #{tpu_custom_call.1} parent=1 // pred_check
      _
    $region35: #{tpu_custom_call.1} parent=1 // pred_check_branch
      %114 = sbr.rel (0) target = $region37
    $region36: #{tpu_custom_call.1} parent=1 // pred_region
      %s116 = ssub.s32 8192, 8192
      %117 = vsyncadd [#allocation15], %s116
      %s118 = sshll.u32 [#allocation14], 4
      %s119 = int_to_ptr.vmem [resolvable:$true] %s118
      %124 = dma.hbm_to_vmem [thread:$0]  %s8, 8192, %s119, [#allocation15], 512, 512, 32
    $region37: #{tpu_custom_call.1} parent=1 // pred_fallthru
      _
    // Predicated region
    $region38: #{tpu_custom_call.1} parent=1 // pred_check
      _
    $region39: #{tpu_custom_call.1} parent=1 // pred_check_branch
      %126 = sbr.rel (0) target = $region41
    $region40: #{tpu_custom_call.1} parent=1 // pred_region
      %s128 = ssub.s32 128, 128
      %129 = vsyncadd [#allocation15], %s128
      %s131 = sshll.u32 [#allocation16], 4
      %s132 = int_to_ptr.vmem [resolvable:$true] %s131
      %134 = dma.hbm_to_vmem [thread:$0]  %s9, 128, %s132, [#allocation15]
    $region41: #{tpu_custom_call.1} parent=1 // pred_fallthru
      _
    // Predicated region
    $region42: #{tpu_custom_call.1} parent=1 // pred_check
      _
    $region43: #{tpu_custom_call.1} parent=1 // pred_check_branch
      %136 = sbr.rel (0) target = $region45
    $region44: #{tpu_custom_call.1} parent=1 // pred_region
      %s138 = ssub.s32 6144, 6144
      %139 = vsyncadd [#allocation18], %s138
      %s140 = sshll.u32 [#allocation17], 4
      %s141 = int_to_ptr.vmem [resolvable:$true] %s140
      %146 = dma.hbm_to_vmem [thread:$0]  %s10, 6144, %s141, [#allocation18], 384, 384, 24
    $region45: #{tpu_custom_call.1} parent=1 // pred_fallthru
      _
    // Predicated region
    $region46: #{tpu_custom_call.1} parent=1 // pred_check
      _
    $region47: #{tpu_custom_call.1} parent=1 // pred_check_branch
      %148 = sbr.rel (0) target = $region49
    $region48: #{tpu_custom_call.1} parent=1 // pred_region
      %s150 = ssub.s32 6144, 6144
      %151 = vsyncadd [#allocation18], %s150
      %s152 = sshll.u32 [#allocation19], 4
      %s153 = int_to_ptr.vmem [resolvable:$true] %s152
      %158 = dma.hbm_to_vmem [thread:$0]  %s11, 6144, %s153, [#allocation18], 384, 384, 24
    $region49: #{tpu_custom_call.1} parent=1 // pred_fallthru
      _
    // Predicated region
    $region50: #{tpu_custom_call.1} parent=1 // pred_check
      _
    $region51: #{tpu_custom_call.1} parent=1 // pred_check_branch
      %160 = sbr.rel (0) target = $region53
    $region52: #{tpu_custom_call.1} parent=1 // pred_region
      %s162 = ssub.s32 8192, 8192
      %163 = vsyncadd [#allocation21], %s162
      %s164 = sshll.u32 [#allocation20], 4
      %s165 = int_to_ptr.vmem [resolvable:$true] %s164
      %170 = dma.hbm_to_vmem [thread:$0]  %s12, 8192, %s165, [#allocation21], 512, 512, 32
    $region53: #{tpu_custom_call.1} parent=1 // pred_fallthru
      _
    // Predicated region
    $region54: #{tpu_custom_call.1} parent=1 // pred_check
      _
    $region55: #{tpu_custom_call.1} parent=1 // pred_check_branch
      %172 = sbr.rel (0) target = $region57
    $region56: #{tpu_custom_call.1} parent=1 // pred_region
      %s174 = ssub.s32 8192, 8192
      %175 = vsyncadd [#allocation21], %s174
      %s176 = sshll.u32 [#allocation22], 4
      %s177 = int_to_ptr.vmem [resolvable:$true] %s176
      %182 = dma.hbm_to_vmem [thread:$0]  %s13, 8192, %s177, [#allocation21], 512, 512, 32
    $region57: #{tpu_custom_call.1} parent=1 // pred_fallthru
      _
    // Predicated region
    $region58: #{tpu_custom_call.1} parent=1 // pred_check
      _
    $region59: #{tpu_custom_call.1} parent=1 // pred_check_branch
      %184 = sbr.rel (0) target = $region61
    $region60: #{tpu_custom_call.1} parent=1 // pred_region
      _
    $region61: #{tpu_custom_call.1} parent=1 // pred_fallthru
      _
    // Predicated region
    $region62: #{tpu_custom_call.1} parent=1 // pred_check
      _
    $region63: #{tpu_custom_call.1} parent=1 // pred_check_branch
      %186 = sbr.rel (0) target = $region65
    $region64: #{tpu_custom_call.1} parent=1 // pred_region
      %187 = dma.done [#allocation3], 256
    $region65: #{tpu_custom_call.1} parent=1 // pred_fallthru
      _
    // Predicated region
    $region66: #{tpu_custom_call.1} parent=1 // pred_check
      _
    $region67: #{tpu_custom_call.1} parent=1 // pred_check_branch
      %189 = sbr.rel (0) target = $region69
    $region68: #{tpu_custom_call.1} parent=1 // pred_region
      %190 = dma.done [#allocation6], 128
    $region69: #{tpu_custom_call.1} parent=1 // pred_fallthru
      _
    // Predicated region
    $region70: #{tpu_custom_call.1} parent=1 // pred_check
      _
    $region71: #{tpu_custom_call.1} parent=1 // pred_check_branch
      %192 = sbr.rel (0) target = $region73
    $region72: #{tpu_custom_call.1} parent=1 // pred_region
      %193 = dma.done [#allocation6], 128
    $region73: #{tpu_custom_call.1} parent=1 // pred_fallthru
      _
    // Predicated region
    $region74: #{tpu_custom_call.1} parent=1 // pred_check
      _
    $region75: #{tpu_custom_call.1} parent=1 // pred_check_branch
      %195 = sbr.rel (0) target = $region77
    $region76: #{tpu_custom_call.1} parent=1 // pred_region
      %196 = dma.done [#allocation9], 1024
    $region77: #{tpu_custom_call.1} parent=1 // pred_fallthru
      _
    // Predicated region
    $region78: #{tpu_custom_call.1} parent=1 // pred_check
      _
    $region79: #{tpu_custom_call.1} parent=1 // pred_check_branch
      %198 = sbr.rel (0) target = $region81
    $region80: #{tpu_custom_call.1} parent=1 // pred_region
      %199 = dma.done [#allocation9], 1024
    $region81: #{tpu_custom_call.1} parent=1 // pred_fallthru
      _
    // Predicated region
    $region82: #{tpu_custom_call.1} parent=1 // pred_check
      _
    $region83: #{tpu_custom_call.1} parent=1 // pred_check_branch
      %201 = sbr.rel (0) target = $region85
    $region84: #{tpu_custom_call.1} parent=1 // pred_region
      %202 = dma.done [#allocation12], 128
    $region85: #{tpu_custom_call.1} parent=1 // pred_fallthru
      _
    // Predicated region
    $region86: #{tpu_custom_call.1} parent=1 // pred_check
      _
    $region87: #{tpu_custom_call.1} parent=1 // pred_check_branch
      %204 = sbr.rel (0) target = $region89
    $region88: #{tpu_custom_call.1} parent=1 // pred_region
      %205 = dma.done [#allocation12], 16384
    $region89: #{tpu_custom_call.1} parent=1 // pred_fallthru
      _
    // Predicated region
    $region90: #{tpu_custom_call.1} parent=1 // pred_check
      _
    $region91: #{tpu_custom_call.1} parent=1 // pred_check_branch
      %207 = sbr.rel (0) target = $region93
    $region92: #{tpu_custom_call.1} parent=1 // pred_region
      %208 = dma.done [#allocation15], 8192
    $region93: #{tpu_custom_call.1} parent=1 // pred_fallthru
      _
    // Predicated region
    $region94: #{tpu_custom_call.1} parent=1 // pred_check
      _
    $region95: #{tpu_custom_call.1} parent=1 // pred_check_branch
      %210 = sbr.rel (0) target = $region97
    $region96: #{tpu_custom_call.1} parent=1 // pred_region
      %211 = dma.done [#allocation15], 128
    $region97: #{tpu_custom_call.1} parent=1 // pred_fallthru
      _
    // Predicated region
    $region98: #{tpu_custom_call.1} parent=1 // pred_check
      _
    $region99: #{tpu_custom_call.1} parent=1 // pred_check_branch
      %213 = sbr.rel (0) target = $region101
    $region100: #{tpu_custom_call.1} parent=1 // pred_region
      %214 = dma.done [#allocation18], 6144
    $region101: #{tpu_custom_call.1} parent=1 // pred_fallthru
      _
    // Predicated region
    $region102: #{tpu_custom_call.1} parent=1 // pred_check
      _
    $region103: #{tpu_custom_call.1} parent=1 // pred_check_branch
      %216 = sbr.rel (0) target = $region105
    $region104: #{tpu_custom_call.1} parent=1 // pred_region
      %217 = dma.done [#allocation18], 6144
    $region105: #{tpu_custom_call.1} parent=1 // pred_fallthru
      _
    // Predicated region
    $region106: #{tpu_custom_call.1} parent=1 // pred_check
      _
    $region107: #{tpu_custom_call.1} parent=1 // pred_check_branch
      %219 = sbr.rel (0) target = $region109
    $region108: #{tpu_custom_call.1} parent=1 // pred_region
      %220 = dma.done [#allocation21], 8192
    $region109: #{tpu_custom_call.1} parent=1 // pred_fallthru
      _
    // Predicated region
    $region110: #{tpu_custom_call.1} parent=1 // pred_check
      _
    $region111: #{tpu_custom_call.1} parent=1 // pred_check_branch
      %222 = sbr.rel (0) target = $region113
    $region112: #{tpu_custom_call.1} parent=1 // pred_region
      %223 = dma.done [#allocation21], 8192
    $region113: #{tpu_custom_call.1} parent=1 // pred_fallthru
      _
    %v224 = vld [vmem:[#allocation2] sm:$0xff]
    %v225 = vld [vmem:[#allocation2 + $0x8] sm:$0xff]
    %v226 = vld [vmem:[%s14] sm:$0xf]
    %v227 = vld [vmem:[%s14 + $0x4] sm:$0x7]
    %v228 = vld [vmem:[%s14 + $0x7] sm:$0x7]
    %v229 = vld [vmem:[%s14 + $0xa] sm:$0xf]
    %v230 = vld [vmem:[%s14 + $0xe] sm:$0x1]
    %v231 = vld [vmem:[#allocation13] sm:$0xff]
    %v232 = vld [vmem:[#allocation13 + $0x8] sm:$0xff]
    %v233 = vld [vmem:[#allocation13 + $0x10] sm:$0xff]
    %v234 = vld [vmem:[#allocation13 + $0x18] sm:$0xff]
    %v235 = vld [vmem:[#allocation13 + $0x20] sm:$0xff]
    %v236 = vld [vmem:[#allocation13 + $0x28] sm:$0xff]
    %v237 = vld [vmem:[#allocation13 + $0x30] sm:$0xff]
    %v238 = vld [vmem:[#allocation13 + $0x38] sm:$0xff]
    %v239 = vld [vmem:[#allocation13 + $0x40] sm:$0xff]
    %v240 = vld [vmem:[#allocation13 + $0x48] sm:$0xff]
    %v241 = vld [vmem:[#allocation13 + $0x50] sm:$0xff]
    %v242 = vld [vmem:[#allocation13 + $0x58] sm:$0xff]
    %v243 = vld [vmem:[#allocation13 + $0x60] sm:$0xff]
    %v244 = vld [vmem:[#allocation13 + $0x68] sm:$0xff]
    %v245 = vld [vmem:[#allocation13 + $0x70] sm:$0xff]
    %v246 = vld [vmem:[#allocation13 + $0x78] sm:$0xff]
    %v247 = vld [vmem:[#allocation13 + $0x80] sm:$0xff]
    %v248 = vld [vmem:[#allocation13 + $0x88] sm:$0xff]
    %v249 = vld [vmem:[#allocation13 + $0x90] sm:$0xff]
    %v250 = vld [vmem:[#allocation13 + $0x98] sm:$0xff]
    %v251 = vld [vmem:[#allocation13 + $0xa0] sm:$0xff]
    %v252 = vld [vmem:[#allocation13 + $0xa8] sm:$0xff]
    %v253 = vld [vmem:[#allocation13 + $0xb0] sm:$0xff]
    %v254 = vld [vmem:[#allocation13 + $0xb8] sm:$0xff]
    %v255 = vld [vmem:[#allocation13 + $0xc0] sm:$0xff]
    %v256 = vld [vmem:[#allocation13 + $0xc8] sm:$0xff]
    %v257 = vld [vmem:[#allocation13 + $0xd0] sm:$0xff]
    %v258 = vld [vmem:[#allocation13 + $0xd8] sm:$0xff]
    %v259 = vld [vmem:[#allocation13 + $0xe0] sm:$0xff]
    %v260 = vld [vmem:[#allocation13 + $0xe8] sm:$0xff]
    %v261 = vld [vmem:[#allocation13 + $0xf0] sm:$0xff]
    %v262 = vld [vmem:[#allocation13 + $0xf8] sm:$0xff]
    %v263 = vld [vmem:[#allocation13 + $0x100] sm:$0xff]
    %v264 = vld [vmem:[#allocation13 + $0x108] sm:$0xff]
    %v265 = vld [vmem:[#allocation13 + $0x110] sm:$0xff]
    %v266 = vld [vmem:[#allocation13 + $0x118] sm:$0xff]
    %v267 = vld [vmem:[#allocation13 + $0x120] sm:$0xff]
    %v268 = vld [vmem:[#allocation13 + $0x128] sm:$0xff]
    %v269 = vld [vmem:[#allocation13 + $0x130] sm:$0xff]
    %v270 = vld [vmem:[#allocation13 + $0x138] sm:$0xff]
    %v271 = vld [vmem:[#allocation13 + $0x140] sm:$0xff]
    %v272 = vld [vmem:[#allocation13 + $0x148] sm:$0xff]
    %v273 = vld [vmem:[#allocation13 + $0x150] sm:$0xff]
    %v274 = vld [vmem:[#allocation13 + $0x158] sm:$0xff]
    %v275 = vld [vmem:[#allocation13 + $0x160] sm:$0xff]
    %v276 = vld [vmem:[#allocation13 + $0x168] sm:$0xff]
    %v277 = vld [vmem:[#allocation13 + $0x170] sm:$0xff]
    %v278 = vld [vmem:[#allocation13 + $0x178] sm:$0xff]
    %v279 = vld [vmem:[#allocation13 + $0x180] sm:$0xff]
    %v280 = vld [vmem:[#allocation13 + $0x188] sm:$0xff]
    %v281 = vld [vmem:[#allocation13 + $0x190] sm:$0xff]
    %v282 = vld [vmem:[#allocation13 + $0x198] sm:$0xff]
    %v283 = vld [vmem:[#allocation13 + $0x1a0] sm:$0xff]
    %v284 = vld [vmem:[#allocation13 + $0x1a8] sm:$0xff]
    %v285 = vld [vmem:[#allocation13 + $0x1b0] sm:$0xff]
    %v286 = vld [vmem:[#allocation13 + $0x1b8] sm:$0xff]
    %v287 = vld [vmem:[#allocation13 + $0x1c0] sm:$0xff]
    %v288 = vld [vmem:[#allocation13 + $0x1c8] sm:$0xff]
    %v289 = vld [vmem:[#allocation13 + $0x1d0] sm:$0xff]
    %v290 = vld [vmem:[#allocation13 + $0x1d8] sm:$0xff]
    %v291 = vld [vmem:[#allocation13 + $0x1e0] sm:$0xff]
    %v292 = vld [vmem:[#allocation13 + $0x1e8] sm:$0xff]
    %v293 = vld [vmem:[#allocation13 + $0x1f0] sm:$0xff]
    %v294 = vld [vmem:[#allocation13 + $0x1f8] sm:$0xff]
    %v295 = vld [vmem:[#allocation13 + $0x200] sm:$0xff]
    %v296 = vld [vmem:[#allocation13 + $0x208] sm:$0xff]
    %v297 = vld [vmem:[#allocation13 + $0x210] sm:$0xff]
    %v298 = vld [vmem:[#allocation13 + $0x218] sm:$0xff]
    %v299 = vld [vmem:[#allocation13 + $0x220] sm:$0xff]
    %v300 = vld [vmem:[#allocation13 + $0x228] sm:$0xff]
    %v301 = vld [vmem:[#allocation13 + $0x230] sm:$0xff]
    %v302 = vld [vmem:[#allocation13 + $0x238] sm:$0xff]
    %v303 = vld [vmem:[#allocation13 + $0x240] sm:$0xff]
    %v304 = vld [vmem:[#allocation13 + $0x248] sm:$0xff]
    %v305 = vld [vmem:[#allocation13 + $0x250] sm:$0xff]
    %v306 = vld [vmem:[#allocation13 + $0x258] sm:$0xff]
    %v307 = vld [vmem:[#allocation13 + $0x260] sm:$0xff]
    %v308 = vld [vmem:[#allocation13 + $0x268] sm:$0xff]
    %v309 = vld [vmem:[#allocation13 + $0x270] sm:$0xff]
    %v310 = vld [vmem:[#allocation13 + $0x278] sm:$0xff]
    %v311 = vld [vmem:[#allocation13 + $0x280] sm:$0xff]
    %v312 = vld [vmem:[#allocation13 + $0x288] sm:$0xff]
    %v313 = vld [vmem:[#allocation13 + $0x290] sm:$0xff]
    %v314 = vld [vmem:[#allocation13 + $0x298] sm:$0xff]
    %v315 = vld [vmem:[#allocation13 + $0x2a0] sm:$0xff]
    %v316 = vld [vmem:[#allocation13 + $0x2a8] sm:$0xff]
    %v317 = vld [vmem:[#allocation13 + $0x2b0] sm:$0xff]
    %v318 = vld [vmem:[#allocation13 + $0x2b8] sm:$0xff]
    %v319 = vld [vmem:[#allocation13 + $0x2c0] sm:$0xff]
    %v320 = vld [vmem:[#allocation13 + $0x2c8] sm:$0xff]
    %v321 = vld [vmem:[#allocation13 + $0x2d0] sm:$0xff]
    %v322 = vld [vmem:[#allocation13 + $0x2d8] sm:$0xff]
    %v323 = vld [vmem:[#allocation13 + $0x2e0] sm:$0xff]
    %v324 = vld [vmem:[#allocation13 + $0x2e8] sm:$0xff]
    %v325 = vld [vmem:[#allocation13 + $0x2f0] sm:$0xff]
    %v326 = vld [vmem:[#allocation13 + $0x2f8] sm:$0xff]
    %v327 = vld [vmem:[#allocation13 + $0x300] sm:$0xff]
    %v328 = vld [vmem:[#allocation13 + $0x308] sm:$0xff]
    %v329 = vld [vmem:[#allocation13 + $0x310] sm:$0xff]
    %v330 = vld [vmem:[#allocation13 + $0x318] sm:$0xff]
    %v331 = vld [vmem:[#allocation13 + $0x320] sm:$0xff]
    %v332 = vld [vmem:[#allocation13 + $0x328] sm:$0xff]
    %v333 = vld [vmem:[#allocation13 + $0x330] sm:$0xff]
    %v334 = vld [vmem:[#allocation13 + $0x338] sm:$0xff]
    %v335 = vld [vmem:[#allocation13 + $0x340] sm:$0xff]
    %v336 = vld [vmem:[#allocation13 + $0x348] sm:$0xff]
    %v337 = vld [vmem:[#allocation13 + $0x350] sm:$0xff]
    %v338 = vld [vmem:[#allocation13 + $0x358] sm:$0xff]
    %v339 = vld [vmem:[#allocation13 + $0x360] sm:$0xff]
    %v340 = vld [vmem:[#allocation13 + $0x368] sm:$0xff]
    %v341 = vld [vmem:[#allocation13 + $0x370] sm:$0xff]
    %v342 = vld [vmem:[#allocation13 + $0x378] sm:$0xff]
    %v343 = vld [vmem:[#allocation13 + $0x380] sm:$0xff]
    %v344 = vld [vmem:[#allocation13 + $0x388] sm:$0xff]
    %v345 = vld [vmem:[#allocation13 + $0x390] sm:$0xff]
    %v346 = vld [vmem:[#allocation13 + $0x398] sm:$0xff]
    %v347 = vld [vmem:[#allocation13 + $0x3a0] sm:$0xff]
    %v348 = vld [vmem:[#allocation13 + $0x3a8] sm:$0xff]
    %v349 = vld [vmem:[#allocation13 + $0x3b0] sm:$0xff]
    %v350 = vld [vmem:[#allocation13 + $0x3b8] sm:$0xff]
    %v351 = vld [vmem:[#allocation13 + $0x3c0] sm:$0xff]
    %v352 = vld [vmem:[#allocation13 + $0x3c8] sm:$0xff]
    %v353 = vld [vmem:[#allocation13 + $0x3d0] sm:$0xff]
    %v354 = vld [vmem:[#allocation13 + $0x3d8] sm:$0xff]
    %v355 = vld [vmem:[#allocation13 + $0x3e0] sm:$0xff]
    %v356 = vld [vmem:[#allocation13 + $0x3e8] sm:$0xff]
    %v357 = vld [vmem:[#allocation13 + $0x3f0] sm:$0xff]
    %v358 = vld [vmem:[#allocation13 + $0x3f8] sm:$0xff]
    %v359 = vld [vmem:[#allocation5] sm:$0xff]
    %v360 = vld [vmem:[#allocation14] sm:$0xff]
    %v361 = vld [vmem:[#allocation14 + $0x8] sm:$0xff]
    %v362 = vld [vmem:[#allocation14 + $0x10] sm:$0xff]
    %v363 = vld [vmem:[#allocation14 + $0x18] sm:$0xff]
    %v364 = vld [vmem:[#allocation14 + $0x20] sm:$0xff]
    %v365 = vld [vmem:[#allocation14 + $0x28] sm:$0xff]
    %v366 = vld [vmem:[#allocation14 + $0x30] sm:$0xff]
    %v367 = vld [vmem:[#allocation14 + $0x38] sm:$0xff]
    %v368 = vld [vmem:[#allocation14 + $0x40] sm:$0xff]
    %v369 = vld [vmem:[#allocation14 + $0x48] sm:$0xff]
    %v370 = vld [vmem:[#allocation14 + $0x50] sm:$0xff]
    %v371 = vld [vmem:[#allocation14 + $0x58] sm:$0xff]
    %v372 = vld [vmem:[#allocation14 + $0x60] sm:$0xff]
    %v373 = vld [vmem:[#allocation14 + $0x68] sm:$0xff]
    %v374 = vld [vmem:[#allocation14 + $0x70] sm:$0xff]
    %v375 = vld [vmem:[#allocation14 + $0x78] sm:$0xff]
    %v376 = vld [vmem:[#allocation14 + $0x80] sm:$0xff]
    %v377 = vld [vmem:[#allocation14 + $0x88] sm:$0xff]
    %v378 = vld [vmem:[#allocation14 + $0x90] sm:$0xff]
    %v379 = vld [vmem:[#allocation14 + $0x98] sm:$0xff]
    %v380 = vld [vmem:[#allocation14 + $0xa0] sm:$0xff]
    %v381 = vld [vmem:[#allocation14 + $0xa8] sm:$0xff]
    %v382 = vld [vmem:[#allocation14 + $0xb0] sm:$0xff]
    %v383 = vld [vmem:[#allocation14 + $0xb8] sm:$0xff]
    %v384 = vld [vmem:[#allocation14 + $0xc0] sm:$0xff]
    %v385 = vld [vmem:[#allocation14 + $0xc8] sm:$0xff]
    %v386 = vld [vmem:[#allocation14 + $0xd0] sm:$0xff]
    %v387 = vld [vmem:[#allocation14 + $0xd8] sm:$0xff]
    %v388 = vld [vmem:[#allocation14 + $0xe0] sm:$0xff]
    %v389 = vld [vmem:[#allocation14 + $0xe8] sm:$0xff]
    %v390 = vld [vmem:[#allocation14 + $0xf0] sm:$0xff]
    %v391 = vld [vmem:[#allocation14 + $0xf8] sm:$0xff]
    %v392 = vld [vmem:[#allocation14 + $0x100] sm:$0xff]
    %v393 = vld [vmem:[#allocation14 + $0x108] sm:$0xff]
    %v394 = vld [vmem:[#allocation14 + $0x110] sm:$0xff]
    %v395 = vld [vmem:[#allocation14 + $0x118] sm:$0xff]
    %v396 = vld [vmem:[#allocation14 + $0x120] sm:$0xff]
    %v397 = vld [vmem:[#allocation14 + $0x128] sm:$0xff]
    %v398 = vld [vmem:[#allocation14 + $0x130] sm:$0xff]
    %v399 = vld [vmem:[#allocation14 + $0x138] sm:$0xff]
    %v400 = vld [vmem:[#allocation14 + $0x140] sm:$0xff]
    %v401 = vld [vmem:[#allocation14 + $0x148] sm:$0xff]
    %v402 = vld [vmem:[#allocation14 + $0x150] sm:$0xff]
    %v403 = vld [vmem:[#allocation14 + $0x158] sm:$0xff]
    %v404 = vld [vmem:[#allocation14 + $0x160] sm:$0xff]
    %v405 = vld [vmem:[#allocation14 + $0x168] sm:$0xff]
    %v406 = vld [vmem:[#allocation14 + $0x170] sm:$0xff]
    %v407 = vld [vmem:[#allocation14 + $0x178] sm:$0xff]
    %v408 = vld [vmem:[#allocation14 + $0x180] sm:$0xff]
    %v409 = vld [vmem:[#allocation14 + $0x188] sm:$0xff]
    %v410 = vld [vmem:[#allocation14 + $0x190] sm:$0xff]
    %v411 = vld [vmem:[#allocation14 + $0x198] sm:$0xff]
    %v412 = vld [vmem:[#allocation14 + $0x1a0] sm:$0xff]
    %v413 = vld [vmem:[#allocation14 + $0x1a8] sm:$0xff]
    %v414 = vld [vmem:[#allocation14 + $0x1b0] sm:$0xff]
    %v415 = vld [vmem:[#allocation14 + $0x1b8] sm:$0xff]
    %v416 = vld [vmem:[#allocation14 + $0x1c0] sm:$0xff]
    %v417 = vld [vmem:[#allocation14 + $0x1c8] sm:$0xff]
    %v418 = vld [vmem:[#allocation14 + $0x1d0] sm:$0xff]
    %v419 = vld [vmem:[#allocation14 + $0x1d8] sm:$0xff]
    %v420 = vld [vmem:[#allocation14 + $0x1e0] sm:$0xff]
    %v421 = vld [vmem:[#allocation14 + $0x1e8] sm:$0xff]
    %v422 = vld [vmem:[#allocation14 + $0x1f0] sm:$0xff]
    %v423 = vld [vmem:[#allocation14 + $0x1f8] sm:$0xff]
    %424 = vmatprep.subr.mxu0 %v421
    %425 = vmatpush1.msra.mxu0 %v420
    %426 = vmatprep.subr.mxu0 %v417
    %427 = vmatpush1.msra.mxu0 %v416
    %428 = vmatprep.subr.mxu0 %v413
    %429 = vmatpush1.msra.mxu0 %v412
    %430 = vmatprep.subr.mxu0 %v409
    %431 = vmatpush1.msra.mxu0 %v408
    %432 = vmatprep.subr.mxu0 %v405
    %433 = vmatpush1.msra.mxu0 %v404
    %434 = vmatprep.subr.mxu0 %v401
    %435 = vmatpush1.msra.mxu0 %v400
    %436 = vmatprep.subr.mxu0 %v397
    %437 = vmatpush1.msra.mxu0 %v396
    %438 = vmatprep.subr.mxu0 %v393
    %439 = vmatpush1.msra.mxu0 %v392
    %440 = vmatprep.subr.mxu0 %v389
    %441 = vmatpush1.msra.mxu0 %v388
    %442 = vmatprep.subr.mxu0 %v385
    %443 = vmatpush1.msra.mxu0 %v384
    %444 = vmatprep.subr.mxu0 %v381
    %445 = vmatpush1.msra.mxu0 %v380
    %446 = vmatprep.subr.mxu0 %v377
    %447 = vmatpush1.msra.mxu0 %v376
    %448 = vmatprep.subr.mxu0 %v373
    %449 = vmatpush1.msra.mxu0 %v372
    %450 = vmatprep.subr.mxu0 %v369
    %451 = vmatpush1.msra.mxu0 %v368
    %452 = vmatprep.subr.mxu0 %v365
    %453 = vmatpush1.msra.mxu0 %v364
    %454 = vmatprep.subr.mxu0 %v361
    %455 = vmatpush1.msra.mxu0 %v360
    %456 = vmatprep.subr.mxu0 0.0
    %457 = vmatpush2.msra.mxu0 0.0
    %458 = vmatprep.subr.mxu0 0.0
    %459 = vmatpush2.msra.mxu0 0.0
    %460 = vmatprep.subr.mxu0 0.0
    %461 = vmatpush2.msra.mxu0 0.0
    %462 = vmatprep.subr.mxu0 0.0
    %463 = vmatpush2.msra.mxu0 0.0
    %464 = vmatprep.subr.mxu0 0.0
    %465 = vmatpush2.msra.mxu0 0.0
    %466 = vmatprep.subr.mxu0 0.0
    %467 = vmatpush2.msra.mxu0 0.0
    %468 = vmatprep.subr.mxu0 0.0
    %469 = vmatpush2.msra.mxu0 0.0
    %470 = vmatprep.subr.mxu0 0.0
    %471 = vmatpush2.msra.mxu0 0.0
    %472 = vmatprep.subr.mxu0 0.0
    %473 = vmatpush2.msra.mxu0 0.0
    %474 = vmatprep.subr.mxu0 0.0
    %475 = vmatpush2.msra.mxu0 0.0
    %476 = vmatprep.subr.mxu0 0.0
    %477 = vmatpush2.msra.mxu0 0.0
    %478 = vmatprep.subr.mxu0 0.0
    %479 = vmatpush2.msra.mxu0 0.0
    %480 = vmatprep.subr.mxu0 0.0
    %481 = vmatpush2.msra.mxu0 0.0
    %482 = vmatprep.subr.mxu0 0.0
    %483 = vmatpush2.msra.mxu0 0.0
    %484 = vmatprep.subr.mxu0 0.0
    %485 = vmatpush2.msra.mxu0 0.0
    %486 = vmatprep.subr.mxu0 0.0
    %487 = vmatpush2.msra.mxu0 0.0
    %488 = vmatprep.mubr.f32.mxu0 0.0
    %489 = vmatmul.mubr.f32.gmra.mxu0 %v359
    %v490 = vpop.f32.mrf.mxu0
    %v491 = vadd.f32 0.0, %v490
    %v492 = vpop.f32.mrf.mxu0
    %v493 = vadd.f32 0.0, %v492
    %494 = vdwg.mxu0
    %495 = vmatprep.subr.mxu0 %v423
    %496 = vmatpush1.msra.mxu0 %v422
    %497 = vmatprep.subr.mxu0 %v419
    %498 = vmatpush1.msra.mxu0 %v418
    %499 = vmatprep.subr.mxu0 %v415
    %500 = vmatpush1.msra.mxu0 %v414
    %501 = vmatprep.subr.mxu0 %v411
    %502 = vmatpush1.msra.mxu0 %v410
    %503 = vmatprep.subr.mxu0 %v407
    %504 = vmatpush1.msra.mxu0 %v406
    %505 = vmatprep.subr.mxu0 %v403
    %506 = vmatpush1.msra.mxu0 %v402
    %507 = vmatprep.subr.mxu0 %v399
    %508 = vmatpush1.msra.mxu0 %v398
    %509 = vmatprep.subr.mxu0 %v395
    %510 = vmatpush1.msra.mxu0 %v394
    %511 = vmatprep.subr.mxu0 %v391
    %512 = vmatpush1.msra.mxu0 %v390
    %513 = vmatprep.subr.mxu0 %v387
    %514 = vmatpush1.msra.mxu0 %v386
    %515 = vmatprep.subr.mxu0 %v383
    %516 = vmatpush1.msra.mxu0 %v382
    %517 = vmatprep.subr.mxu0 %v379
    %518 = vmatpush1.msra.mxu0 %v378
    %519 = vmatprep.subr.mxu0 %v375
    %520 = vmatpush1.msra.mxu0 %v374
    %521 = vmatprep.subr.mxu0 %v371
    %522 = vmatpush1.msra.mxu0 %v370
    %523 = vmatprep.subr.mxu0 %v367
    %524 = vmatpush1.msra.mxu0 %v366
    %525 = vmatprep.subr.mxu0 %v363
    %526 = vmatpush1.msra.mxu0 %v362
    %527 = vmatprep.subr.mxu0 0.0
    %528 = vmatpush2.msra.mxu0 0.0
    %529 = vmatprep.subr.mxu0 0.0
    %530 = vmatpush2.msra.mxu0 0.0
    %531 = vmatprep.subr.mxu0 0.0
    %532 = vmatpush2.msra.mxu0 0.0
    %533 = vmatprep.subr.mxu0 0.0
    %534 = vmatpush2.msra.mxu0 0.0
    %535 = vmatprep.subr.mxu0 0.0
    %536 = vmatpush2.msra.mxu0 0.0
    %537 = vmatprep.subr.mxu0 0.0
    %538 = vmatpush2.msra.mxu0 0.0
    %539 = vmatprep.subr.mxu0 0.0
    %540 = vmatpush2.msra.mxu0 0.0
    %541 = vmatprep.subr.mxu0 0.0
    %542 = vmatpush2.msra.mxu0 0.0
    %543 = vmatprep.subr.mxu0 0.0
    %544 = vmatpush2.msra.mxu0 0.0
    %545 = vmatprep.subr.mxu0 0.0
    %546 = vmatpush2.msra.mxu0 0.0
    %547 = vmatprep.subr.mxu0 0.0
    %548 = vmatpush2.msra.mxu0 0.0
    %549 = vmatprep.subr.mxu0 0.0
    %550 = vmatpush2.msra.mxu0 0.0
    %551 = vmatprep.subr.mxu0 0.0
    %552 = vmatpush2.msra.mxu0 0.0
    %553 = vmatprep.subr.mxu0 0.0
    %554 = vmatpush2.msra.mxu0 0.0
    %555 = vmatprep.subr.mxu0 0.0
    %556 = vmatpush2.msra.mxu0 0.0
    %557 = vmatprep.subr.mxu0 0.0
    %558 = vmatpush2.msra.mxu0 0.0
    %559 = vmatprep.mubr.f32.mxu0 0.0
    %560 = vmatmul.mubr.f32.gmra.mxu0 %v359
    %v561 = vpop.f32.mrf.mxu0
    %v562 = vadd.f32 0.0, %v561
    %v563 = vpop.f32.mrf.mxu0
    %v564 = vadd.f32 0.0, %v563
    %565 = vdwg.mxu0
    %566 = vmatprep.subr.mxu0 %v292
    %567 = vmatpush1.msra.mxu0 %v291
    %568 = vmatprep.subr.mxu0 %v288
    %569 = vmatpush1.msra.mxu0 %v287
    %570 = vmatprep.subr.mxu0 %v284
    %571 = vmatpush1.msra.mxu0 %v283
    %572 = vmatprep.subr.mxu0 %v280
    %573 = vmatpush1.msra.mxu0 %v279
    %574 = vmatprep.subr.mxu0 %v276
    %575 = vmatpush1.msra.mxu0 %v275
    %576 = vmatprep.subr.mxu0 %v272
    %577 = vmatpush1.msra.mxu0 %v271
    %578 = vmatprep.subr.mxu0 %v268
    %579 = vmatpush1.msra.mxu0 %v267
    %580 = vmatprep.subr.mxu0 %v264
    %581 = vmatpush1.msra.mxu0 %v263
    %582 = vmatprep.subr.mxu0 %v260
    %583 = vmatpush1.msra.mxu0 %v259
    %584 = vmatprep.subr.mxu0 %v256
    %585 = vmatpush1.msra.mxu0 %v255
    %586 = vmatprep.subr.mxu0 %v252
    %587 = vmatpush1.msra.mxu0 %v251
    %588 = vmatprep.subr.mxu0 %v248
    %589 = vmatpush1.msra.mxu0 %v247
    %590 = vmatprep.subr.mxu0 %v244
    %591 = vmatpush1.msra.mxu0 %v243
    %592 = vmatprep.subr.mxu0 %v240
    %593 = vmatpush1.msra.mxu0 %v239
    %594 = vmatprep.subr.mxu0 %v236
    %595 = vmatpush1.msra.mxu0 %v235
    %596 = vmatprep.subr.mxu0 %v232
    %597 = vmatpush1.msra.mxu0 %v231
    %598 = vmatprep.subr.mxu0 %v356
    %599 = vmatpush2.msra.mxu0 %v355
    %600 = vmatprep.subr.mxu0 %v352
    %601 = vmatpush2.msra.mxu0 %v351
    %602 = vmatprep.subr.mxu0 %v348
    %603 = vmatpush2.msra.mxu0 %v347
    %604 = vmatprep.subr.mxu0 %v344
    %605 = vmatpush2.msra.mxu0 %v343
    %606 = vmatprep.subr.mxu0 %v340
    %607 = vmatpush2.msra.mxu0 %v339
    %608 = vmatprep.subr.mxu0 %v336
    %609 = vmatpush2.msra.mxu0 %v335
    %610 = vmatprep.subr.mxu0 %v332
    %611 = vmatpush2.msra.mxu0 %v331
    %612 = vmatprep.subr.mxu0 %v328
    %613 = vmatpush2.msra.mxu0 %v327
    %614 = vmatprep.subr.mxu0 %v324
    %615 = vmatpush2.msra.mxu0 %v323
    %616 = vmatprep.subr.mxu0 %v320
    %617 = vmatpush2.msra.mxu0 %v319
    %618 = vmatprep.subr.mxu0 %v316
    %619 = vmatpush2.msra.mxu0 %v315
    %620 = vmatprep.subr.mxu0 %v312
    %621 = vmatpush2.msra.mxu0 %v311
    %622 = vmatprep.subr.mxu0 %v308
    %623 = vmatpush2.msra.mxu0 %v307
    %624 = vmatprep.subr.mxu0 %v304
    %625 = vmatpush2.msra.mxu0 %v303
    %626 = vmatprep.subr.mxu0 %v300
    %627 = vmatpush2.msra.mxu0 %v299
    %628 = vmatprep.subr.mxu0 %v296
    %629 = vmatpush2.msra.mxu0 %v295
    %630 = vmatprep.mubr.f32.mxu0 %v225
    %631 = vmatmul.mubr.f32.gmra.mxu0 %v224
    %v632 = vpop.f32.mrf.mxu0
    %v633 = vadd.f32 %v491, %v632
    %v634 = vpop.f32.mrf.mxu0
    %v635 = vadd.f32 %v493, %v634
    %636 = vdwg.mxu0
    %637 = vmatprep.subr.mxu0 %v294
    %638 = vmatpush1.msra.mxu0 %v293
    %639 = vmatprep.subr.mxu0 %v290
    %640 = vmatpush1.msra.mxu0 %v289
    %641 = vmatprep.subr.mxu0 %v286
    %642 = vmatpush1.msra.mxu0 %v285
    %643 = vmatprep.subr.mxu0 %v282
    %644 = vmatpush1.msra.mxu0 %v281
    %645 = vmatprep.subr.mxu0 %v278
    %646 = vmatpush1.msra.mxu0 %v277
    %647 = vmatprep.subr.mxu0 %v274
    %648 = vmatpush1.msra.mxu0 %v273
    %649 = vmatprep.subr.mxu0 %v270
    %650 = vmatpush1.msra.mxu0 %v269
    %651 = vmatprep.subr.mxu0 %v266
    %652 = vmatpush1.msra.mxu0 %v265
    %653 = vmatprep.subr.mxu0 %v262
    %654 = vmatpush1.msra.mxu0 %v261
    %655 = vmatprep.subr.mxu0 %v258
    %656 = vmatpush1.msra.mxu0 %v257
    %657 = vmatprep.subr.mxu0 %v254
    %658 = vmatpush1.msra.mxu0 %v253
    %659 = vmatprep.subr.mxu0 %v250
    %660 = vmatpush1.msra.mxu0 %v249
    %661 = vmatprep.subr.mxu0 %v246
    %662 = vmatpush1.msra.mxu0 %v245
    %663 = vmatprep.subr.mxu0 %v242
    %664 = vmatpush1.msra.mxu0 %v241
    %665 = vmatprep.subr.mxu0 %v238
    %666 = vmatpush1.msra.mxu0 %v237
    %667 = vmatprep.subr.mxu0 %v234
    %668 = vmatpush1.msra.mxu0 %v233
    %669 = vmatprep.subr.mxu0 %v358
    %670 = vmatpush2.msra.mxu0 %v357
    %671 = vmatprep.subr.mxu0 %v354
    %672 = vmatpush2.msra.mxu0 %v353
    %673 = vmatprep.subr.mxu0 %v350
    %674 = vmatpush2.msra.mxu0 %v349
    %675 = vmatprep.subr.mxu0 %v346
    %676 = vmatpush2.msra.mxu0 %v345
    %677 = vmatprep.subr.mxu0 %v342
    %678 = vmatpush2.msra.mxu0 %v341
    %679 = vmatprep.subr.mxu0 %v338
    %680 = vmatpush2.msra.mxu0 %v337
    %681 = vmatprep.subr.mxu0 %v334
    %682 = vmatpush2.msra.mxu0 %v333
    %683 = vmatprep.subr.mxu0 %v330
    %684 = vmatpush2.msra.mxu0 %v329
    %685 = vmatprep.subr.mxu0 %v326
    %686 = vmatpush2.msra.mxu0 %v325
    %687 = vmatprep.subr.mxu0 %v322
    %688 = vmatpush2.msra.mxu0 %v321
    %689 = vmatprep.subr.mxu0 %v318
    %690 = vmatpush2.msra.mxu0 %v317
    %691 = vmatprep.subr.mxu0 %v314
    %692 = vmatpush2.msra.mxu0 %v313
    %693 = vmatprep.subr.mxu0 %v310
    %694 = vmatpush2.msra.mxu0 %v309
    %695 = vmatprep.subr.mxu0 %v306
    %696 = vmatpush2.msra.mxu0 %v305
    %697 = vmatprep.subr.mxu0 %v302
    %698 = vmatpush2.msra.mxu0 %v301
    %699 = vmatprep.subr.mxu0 %v298
    %700 = vmatpush2.msra.mxu0 %v297
    %701 = vmatprep.mubr.f32.mxu0 %v225
    %702 = vmatmul.mubr.f32.gmra.mxu0 %v224
    %v703 = vpop.f32.mrf.mxu0
    %v704 = vadd.f32 %v562, %v703
    %v705 = vpop.f32.mrf.mxu0
    %v706 = vadd.f32 %v564, %v705
    %707 = vdwg.mxu0
    %v709 = vlaneseq
    %v710 = vshrl.u32 %v709, 7
    %v711 = vsub.s32 0, %v710
    %v712 = vrot.slane %v226, %v711
    %v713 = vlaneseq
    %v714 = vshrl.u32 %v713, 7
    %v715 = vsub.s32 1, %v714
    %v716 = vrot.slane %v226, %v715
    %v717 = vlaneseq
    %v718 = vshrl.u32 %v717, 7
    %v719 = vsub.s32 2, %v718
    %v720 = vrot.slane %v226, %v719
    %v721 = vlaneseq
    %v722 = vshrl.u32 %v721, 7
    %v723 = vsub.s32 3, %v722
    %v724 = vrot.slane %v226, %v723
    %v729 = vadd.f32 %v633, %v712
    %v730 = vadd.f32 %v635, %v716
    %v731 = vadd.f32 %v704, %v720
    %v732 = vadd.f32 %v706, %v724
    %v733 = vxor.u32 %v729, 2147483648
    %v734 = vmul.f32 %v733, 1.442695
    %v735 = vpow.pop %v734
    %v736 = vadd.f32 %v735, 1.0
    %v737 = vrcp.pop %v736
    %v738 = vmul.f32 1.0, %v737
    %v739 = vxor.u32 %v730, 2147483648
    %v740 = vmul.f32 %v739, 1.442695
    %v741 = vpow.pop %v740
    %v742 = vadd.f32 %v741, 1.0
    %v743 = vrcp.pop %v742
    %v744 = vmul.f32 1.0, %v743
    %v745 = vtanh.pop %v731
    %v746 = vxor.u32 %v732, 2147483648
    %v747 = vmul.f32 %v746, 1.442695
    %v748 = vpow.pop %v747
    %v749 = vadd.f32 %v748, 1.0
    %v750 = vrcp.pop %v749
    %v751 = vmul.f32 1.0, %v750
    %v752 = vld [vmem:[#allocation7] sm:$0xff]
    %v753 = vmul.f32 %v744, %v752
    %v754 = vmul.f32 %v738, %v745
    %v755 = vadd.f32 %v753, %v754
    %v756 = vtanh.pop %v755
    %v757 = vmul.f32 %v751, %v756
    %758 = vst [vmem:[#allocation23] sm:$0xff] %v757
    %759 = vst [vmem:[#allocation24] sm:$0xff] %v755
    %v761 = vcombine.high %v757, %v757
    %v763 = vunpack.c.l.s4 1966171168
    %v764 = vunpack.c.0.s8 %v763
    %v765 = vlaneseq
    %v766 = vshrl.u32 %v765, 7
    %v767 = vsub.s32 %v764, %v766
    %v768 = vrot.slane %v757, %v767
    %v770 = vunpack.c.l.s4 1966171168
    %v771 = vunpack.c.0.s8 %v770
    %v772 = vlaneseq
    %v773 = vshrl.u32 %v772, 7
    %v774 = vsub.s32 %v771, %v773
    %v775 = vrot.slane %v761, %v774
    %v776 = vcombine.high %v768, %v768
    %v777 = vcombine.high %v775, %v775
    %v779 = vunpack.c.l.s4 1966171168
    %v780 = vunpack.c.0.s8 %v779
    %v781 = vlaneseq
    %v782 = vshrl.u32 %v781, 7
    %v783 = vsub.s32 %v780, %v782
    %v784 = vrot.slane %v768, %v783
    %v786 = vunpack.c.l.s4 1966171168
    %v787 = vunpack.c.0.s8 %v786
    %v788 = vlaneseq
    %v789 = vshrl.u32 %v788, 7
    %v790 = vsub.s32 %v787, %v789
    %v791 = vrot.slane %v775, %v790
    %v793 = vunpack.c.l.s4 1966171168
    %v794 = vunpack.c.0.s8 %v793
    %v795 = vlaneseq
    %v796 = vshrl.u32 %v795, 7
    %v797 = vsub.s32 %v794, %v796
    %v798 = vrot.slane %v776, %v797
    %v800 = vunpack.c.l.s4 1966171168
    %v801 = vunpack.c.0.s8 %v800
    %v802 = vlaneseq
    %v803 = vshrl.u32 %v802, 7
    %v804 = vsub.s32 %v801, %v803
    %v805 = vrot.slane %v777, %v804
    %v806 = vcombine.high %v784, %v784
    %v807 = vcombine.high %v791, %v791
    %v808 = vcombine.high %v798, %v798
    %v809 = vcombine.high %v805, %v805
    %v818 = vld [vmem:[#allocation8] sm:$0xff]
    %v819 = vld [vmem:[#allocation8 + $0x8] sm:$0xff]
    %v820 = vld [vmem:[#allocation8 + $0x10] sm:$0xff]
    %v821 = vld [vmem:[#allocation8 + $0x18] sm:$0xff]
    %v822 = vld [vmem:[#allocation8 + $0x20] sm:$0xff]
    %v823 = vld [vmem:[#allocation8 + $0x28] sm:$0xff]
    %v824 = vld [vmem:[#allocation8 + $0x30] sm:$0xff]
    %v825 = vld [vmem:[#allocation8 + $0x38] sm:$0xff]
    %826 = vmatprep.subr.mxu0 0.0
    %827 = vmatpush1.xpose.msra.mxu0 0.0
    %828 = vmatprep.subr.mxu0 0.0
    %829 = vmatpush1.xpose.msra.mxu0 0.0
    %830 = vmatprep.subr.mxu0 0.0
    %831 = vmatpush1.xpose.msra.mxu0 0.0
    %832 = vmatprep.subr.mxu0 0.0
    %833 = vmatpush1.xpose.msra.mxu0 0.0
    %834 = vmatprep.subr.mxu0 0.0
    %835 = vmatpush1.xpose.msra.mxu0 0.0
    %836 = vmatprep.subr.mxu0 0.0
    %837 = vmatpush1.xpose.msra.mxu0 0.0
    %838 = vmatprep.subr.mxu0 0.0
    %839 = vmatpush1.xpose.msra.mxu0 0.0
    %840 = vmatprep.subr.mxu0 0.0
    %841 = vmatpush1.xpose.msra.mxu0 0.0
    %842 = vmatprep.subr.mxu0 0.0
    %843 = vmatpush1.xpose.msra.mxu0 0.0
    %844 = vmatprep.subr.mxu0 0.0
    %845 = vmatpush1.xpose.msra.mxu0 0.0
    %846 = vmatprep.subr.mxu0 0.0
    %847 = vmatpush1.xpose.msra.mxu0 0.0
    %848 = vmatprep.subr.mxu0 0.0
    %849 = vmatpush1.xpose.msra.mxu0 0.0
    %850 = vmatprep.subr.mxu0 0.0
    %851 = vmatpush1.xpose.msra.mxu0 0.0
    %852 = vmatprep.subr.mxu0 0.0
    %853 = vmatpush1.xpose.msra.mxu0 0.0
    %854 = vmatprep.subr.mxu0 0.0
    %855 = vmatpush1.xpose.msra.mxu0 0.0
    %856 = vmatprep.subr.mxu0 0.0
    %857 = vmatpush1.xpose.msra.mxu0 %v818
    %858 = vmatprep.subr.mxu0 0.0
    %859 = vmatpush2.xpose.msra.mxu0 0.0
    %860 = vmatprep.subr.mxu0 0.0
    %861 = vmatpush2.xpose.msra.mxu0 0.0
    %862 = vmatprep.subr.mxu0 0.0
    %863 = vmatpush2.xpose.msra.mxu0 0.0
    %864 = vmatprep.subr.mxu0 0.0
    %865 = vmatpush2.xpose.msra.mxu0 0.0
    %866 = vmatprep.subr.mxu0 0.0
    %867 = vmatpush2.xpose.msra.mxu0 0.0
    %868 = vmatprep.subr.mxu0 0.0
    %869 = vmatpush2.xpose.msra.mxu0 0.0
    %870 = vmatprep.subr.mxu0 0.0
    %871 = vmatpush2.xpose.msra.mxu0 0.0
    %872 = vmatprep.subr.mxu0 0.0
    %873 = vmatpush2.xpose.msra.mxu0 0.0
    %874 = vmatprep.subr.mxu0 0.0
    %875 = vmatpush2.xpose.msra.mxu0 0.0
    %876 = vmatprep.subr.mxu0 0.0
    %877 = vmatpush2.xpose.msra.mxu0 0.0
    %878 = vmatprep.subr.mxu0 0.0
    %879 = vmatpush2.xpose.msra.mxu0 0.0
    %880 = vmatprep.subr.mxu0 0.0
    %881 = vmatpush2.xpose.msra.mxu0 0.0
    %882 = vmatprep.subr.mxu0 0.0
    %883 = vmatpush2.xpose.msra.mxu0 0.0
    %884 = vmatprep.subr.mxu0 0.0
    %885 = vmatpush2.xpose.msra.mxu0 0.0
    %886 = vmatprep.subr.mxu0 0.0
    %887 = vmatpush2.xpose.msra.mxu0 0.0
    %888 = vmatprep.subr.mxu0 0.0
    %889 = vmatpush2.xpose.msra.mxu0 0.0
    %890 = vmatprep.mubr.f32.mxu0 0.0
    %891 = vmatmul.mubr.f32.gmra.mxu0 %v784
    %v892 = vpop.f32.mrf.mxu0
    %v893 = vadd.f32 0.0, %v892
    %v894 = vpop.f32.mrf.mxu0
    %895 = vdwg.mxu0
    %896 = vmatprep.subr.mxu0 0.0
    %897 = vmatpush1.xpose.msra.mxu0 0.0
    %898 = vmatprep.subr.mxu0 0.0
    %899 = vmatpush1.xpose.msra.mxu0 0.0
    %900 = vmatprep.subr.mxu0 0.0
    %901 = vmatpush1.xpose.msra.mxu0 0.0
    %902 = vmatprep.subr.mxu0 0.0
    %903 = vmatpush1.xpose.msra.mxu0 0.0
    %904 = vmatprep.subr.mxu0 0.0
    %905 = vmatpush1.xpose.msra.mxu0 0.0
    %906 = vmatprep.subr.mxu0 0.0
    %907 = vmatpush1.xpose.msra.mxu0 0.0
    %908 = vmatprep.subr.mxu0 0.0
    %909 = vmatpush1.xpose.msra.mxu0 0.0
    %910 = vmatprep.subr.mxu0 0.0
    %911 = vmatpush1.xpose.msra.mxu0 0.0
    %912 = vmatprep.subr.mxu0 0.0
    %913 = vmatpush1.xpose.msra.mxu0 0.0
    %914 = vmatprep.subr.mxu0 0.0
    %915 = vmatpush1.xpose.msra.mxu0 0.0
    %916 = vmatprep.subr.mxu0 0.0
    %917 = vmatpush1.xpose.msra.mxu0 0.0
    %918 = vmatprep.subr.mxu0 0.0
    %919 = vmatpush1.xpose.msra.mxu0 0.0
    %920 = vmatprep.subr.mxu0 0.0
    %921 = vmatpush1.xpose.msra.mxu0 0.0
    %922 = vmatprep.subr.mxu0 0.0
    %923 = vmatpush1.xpose.msra.mxu0 0.0
    %924 = vmatprep.subr.mxu0 0.0
    %925 = vmatpush1.xpose.msra.mxu0 0.0
    %926 = vmatprep.subr.mxu0 0.0
    %927 = vmatpush1.xpose.msra.mxu0 %v819
    %928 = vmatprep.subr.mxu0 0.0
    %929 = vmatpush2.xpose.msra.mxu0 0.0
    %930 = vmatprep.subr.mxu0 0.0
    %931 = vmatpush2.xpose.msra.mxu0 0.0
    %932 = vmatprep.subr.mxu0 0.0
    %933 = vmatpush2.xpose.msra.mxu0 0.0
    %934 = vmatprep.subr.mxu0 0.0
    %935 = vmatpush2.xpose.msra.mxu0 0.0
    %936 = vmatprep.subr.mxu0 0.0
    %937 = vmatpush2.xpose.msra.mxu0 0.0
    %938 = vmatprep.subr.mxu0 0.0
    %939 = vmatpush2.xpose.msra.mxu0 0.0
    %940 = vmatprep.subr.mxu0 0.0
    %941 = vmatpush2.xpose.msra.mxu0 0.0
    %942 = vmatprep.subr.mxu0 0.0
    %943 = vmatpush2.xpose.msra.mxu0 0.0
    %944 = vmatprep.subr.mxu0 0.0
    %945 = vmatpush2.xpose.msra.mxu0 0.0
    %946 = vmatprep.subr.mxu0 0.0
    %947 = vmatpush2.xpose.msra.mxu0 0.0
    %948 = vmatprep.subr.mxu0 0.0
    %949 = vmatpush2.xpose.msra.mxu0 0.0
    %950 = vmatprep.subr.mxu0 0.0
    %951 = vmatpush2.xpose.msra.mxu0 0.0
    %952 = vmatprep.subr.mxu0 0.0
    %953 = vmatpush2.xpose.msra.mxu0 0.0
    %954 = vmatprep.subr.mxu0 0.0
    %955 = vmatpush2.xpose.msra.mxu0 0.0
    %956 = vmatprep.subr.mxu0 0.0
    %957 = vmatpush2.xpose.msra.mxu0 0.0
    %958 = vmatprep.subr.mxu0 0.0
    %959 = vmatpush2.xpose.msra.mxu0 0.0
    %960 = vmatprep.mubr.f32.mxu0 0.0
    %961 = vmatmul.mubr.f32.gmra.mxu0 %v798
    %v962 = vpop.f32.mrf.mxu0
    %v963 = vadd.f32 0.0, %v962
    %v964 = vpop.f32.mrf.mxu0
    %965 = vdwg.mxu0
    %966 = vmatprep.subr.mxu0 0.0
    %967 = vmatpush1.xpose.msra.mxu0 0.0
    %968 = vmatprep.subr.mxu0 0.0
    %969 = vmatpush1.xpose.msra.mxu0 0.0
    %970 = vmatprep.subr.mxu0 0.0
    %971 = vmatpush1.xpose.msra.mxu0 0.0
    %972 = vmatprep.subr.mxu0 0.0
    %973 = vmatpush1.xpose.msra.mxu0 0.0
    %974 = vmatprep.subr.mxu0 0.0
    %975 = vmatpush1.xpose.msra.mxu0 0.0
    %976 = vmatprep.subr.mxu0 0.0
    %977 = vmatpush1.xpose.msra.mxu0 0.0
    %978 = vmatprep.subr.mxu0 0.0
    %979 = vmatpush1.xpose.msra.mxu0 0.0
    %980 = vmatprep.subr.mxu0 0.0
    %981 = vmatpush1.xpose.msra.mxu0 0.0
    %982 = vmatprep.subr.mxu0 0.0
    %983 = vmatpush1.xpose.msra.mxu0 0.0
    %984 = vmatprep.subr.mxu0 0.0
    %985 = vmatpush1.xpose.msra.mxu0 0.0
    %986 = vmatprep.subr.mxu0 0.0
    %987 = vmatpush1.xpose.msra.mxu0 0.0
    %988 = vmatprep.subr.mxu0 0.0
    %989 = vmatpush1.xpose.msra.mxu0 0.0
    %990 = vmatprep.subr.mxu0 0.0
    %991 = vmatpush1.xpose.msra.mxu0 0.0
    %992 = vmatprep.subr.mxu0 0.0
    %993 = vmatpush1.xpose.msra.mxu0 0.0
    %994 = vmatprep.subr.mxu0 0.0
    %995 = vmatpush1.xpose.msra.mxu0 0.0
    %996 = vmatprep.subr.mxu0 0.0
    %997 = vmatpush1.xpose.msra.mxu0 %v820
    %998 = vmatprep.subr.mxu0 0.0
    %999 = vmatpush2.xpose.msra.mxu0 0.0
    %1000 = vmatprep.subr.mxu0 0.0
    %1001 = vmatpush2.xpose.msra.mxu0 0.0
    %1002 = vmatprep.subr.mxu0 0.0
    %1003 = vmatpush2.xpose.msra.mxu0 0.0
    %1004 = vmatprep.subr.mxu0 0.0
    %1005 = vmatpush2.xpose.msra.mxu0 0.0
    %1006 = vmatprep.subr.mxu0 0.0
    %1007 = vmatpush2.xpose.msra.mxu0 0.0
    %1008 = vmatprep.subr.mxu0 0.0
    %1009 = vmatpush2.xpose.msra.mxu0 0.0
    %1010 = vmatprep.subr.mxu0 0.0
    %1011 = vmatpush2.xpose.msra.mxu0 0.0
    %1012 = vmatprep.subr.mxu0 0.0
    %1013 = vmatpush2.xpose.msra.mxu0 0.0
    %1014 = vmatprep.subr.mxu0 0.0
    %1015 = vmatpush2.xpose.msra.mxu0 0.0
    %1016 = vmatprep.subr.mxu0 0.0
    %1017 = vmatpush2.xpose.msra.mxu0 0.0
    %1018 = vmatprep.subr.mxu0 0.0
    %1019 = vmatpush2.xpose.msra.mxu0 0.0
    %1020 = vmatprep.subr.mxu0 0.0
    %1021 = vmatpush2.xpose.msra.mxu0 0.0
    %1022 = vmatprep.subr.mxu0 0.0
    %1023 = vmatpush2.xpose.msra.mxu0 0.0
    %1024 = vmatprep.subr.mxu0 0.0
    %1025 = vmatpush2.xpose.msra.mxu0 0.0
    %1026 = vmatprep.subr.mxu0 0.0
    %1027 = vmatpush2.xpose.msra.mxu0 0.0
    %1028 = vmatprep.subr.mxu0 0.0
    %1029 = vmatpush2.xpose.msra.mxu0 0.0
    %1030 = vmatprep.mubr.f32.mxu0 0.0
    %1031 = vmatmul.mubr.f32.gmra.mxu0 %v806
    %v1032 = vpop.f32.mrf.mxu0
    %v1033 = vadd.f32 0.0, %v1032
    %v1034 = vpop.f32.mrf.mxu0
    %1035 = vdwg.mxu0
    %1036 = vmatprep.subr.mxu0 0.0
    %1037 = vmatpush1.xpose.msra.mxu0 0.0
    %1038 = vmatprep.subr.mxu0 0.0
    %1039 = vmatpush1.xpose.msra.mxu0 0.0
    %1040 = vmatprep.subr.mxu0 0.0
    %1041 = vmatpush1.xpose.msra.mxu0 0.0
    %1042 = vmatprep.subr.mxu0 0.0
    %1043 = vmatpush1.xpose.msra.mxu0 0.0
    %1044 = vmatprep.subr.mxu0 0.0
    %1045 = vmatpush1.xpose.msra.mxu0 0.0
    %1046 = vmatprep.subr.mxu0 0.0
    %1047 = vmatpush1.xpose.msra.mxu0 0.0
    %1048 = vmatprep.subr.mxu0 0.0
    %1049 = vmatpush1.xpose.msra.mxu0 0.0
    %1050 = vmatprep.subr.mxu0 0.0
    %1051 = vmatpush1.xpose.msra.mxu0 0.0
    %1052 = vmatprep.subr.mxu0 0.0
    %1053 = vmatpush1.xpose.msra.mxu0 0.0
    %1054 = vmatprep.subr.mxu0 0.0
    %1055 = vmatpush1.xpose.msra.mxu0 0.0
    %1056 = vmatprep.subr.mxu0 0.0
    %1057 = vmatpush1.xpose.msra.mxu0 0.0
    %1058 = vmatprep.subr.mxu0 0.0
    %1059 = vmatpush1.xpose.msra.mxu0 0.0
    %1060 = vmatprep.subr.mxu0 0.0
    %1061 = vmatpush1.xpose.msra.mxu0 0.0
    %1062 = vmatprep.subr.mxu0 0.0
    %1063 = vmatpush1.xpose.msra.mxu0 0.0
    %1064 = vmatprep.subr.mxu0 0.0
    %1065 = vmatpush1.xpose.msra.mxu0 0.0
    %1066 = vmatprep.subr.mxu0 0.0
    %1067 = vmatpush1.xpose.msra.mxu0 %v821
    %1068 = vmatprep.subr.mxu0 0.0
    %1069 = vmatpush2.xpose.msra.mxu0 0.0
    %1070 = vmatprep.subr.mxu0 0.0
    %1071 = vmatpush2.xpose.msra.mxu0 0.0
    %1072 = vmatprep.subr.mxu0 0.0
    %1073 = vmatpush2.xpose.msra.mxu0 0.0
    %1074 = vmatprep.subr.mxu0 0.0
    %1075 = vmatpush2.xpose.msra.mxu0 0.0
    %1076 = vmatprep.subr.mxu0 0.0
    %1077 = vmatpush2.xpose.msra.mxu0 0.0
    %1078 = vmatprep.subr.mxu0 0.0
    %1079 = vmatpush2.xpose.msra.mxu0 0.0
    %1080 = vmatprep.subr.mxu0 0.0
    %1081 = vmatpush2.xpose.msra.mxu0 0.0
    %1082 = vmatprep.subr.mxu0 0.0
    %1083 = vmatpush2.xpose.msra.mxu0 0.0
    %1084 = vmatprep.subr.mxu0 0.0
    %1085 = vmatpush2.xpose.msra.mxu0 0.0
    %1086 = vmatprep.subr.mxu0 0.0
    %1087 = vmatpush2.xpose.msra.mxu0 0.0
    %1088 = vmatprep.subr.mxu0 0.0
    %1089 = vmatpush2.xpose.msra.mxu0 0.0
    %1090 = vmatprep.subr.mxu0 0.0
    %1091 = vmatpush2.xpose.msra.mxu0 0.0
    %1092 = vmatprep.subr.mxu0 0.0
    %1093 = vmatpush2.xpose.msra.mxu0 0.0
    %1094 = vmatprep.subr.mxu0 0.0
    %1095 = vmatpush2.xpose.msra.mxu0 0.0
    %1096 = vmatprep.subr.mxu0 0.0
    %1097 = vmatpush2.xpose.msra.mxu0 0.0
    %1098 = vmatprep.subr.mxu0 0.0
    %1099 = vmatpush2.xpose.msra.mxu0 0.0
    %1100 = vmatprep.mubr.f32.mxu0 0.0
    %1101 = vmatmul.mubr.f32.gmra.mxu0 %v808
    %v1102 = vpop.f32.mrf.mxu0
    %v1103 = vadd.f32 0.0, %v1102
    %v1104 = vpop.f32.mrf.mxu0
    %1105 = vdwg.mxu0
    %1106 = vmatprep.subr.mxu0 0.0
    %1107 = vmatpush1.xpose.msra.mxu0 0.0
    %1108 = vmatprep.subr.mxu0 0.0
    %1109 = vmatpush1.xpose.msra.mxu0 0.0
    %1110 = vmatprep.subr.mxu0 0.0
    %1111 = vmatpush1.xpose.msra.mxu0 0.0
    %1112 = vmatprep.subr.mxu0 0.0
    %1113 = vmatpush1.xpose.msra.mxu0 0.0
    %1114 = vmatprep.subr.mxu0 0.0
    %1115 = vmatpush1.xpose.msra.mxu0 0.0
    %1116 = vmatprep.subr.mxu0 0.0
    %1117 = vmatpush1.xpose.msra.mxu0 0.0
    %1118 = vmatprep.subr.mxu0 0.0
    %1119 = vmatpush1.xpose.msra.mxu0 0.0
    %1120 = vmatprep.subr.mxu0 0.0
    %1121 = vmatpush1.xpose.msra.mxu0 0.0
    %1122 = vmatprep.subr.mxu0 0.0
    %1123 = vmatpush1.xpose.msra.mxu0 0.0
    %1124 = vmatprep.subr.mxu0 0.0
    %1125 = vmatpush1.xpose.msra.mxu0 0.0
    %1126 = vmatprep.subr.mxu0 0.0
    %1127 = vmatpush1.xpose.msra.mxu0 0.0
    %1128 = vmatprep.subr.mxu0 0.0
    %1129 = vmatpush1.xpose.msra.mxu0 0.0
    %1130 = vmatprep.subr.mxu0 0.0
    %1131 = vmatpush1.xpose.msra.mxu0 0.0
    %1132 = vmatprep.subr.mxu0 0.0
    %1133 = vmatpush1.xpose.msra.mxu0 0.0
    %1134 = vmatprep.subr.mxu0 0.0
    %1135 = vmatpush1.xpose.msra.mxu0 0.0
    %1136 = vmatprep.subr.mxu0 0.0
    %1137 = vmatpush1.xpose.msra.mxu0 %v822
    %1138 = vmatprep.subr.mxu0 0.0
    %1139 = vmatpush2.xpose.msra.mxu0 0.0
    %1140 = vmatprep.subr.mxu0 0.0
    %1141 = vmatpush2.xpose.msra.mxu0 0.0
    %1142 = vmatprep.subr.mxu0 0.0
    %1143 = vmatpush2.xpose.msra.mxu0 0.0
    %1144 = vmatprep.subr.mxu0 0.0
    %1145 = vmatpush2.xpose.msra.mxu0 0.0
    %1146 = vmatprep.subr.mxu0 0.0
    %1147 = vmatpush2.xpose.msra.mxu0 0.0
    %1148 = vmatprep.subr.mxu0 0.0
    %1149 = vmatpush2.xpose.msra.mxu0 0.0
    %1150 = vmatprep.subr.mxu0 0.0
    %1151 = vmatpush2.xpose.msra.mxu0 0.0
    %1152 = vmatprep.subr.mxu0 0.0
    %1153 = vmatpush2.xpose.msra.mxu0 0.0
    %1154 = vmatprep.subr.mxu0 0.0
    %1155 = vmatpush2.xpose.msra.mxu0 0.0
    %1156 = vmatprep.subr.mxu0 0.0
    %1157 = vmatpush2.xpose.msra.mxu0 0.0
    %1158 = vmatprep.subr.mxu0 0.0
    %1159 = vmatpush2.xpose.msra.mxu0 0.0
    %1160 = vmatprep.subr.mxu0 0.0
    %1161 = vmatpush2.xpose.msra.mxu0 0.0
    %1162 = vmatprep.subr.mxu0 0.0
    %1163 = vmatpush2.xpose.msra.mxu0 0.0
    %1164 = vmatprep.subr.mxu0 0.0
    %1165 = vmatpush2.xpose.msra.mxu0 0.0
    %1166 = vmatprep.subr.mxu0 0.0
    %1167 = vmatpush2.xpose.msra.mxu0 0.0
    %1168 = vmatprep.subr.mxu0 0.0
    %1169 = vmatpush2.xpose.msra.mxu0 0.0
    %1170 = vmatprep.mubr.f32.mxu0 0.0
    %1171 = vmatmul.mubr.f32.gmra.mxu0 %v791
    %v1172 = vpop.f32.mrf.mxu0
    %v1173 = vadd.f32 0.0, %v1172
    %v1174 = vpop.f32.mrf.mxu0
    %1175 = vdwg.mxu0
    %1176 = vmatprep.subr.mxu0 0.0
    %1177 = vmatpush1.xpose.msra.mxu0 0.0
    %1178 = vmatprep.subr.mxu0 0.0
    %1179 = vmatpush1.xpose.msra.mxu0 0.0
    %1180 = vmatprep.subr.mxu0 0.0
    %1181 = vmatpush1.xpose.msra.mxu0 0.0
    %1182 = vmatprep.subr.mxu0 0.0
    %1183 = vmatpush1.xpose.msra.mxu0 0.0
    %1184 = vmatprep.subr.mxu0 0.0
    %1185 = vmatpush1.xpose.msra.mxu0 0.0
    %1186 = vmatprep.subr.mxu0 0.0
    %1187 = vmatpush1.xpose.msra.mxu0 0.0
    %1188 = vmatprep.subr.mxu0 0.0
    %1189 = vmatpush1.xpose.msra.mxu0 0.0
    %1190 = vmatprep.subr.mxu0 0.0
    %1191 = vmatpush1.xpose.msra.mxu0 0.0
    %1192 = vmatprep.subr.mxu0 0.0
    %1193 = vmatpush1.xpose.msra.mxu0 0.0
    %1194 = vmatprep.subr.mxu0 0.0
    %1195 = vmatpush1.xpose.msra.mxu0 0.0
    %1196 = vmatprep.subr.mxu0 0.0
    %1197 = vmatpush1.xpose.msra.mxu0 0.0
    %1198 = vmatprep.subr.mxu0 0.0
    %1199 = vmatpush1.xpose.msra.mxu0 0.0
    %1200 = vmatprep.subr.mxu0 0.0
    %1201 = vmatpush1.xpose.msra.mxu0 0.0
    %1202 = vmatprep.subr.mxu0 0.0
    %1203 = vmatpush1.xpose.msra.mxu0 0.0
    %1204 = vmatprep.subr.mxu0 0.0
    %1205 = vmatpush1.xpose.msra.mxu0 0.0
    %1206 = vmatprep.subr.mxu0 0.0
    %1207 = vmatpush1.xpose.msra.mxu0 %v823
    %1208 = vmatprep.subr.mxu0 0.0
    %1209 = vmatpush2.xpose.msra.mxu0 0.0
    %1210 = vmatprep.subr.mxu0 0.0
    %1211 = vmatpush2.xpose.msra.mxu0 0.0
    %1212 = vmatprep.subr.mxu0 0.0
    %1213 = vmatpush2.xpose.msra.mxu0 0.0
    %1214 = vmatprep.subr.mxu0 0.0
    %1215 = vmatpush2.xpose.msra.mxu0 0.0
    %1216 = vmatprep.subr.mxu0 0.0
    %1217 = vmatpush2.xpose.msra.mxu0 0.0
    %1218 = vmatprep.subr.mxu0 0.0
    %1219 = vmatpush2.xpose.msra.mxu0 0.0
    %1220 = vmatprep.subr.mxu0 0.0
    %1221 = vmatpush2.xpose.msra.mxu0 0.0
    %1222 = vmatprep.subr.mxu0 0.0
    %1223 = vmatpush2.xpose.msra.mxu0 0.0
    %1224 = vmatprep.subr.mxu0 0.0
    %1225 = vmatpush2.xpose.msra.mxu0 0.0
    %1226 = vmatprep.subr.mxu0 0.0
    %1227 = vmatpush2.xpose.msra.mxu0 0.0
    %1228 = vmatprep.subr.mxu0 0.0
    %1229 = vmatpush2.xpose.msra.mxu0 0.0
    %1230 = vmatprep.subr.mxu0 0.0
    %1231 = vmatpush2.xpose.msra.mxu0 0.0
    %1232 = vmatprep.subr.mxu0 0.0
    %1233 = vmatpush2.xpose.msra.mxu0 0.0
    %1234 = vmatprep.subr.mxu0 0.0
    %1235 = vmatpush2.xpose.msra.mxu0 0.0
    %1236 = vmatprep.subr.mxu0 0.0
    %1237 = vmatpush2.xpose.msra.mxu0 0.0
    %1238 = vmatprep.subr.mxu0 0.0
    %1239 = vmatpush2.xpose.msra.mxu0 0.0
    %1240 = vmatprep.mubr.f32.mxu0 0.0
    %1241 = vmatmul.mubr.f32.gmra.mxu0 %v805
    %v1242 = vpop.f32.mrf.mxu0
    %v1243 = vadd.f32 0.0, %v1242
    %v1244 = vpop.f32.mrf.mxu0
    %1245 = vdwg.mxu0
    %1246 = vmatprep.subr.mxu0 0.0
    %1247 = vmatpush1.xpose.msra.mxu0 0.0
    %1248 = vmatprep.subr.mxu0 0.0
    %1249 = vmatpush1.xpose.msra.mxu0 0.0
    %1250 = vmatprep.subr.mxu0 0.0
    %1251 = vmatpush1.xpose.msra.mxu0 0.0
    %1252 = vmatprep.subr.mxu0 0.0
    %1253 = vmatpush1.xpose.msra.mxu0 0.0
    %1254 = vmatprep.subr.mxu0 0.0
    %1255 = vmatpush1.xpose.msra.mxu0 0.0
    %1256 = vmatprep.subr.mxu0 0.0
    %1257 = vmatpush1.xpose.msra.mxu0 0.0
    %1258 = vmatprep.subr.mxu0 0.0
    %1259 = vmatpush1.xpose.msra.mxu0 0.0
    %1260 = vmatprep.subr.mxu0 0.0
    %1261 = vmatpush1.xpose.msra.mxu0 0.0
    %1262 = vmatprep.subr.mxu0 0.0
    %1263 = vmatpush1.xpose.msra.mxu0 0.0
    %1264 = vmatprep.subr.mxu0 0.0
    %1265 = vmatpush1.xpose.msra.mxu0 0.0
    %1266 = vmatprep.subr.mxu0 0.0
    %1267 = vmatpush1.xpose.msra.mxu0 0.0
    %1268 = vmatprep.subr.mxu0 0.0
    %1269 = vmatpush1.xpose.msra.mxu0 0.0
    %1270 = vmatprep.subr.mxu0 0.0
    %1271 = vmatpush1.xpose.msra.mxu0 0.0
    %1272 = vmatprep.subr.mxu0 0.0
    %1273 = vmatpush1.xpose.msra.mxu0 0.0
    %1274 = vmatprep.subr.mxu0 0.0
    %1275 = vmatpush1.xpose.msra.mxu0 0.0
    %1276 = vmatprep.subr.mxu0 0.0
    %1277 = vmatpush1.xpose.msra.mxu0 %v824
    %1278 = vmatprep.subr.mxu0 0.0
    %1279 = vmatpush2.xpose.msra.mxu0 0.0
    %1280 = vmatprep.subr.mxu0 0.0
    %1281 = vmatpush2.xpose.msra.mxu0 0.0
    %1282 = vmatprep.subr.mxu0 0.0
    %1283 = vmatpush2.xpose.msra.mxu0 0.0
    %1284 = vmatprep.subr.mxu0 0.0
    %1285 = vmatpush2.xpose.msra.mxu0 0.0
    %1286 = vmatprep.subr.mxu0 0.0
    %1287 = vmatpush2.xpose.msra.mxu0 0.0
    %1288 = vmatprep.subr.mxu0 0.0
    %1289 = vmatpush2.xpose.msra.mxu0 0.0
    %1290 = vmatprep.subr.mxu0 0.0
    %1291 = vmatpush2.xpose.msra.mxu0 0.0
    %1292 = vmatprep.subr.mxu0 0.0
    %1293 = vmatpush2.xpose.msra.mxu0 0.0
    %1294 = vmatprep.subr.mxu0 0.0
    %1295 = vmatpush2.xpose.msra.mxu0 0.0
    %1296 = vmatprep.subr.mxu0 0.0
    %1297 = vmatpush2.xpose.msra.mxu0 0.0
    %1298 = vmatprep.subr.mxu0 0.0
    %1299 = vmatpush2.xpose.msra.mxu0 0.0
    %1300 = vmatprep.subr.mxu0 0.0
    %1301 = vmatpush2.xpose.msra.mxu0 0.0
    %1302 = vmatprep.subr.mxu0 0.0
    %1303 = vmatpush2.xpose.msra.mxu0 0.0
    %1304 = vmatprep.subr.mxu0 0.0
    %1305 = vmatpush2.xpose.msra.mxu0 0.0
    %1306 = vmatprep.subr.mxu0 0.0
    %1307 = vmatpush2.xpose.msra.mxu0 0.0
    %1308 = vmatprep.subr.mxu0 0.0
    %1309 = vmatpush2.xpose.msra.mxu0 0.0
    %1310 = vmatprep.mubr.f32.mxu0 0.0
    %1311 = vmatmul.mubr.f32.gmra.mxu0 %v807
    %v1312 = vpop.f32.mrf.mxu0
    %v1313 = vadd.f32 0.0, %v1312
    %v1314 = vpop.f32.mrf.mxu0
    %1315 = vdwg.mxu0
    %1316 = vmatprep.subr.mxu0 0.0
    %1317 = vmatpush1.xpose.msra.mxu0 0.0
    %1318 = vmatprep.subr.mxu0 0.0
    %1319 = vmatpush1.xpose.msra.mxu0 0.0
    %1320 = vmatprep.subr.mxu0 0.0
    %1321 = vmatpush1.xpose.msra.mxu0 0.0
    %1322 = vmatprep.subr.mxu0 0.0
    %1323 = vmatpush1.xpose.msra.mxu0 0.0
    %1324 = vmatprep.subr.mxu0 0.0
    %1325 = vmatpush1.xpose.msra.mxu0 0.0
    %1326 = vmatprep.subr.mxu0 0.0
    %1327 = vmatpush1.xpose.msra.mxu0 0.0
    %1328 = vmatprep.subr.mxu0 0.0
    %1329 = vmatpush1.xpose.msra.mxu0 0.0
    %1330 = vmatprep.subr.mxu0 0.0
    %1331 = vmatpush1.xpose.msra.mxu0 0.0
    %1332 = vmatprep.subr.mxu0 0.0
    %1333 = vmatpush1.xpose.msra.mxu0 0.0
    %1334 = vmatprep.subr.mxu0 0.0
    %1335 = vmatpush1.xpose.msra.mxu0 0.0
    %1336 = vmatprep.subr.mxu0 0.0
    %1337 = vmatpush1.xpose.msra.mxu0 0.0
    %1338 = vmatprep.subr.mxu0 0.0
    %1339 = vmatpush1.xpose.msra.mxu0 0.0
    %1340 = vmatprep.subr.mxu0 0.0
    %1341 = vmatpush1.xpose.msra.mxu0 0.0
    %1342 = vmatprep.subr.mxu0 0.0
    %1343 = vmatpush1.xpose.msra.mxu0 0.0
    %1344 = vmatprep.subr.mxu0 0.0
    %1345 = vmatpush1.xpose.msra.mxu0 0.0
    %1346 = vmatprep.subr.mxu0 0.0
    %1347 = vmatpush1.xpose.msra.mxu0 %v825
    %1348 = vmatprep.subr.mxu0 0.0
    %1349 = vmatpush2.xpose.msra.mxu0 0.0
    %1350 = vmatprep.subr.mxu0 0.0
    %1351 = vmatpush2.xpose.msra.mxu0 0.0
    %1352 = vmatprep.subr.mxu0 0.0
    %1353 = vmatpush2.xpose.msra.mxu0 0.0
    %1354 = vmatprep.subr.mxu0 0.0
    %1355 = vmatpush2.xpose.msra.mxu0 0.0
    %1356 = vmatprep.subr.mxu0 0.0
    %1357 = vmatpush2.xpose.msra.mxu0 0.0
    %1358 = vmatprep.subr.mxu0 0.0
    %1359 = vmatpush2.xpose.msra.mxu0 0.0
    %1360 = vmatprep.subr.mxu0 0.0
    %1361 = vmatpush2.xpose.msra.mxu0 0.0
    %1362 = vmatprep.subr.mxu0 0.0
    %1363 = vmatpush2.xpose.msra.mxu0 0.0
    %1364 = vmatprep.subr.mxu0 0.0
    %1365 = vmatpush2.xpose.msra.mxu0 0.0
    %1366 = vmatprep.subr.mxu0 0.0
    %1367 = vmatpush2.xpose.msra.mxu0 0.0
    %1368 = vmatprep.subr.mxu0 0.0
    %1369 = vmatpush2.xpose.msra.mxu0 0.0
    %1370 = vmatprep.subr.mxu0 0.0
    %1371 = vmatpush2.xpose.msra.mxu0 0.0
    %1372 = vmatprep.subr.mxu0 0.0
    %1373 = vmatpush2.xpose.msra.mxu0 0.0
    %1374 = vmatprep.subr.mxu0 0.0
    %1375 = vmatpush2.xpose.msra.mxu0 0.0
    %1376 = vmatprep.subr.mxu0 0.0
    %1377 = vmatpush2.xpose.msra.mxu0 0.0
    %1378 = vmatprep.subr.mxu0 0.0
    %1379 = vmatpush2.xpose.msra.mxu0 0.0
    %1380 = vmatprep.mubr.f32.mxu0 0.0
    %1381 = vmatmul.mubr.f32.gmra.mxu0 %v809
    %v1382 = vpop.f32.mrf.mxu0
    %v1383 = vadd.f32 0.0, %v1382
    %v1384 = vpop.f32.mrf.mxu0
    %1385 = vdwg.mxu0
    %v1386 = vld [vmem:[#allocation16] sm:$0xff]
    %v1388 = vlaneseq
    %v1389 = vshrl.u32 %v1388, 7
    %v1390 = vsub.s32 0, %v1389
    %v1391 = vrot.slane %v230, %v1390
    %v1401 = vrot.slane %v963, 7
    %vm1402 = vcmask 1041409
    %v1403 = vsel %vm1402, %v1401, %v893
    %v1404 = vrot.slane %v1033, 6
    %vm1405 = vcmask 1042434
    %v1406 = vsel %vm1405, %v1404, %v1403
    %v1407 = vrot.slane %v1103, 5
    %vm1408 = vcmask 1043459
    %v1409 = vsel %vm1408, %v1407, %v1406
    %v1410 = vrot.slane %v1173, 4
    %vm1411 = vcmask 1044484
    %v1412 = vsel %vm1411, %v1410, %v1409
    %v1413 = vrot.slane %v1243, 3
    %vm1414 = vcmask 1045509
    %v1415 = vsel %vm1414, %v1413, %v1412
    %v1416 = vrot.slane %v1313, 2
    %vm1417 = vcmask 1046534
    %v1418 = vsel %vm1417, %v1416, %v1415
    %v1419 = vrot.slane %v1383, 1
    %vm1420 = vcmask 1047559
    %v1421 = vsel %vm1420, %v1419, %v1418
    %vm1422 = vcmask 64512
    %v1423 = vsel %vm1422, %v1421, 0
    %1425 = vmatprep.subr.mxu0 0.0
    %1426 = vmatpush1.msra.mxu0 0.0
    %1427 = vmatprep.subr.mxu0 0.0
    %1428 = vmatpush1.msra.mxu0 0.0
    %1429 = vmatprep.subr.mxu0 0.0
    %1430 = vmatpush1.msra.mxu0 0.0
    %1431 = vmatprep.subr.mxu0 0.0
    %1432 = vmatpush1.msra.mxu0 0.0
    %1433 = vmatprep.subr.mxu0 0.0
    %1434 = vmatpush1.msra.mxu0 0.0
    %1435 = vmatprep.subr.mxu0 0.0
    %1436 = vmatpush1.msra.mxu0 0.0
    %1437 = vmatprep.subr.mxu0 0.0
    %1438 = vmatpush1.msra.mxu0 0.0
    %1439 = vmatprep.subr.mxu0 0.0
    %1440 = vmatpush1.msra.mxu0 0.0
    %1441 = vmatprep.subr.mxu0 0.0
    %1442 = vmatpush1.msra.mxu0 0.0
    %1443 = vmatprep.subr.mxu0 0.0
    %1444 = vmatpush1.msra.mxu0 0.0
    %1445 = vmatprep.subr.mxu0 0.0
    %1446 = vmatpush1.msra.mxu0 0.0
    %1447 = vmatprep.subr.mxu0 0.0
    %1448 = vmatpush1.msra.mxu0 0.0
    %1449 = vmatprep.subr.mxu0 0.0
    %1450 = vmatpush1.msra.mxu0 0.0
    %1451 = vmatprep.subr.mxu0 0.0
    %1452 = vmatpush1.msra.mxu0 0.0
    %1453 = vmatprep.subr.mxu0 0.0
    %1454 = vmatpush1.msra.mxu0 0.0
    %1455 = vmatprep.subr.mxu0 0.0
    %1456 = vmatpush1.msra.mxu0 %v1386
    %1457 = vmatprep.subr.mxu0 0.0
    %1458 = vmatpush2.msra.mxu0 0.0
    %1459 = vmatprep.subr.mxu0 0.0
    %1460 = vmatpush2.msra.mxu0 0.0
    %1461 = vmatprep.subr.mxu0 0.0
    %1462 = vmatpush2.msra.mxu0 0.0
    %1463 = vmatprep.subr.mxu0 0.0
    %1464 = vmatpush2.msra.mxu0 0.0
    %1465 = vmatprep.subr.mxu0 0.0
    %1466 = vmatpush2.msra.mxu0 0.0
    %1467 = vmatprep.subr.mxu0 0.0
    %1468 = vmatpush2.msra.mxu0 0.0
    %1469 = vmatprep.subr.mxu0 0.0
    %1470 = vmatpush2.msra.mxu0 0.0
    %1471 = vmatprep.subr.mxu0 0.0
    %1472 = vmatpush2.msra.mxu0 0.0
    %1473 = vmatprep.subr.mxu0 0.0
    %1474 = vmatpush2.msra.mxu0 0.0
    %1475 = vmatprep.subr.mxu0 0.0
    %1476 = vmatpush2.msra.mxu0 0.0
    %1477 = vmatprep.subr.mxu0 0.0
    %1478 = vmatpush2.msra.mxu0 0.0
    %1479 = vmatprep.subr.mxu0 0.0
    %1480 = vmatpush2.msra.mxu0 0.0
    %1481 = vmatprep.subr.mxu0 0.0
    %1482 = vmatpush2.msra.mxu0 0.0
    %1483 = vmatprep.subr.mxu0 0.0
    %1484 = vmatpush2.msra.mxu0 0.0
    %1485 = vmatprep.subr.mxu0 0.0
    %1486 = vmatpush2.msra.mxu0 0.0
    %1487 = vmatprep.subr.mxu0 0.0
    %1488 = vmatpush2.msra.mxu0 0.0
    %1489 = vmatprep.mubr.f32.mxu0 0.0
    %1490 = vmatmul.mubr.f32.gmra.mxu0 %v1423
    %v1491 = vpop.f32.mrf.mxu0
    %v1492 = vadd.f32 %v1391, %v1491
    %v1493 = vpop.f32.mrf.mxu0
    %1494 = vdwg.mxu0
    %v1495 = vlaneseq
    %v1496 = vand.u32 %v1495, 127
    %vm1497 = vcmp.lt.s32.totalorder %v1496, 8
    %v1498 = vsel %vm1497, %v1492, -1e+30
    %1499 = vmax.xlane.f32.xlu0 %v1498
    %v1500 = vpop.xlane.xlu0 %1499
    %v1501 = vsub.f32 %v1498, %v1500
    %v1502 = vmul.f32 %v1501, 1.442695
    %v1503 = vpow.pop %v1502
    %1504 = vadd.xlane.f32.xlu0 %v1503
    %v1505 = vpop.xlane.xlu0 %1504
    %v1506 = vlog2.pop %v1505
    %v1507 = vmul.f32 %v1506, 0.6931472
    %v1508 = vsub.f32 %v1501, %v1507
    %v1509 = vsel %vm1497, %v1508, 0.0
    %v1511 = vcombine.high %v1509, %v1509
    %v1513 = vunpack.c.l.s4 1966171168
    %v1514 = vunpack.c.0.s8 %v1513
    %v1515 = vlaneseq
    %v1516 = vshrl.u32 %v1515, 7
    %v1517 = vsub.s32 %v1514, %v1516
    %v1518 = vrot.slane %v1509, %v1517
    %v1520 = vunpack.c.l.s4 1966171168
    %v1521 = vunpack.c.0.s8 %v1520
    %v1522 = vlaneseq
    %v1523 = vshrl.u32 %v1522, 7
    %v1524 = vsub.s32 %v1521, %v1523
    %v1525 = vrot.slane %v1511, %v1524
    %v1526 = vcombine.high %v1518, %v1518
    %v1527 = vcombine.high %v1525, %v1525
    %v1529 = vunpack.c.l.s4 1966171168
    %v1530 = vunpack.c.0.s8 %v1529
    %v1531 = vlaneseq
    %v1532 = vshrl.u32 %v1531, 7
    %v1533 = vsub.s32 %v1530, %v1532
    %v1534 = vrot.slane %v1518, %v1533
    %v1536 = vunpack.c.l.s4 1966171168
    %v1537 = vunpack.c.0.s8 %v1536
    %v1538 = vlaneseq
    %v1539 = vshrl.u32 %v1538, 7
    %v1540 = vsub.s32 %v1537, %v1539
    %v1541 = vrot.slane %v1525, %v1540
    %v1543 = vunpack.c.l.s4 1966171168
    %v1544 = vunpack.c.0.s8 %v1543
    %v1545 = vlaneseq
    %v1546 = vshrl.u32 %v1545, 7
    %v1547 = vsub.s32 %v1544, %v1546
    %v1548 = vrot.slane %v1526, %v1547
    %v1550 = vunpack.c.l.s4 1966171168
    %v1551 = vunpack.c.0.s8 %v1550
    %v1552 = vlaneseq
    %v1553 = vshrl.u32 %v1552, 7
    %v1554 = vsub.s32 %v1551, %v1553
    %v1555 = vrot.slane %v1527, %v1554
    %v1556 = vcombine.high %v1534, %v1534
    %v1557 = vcombine.high %v1541, %v1541
    %v1558 = vcombine.high %v1548, %v1548
    %v1559 = vcombine.high %v1555, %v1555
    %v1560 = vld [vmem:[#allocation10] sm:$0xff]
    %v1561 = vld [vmem:[#allocation10 + $0x8] sm:$0xff]
    %v1562 = vld [vmem:[#allocation10 + $0x10] sm:$0xff]
    %v1563 = vld [vmem:[#allocation10 + $0x18] sm:$0xff]
    %v1564 = vld [vmem:[#allocation10 + $0x20] sm:$0xff]
    %v1565 = vld [vmem:[#allocation10 + $0x28] sm:$0xff]
    %v1566 = vld [vmem:[#allocation10 + $0x30] sm:$0xff]
    %v1567 = vld [vmem:[#allocation10 + $0x38] sm:$0xff]
    %v1568 = vsel %vm1422, %v1534, 0
    %1570 = vmatprep.subr.mxu0 0.0
    %1571 = vmatpush1.msra.mxu0 0.0
    %1572 = vmatprep.subr.mxu0 0.0
    %1573 = vmatpush1.msra.mxu0 0.0
    %1574 = vmatprep.subr.mxu0 0.0
    %1575 = vmatpush1.msra.mxu0 0.0
    %1576 = vmatprep.subr.mxu0 0.0
    %1577 = vmatpush1.msra.mxu0 0.0
    %1578 = vmatprep.subr.mxu0 0.0
    %1579 = vmatpush1.msra.mxu0 0.0
    %1580 = vmatprep.subr.mxu0 0.0
    %1581 = vmatpush1.msra.mxu0 0.0
    %1582 = vmatprep.subr.mxu0 0.0
    %1583 = vmatpush1.msra.mxu0 0.0
    %1584 = vmatprep.subr.mxu0 0.0
    %1585 = vmatpush1.msra.mxu0 0.0
    %1586 = vmatprep.subr.mxu0 0.0
    %1587 = vmatpush1.msra.mxu0 0.0
    %1588 = vmatprep.subr.mxu0 0.0
    %1589 = vmatpush1.msra.mxu0 0.0
    %1590 = vmatprep.subr.mxu0 0.0
    %1591 = vmatpush1.msra.mxu0 0.0
    %1592 = vmatprep.subr.mxu0 0.0
    %1593 = vmatpush1.msra.mxu0 0.0
    %1594 = vmatprep.subr.mxu0 0.0
    %1595 = vmatpush1.msra.mxu0 0.0
    %1596 = vmatprep.subr.mxu0 0.0
    %1597 = vmatpush1.msra.mxu0 0.0
    %1598 = vmatprep.subr.mxu0 0.0
    %1599 = vmatpush1.msra.mxu0 0.0
    %1600 = vmatprep.subr.mxu0 0.0
    %1601 = vmatpush1.msra.mxu0 %v1560
    %1602 = vmatprep.subr.mxu0 0.0
    %1603 = vmatpush2.msra.mxu0 0.0
    %1604 = vmatprep.subr.mxu0 0.0
    %1605 = vmatpush2.msra.mxu0 0.0
    %1606 = vmatprep.subr.mxu0 0.0
    %1607 = vmatpush2.msra.mxu0 0.0
    %1608 = vmatprep.subr.mxu0 0.0
    %1609 = vmatpush2.msra.mxu0 0.0
    %1610 = vmatprep.subr.mxu0 0.0
    %1611 = vmatpush2.msra.mxu0 0.0
    %1612 = vmatprep.subr.mxu0 0.0
    %1613 = vmatpush2.msra.mxu0 0.0
    %1614 = vmatprep.subr.mxu0 0.0
    %1615 = vmatpush2.msra.mxu0 0.0
    %1616 = vmatprep.subr.mxu0 0.0
    %1617 = vmatpush2.msra.mxu0 0.0
    %1618 = vmatprep.subr.mxu0 0.0
    %1619 = vmatpush2.msra.mxu0 0.0
    %1620 = vmatprep.subr.mxu0 0.0
    %1621 = vmatpush2.msra.mxu0 0.0
    %1622 = vmatprep.subr.mxu0 0.0
    %1623 = vmatpush2.msra.mxu0 0.0
    %1624 = vmatprep.subr.mxu0 0.0
    %1625 = vmatpush2.msra.mxu0 0.0
    %1626 = vmatprep.subr.mxu0 0.0
    %1627 = vmatpush2.msra.mxu0 0.0
    %1628 = vmatprep.subr.mxu0 0.0
    %1629 = vmatpush2.msra.mxu0 0.0
    %1630 = vmatprep.subr.mxu0 0.0
    %1631 = vmatpush2.msra.mxu0 0.0
    %1632 = vmatprep.subr.mxu0 0.0
    %1633 = vmatpush2.msra.mxu0 0.0
    %1634 = vmatprep.mubr.f32.mxu0 0.0
    %1635 = vmatmul.mubr.f32.gmra.mxu0 %v1568
    %v1636 = vpop.f32.mrf.mxu0
    %v1637 = vadd.f32 0.0, %v1636
    %v1638 = vpop.f32.mrf.mxu0
    %1639 = vdwg.mxu0
    %v1640 = vsel %vm1422, %v1548, 0
    %1642 = vmatprep.subr.mxu0 0.0
    %1643 = vmatpush1.msra.mxu0 0.0
    %1644 = vmatprep.subr.mxu0 0.0
    %1645 = vmatpush1.msra.mxu0 0.0
    %1646 = vmatprep.subr.mxu0 0.0
    %1647 = vmatpush1.msra.mxu0 0.0
    %1648 = vmatprep.subr.mxu0 0.0
    %1649 = vmatpush1.msra.mxu0 0.0
    %1650 = vmatprep.subr.mxu0 0.0
    %1651 = vmatpush1.msra.mxu0 0.0
    %1652 = vmatprep.subr.mxu0 0.0
    %1653 = vmatpush1.msra.mxu0 0.0
    %1654 = vmatprep.subr.mxu0 0.0
    %1655 = vmatpush1.msra.mxu0 0.0
    %1656 = vmatprep.subr.mxu0 0.0
    %1657 = vmatpush1.msra.mxu0 0.0
    %1658 = vmatprep.subr.mxu0 0.0
    %1659 = vmatpush1.msra.mxu0 0.0
    %1660 = vmatprep.subr.mxu0 0.0
    %1661 = vmatpush1.msra.mxu0 0.0
    %1662 = vmatprep.subr.mxu0 0.0
    %1663 = vmatpush1.msra.mxu0 0.0
    %1664 = vmatprep.subr.mxu0 0.0
    %1665 = vmatpush1.msra.mxu0 0.0
    %1666 = vmatprep.subr.mxu0 0.0
    %1667 = vmatpush1.msra.mxu0 0.0
    %1668 = vmatprep.subr.mxu0 0.0
    %1669 = vmatpush1.msra.mxu0 0.0
    %1670 = vmatprep.subr.mxu0 0.0
    %1671 = vmatpush1.msra.mxu0 0.0
    %1672 = vmatprep.subr.mxu0 0.0
    %1673 = vmatpush1.msra.mxu0 %v1561
    %1674 = vmatprep.subr.mxu0 0.0
    %1675 = vmatpush2.msra.mxu0 0.0
    %1676 = vmatprep.subr.mxu0 0.0
    %1677 = vmatpush2.msra.mxu0 0.0
    %1678 = vmatprep.subr.mxu0 0.0
    %1679 = vmatpush2.msra.mxu0 0.0
    %1680 = vmatprep.subr.mxu0 0.0
    %1681 = vmatpush2.msra.mxu0 0.0
    %1682 = vmatprep.subr.mxu0 0.0
    %1683 = vmatpush2.msra.mxu0 0.0
    %1684 = vmatprep.subr.mxu0 0.0
    %1685 = vmatpush2.msra.mxu0 0.0
    %1686 = vmatprep.subr.mxu0 0.0
    %1687 = vmatpush2.msra.mxu0 0.0
    %1688 = vmatprep.subr.mxu0 0.0
    %1689 = vmatpush2.msra.mxu0 0.0
    %1690 = vmatprep.subr.mxu0 0.0
    %1691 = vmatpush2.msra.mxu0 0.0
    %1692 = vmatprep.subr.mxu0 0.0
    %1693 = vmatpush2.msra.mxu0 0.0
    %1694 = vmatprep.subr.mxu0 0.0
    %1695 = vmatpush2.msra.mxu0 0.0
    %1696 = vmatprep.subr.mxu0 0.0
    %1697 = vmatpush2.msra.mxu0 0.0
    %1698 = vmatprep.subr.mxu0 0.0
    %1699 = vmatpush2.msra.mxu0 0.0
    %1700 = vmatprep.subr.mxu0 0.0
    %1701 = vmatpush2.msra.mxu0 0.0
    %1702 = vmatprep.subr.mxu0 0.0
    %1703 = vmatpush2.msra.mxu0 0.0
    %1704 = vmatprep.subr.mxu0 0.0
    %1705 = vmatpush2.msra.mxu0 0.0
    %1706 = vmatprep.mubr.f32.mxu0 0.0
    %1707 = vmatmul.mubr.f32.gmra.mxu0 %v1640
    %v1708 = vpop.f32.mrf.mxu0
    %v1709 = vadd.f32 0.0, %v1708
    %v1710 = vpop.f32.mrf.mxu0
    %1711 = vdwg.mxu0
    %v1712 = vsel %vm1422, %v1556, 0
    %1714 = vmatprep.subr.mxu0 0.0
    %1715 = vmatpush1.msra.mxu0 0.0
    %1716 = vmatprep.subr.mxu0 0.0
    %1717 = vmatpush1.msra.mxu0 0.0
    %1718 = vmatprep.subr.mxu0 0.0
    %1719 = vmatpush1.msra.mxu0 0.0
    %1720 = vmatprep.subr.mxu0 0.0
    %1721 = vmatpush1.msra.mxu0 0.0
    %1722 = vmatprep.subr.mxu0 0.0
    %1723 = vmatpush1.msra.mxu0 0.0
    %1724 = vmatprep.subr.mxu0 0.0
    %1725 = vmatpush1.msra.mxu0 0.0
    %1726 = vmatprep.subr.mxu0 0.0
    %1727 = vmatpush1.msra.mxu0 0.0
    %1728 = vmatprep.subr.mxu0 0.0
    %1729 = vmatpush1.msra.mxu0 0.0
    %1730 = vmatprep.subr.mxu0 0.0
    %1731 = vmatpush1.msra.mxu0 0.0
    %1732 = vmatprep.subr.mxu0 0.0
    %1733 = vmatpush1.msra.mxu0 0.0
    %1734 = vmatprep.subr.mxu0 0.0
    %1735 = vmatpush1.msra.mxu0 0.0
    %1736 = vmatprep.subr.mxu0 0.0
    %1737 = vmatpush1.msra.mxu0 0.0
    %1738 = vmatprep.subr.mxu0 0.0
    %1739 = vmatpush1.msra.mxu0 0.0
    %1740 = vmatprep.subr.mxu0 0.0
    %1741 = vmatpush1.msra.mxu0 0.0
    %1742 = vmatprep.subr.mxu0 0.0
    %1743 = vmatpush1.msra.mxu0 0.0
    %1744 = vmatprep.subr.mxu0 0.0
    %1745 = vmatpush1.msra.mxu0 %v1562
    %1746 = vmatprep.subr.mxu0 0.0
    %1747 = vmatpush2.msra.mxu0 0.0
    %1748 = vmatprep.subr.mxu0 0.0
    %1749 = vmatpush2.msra.mxu0 0.0
    %1750 = vmatprep.subr.mxu0 0.0
    %1751 = vmatpush2.msra.mxu0 0.0
    %1752 = vmatprep.subr.mxu0 0.0
    %1753 = vmatpush2.msra.mxu0 0.0
    %1754 = vmatprep.subr.mxu0 0.0
    %1755 = vmatpush2.msra.mxu0 0.0
    %1756 = vmatprep.subr.mxu0 0.0
    %1757 = vmatpush2.msra.mxu0 0.0
    %1758 = vmatprep.subr.mxu0 0.0
    %1759 = vmatpush2.msra.mxu0 0.0
    %1760 = vmatprep.subr.mxu0 0.0
    %1761 = vmatpush2.msra.mxu0 0.0
    %1762 = vmatprep.subr.mxu0 0.0
    %1763 = vmatpush2.msra.mxu0 0.0
    %1764 = vmatprep.subr.mxu0 0.0
    %1765 = vmatpush2.msra.mxu0 0.0
    %1766 = vmatprep.subr.mxu0 0.0
    %1767 = vmatpush2.msra.mxu0 0.0
    %1768 = vmatprep.subr.mxu0 0.0
    %1769 = vmatpush2.msra.mxu0 0.0
    %1770 = vmatprep.subr.mxu0 0.0
    %1771 = vmatpush2.msra.mxu0 0.0
    %1772 = vmatprep.subr.mxu0 0.0
    %1773 = vmatpush2.msra.mxu0 0.0
    %1774 = vmatprep.subr.mxu0 0.0
    %1775 = vmatpush2.msra.mxu0 0.0
    %1776 = vmatprep.subr.mxu0 0.0
    %1777 = vmatpush2.msra.mxu0 0.0
    %1778 = vmatprep.mubr.f32.mxu0 0.0
    %1779 = vmatmul.mubr.f32.gmra.mxu0 %v1712
    %v1780 = vpop.f32.mrf.mxu0
    %v1781 = vadd.f32 0.0, %v1780
    %v1782 = vpop.f32.mrf.mxu0
    %1783 = vdwg.mxu0
    %v1784 = vsel %vm1422, %v1558, 0
    %1786 = vmatprep.subr.mxu0 0.0
    %1787 = vmatpush1.msra.mxu0 0.0
    %1788 = vmatprep.subr.mxu0 0.0
    %1789 = vmatpush1.msra.mxu0 0.0
    %1790 = vmatprep.subr.mxu0 0.0
    %1791 = vmatpush1.msra.mxu0 0.0
    %1792 = vmatprep.subr.mxu0 0.0
    %1793 = vmatpush1.msra.mxu0 0.0
    %1794 = vmatprep.subr.mxu0 0.0
    %1795 = vmatpush1.msra.mxu0 0.0
    %1796 = vmatprep.subr.mxu0 0.0
    %1797 = vmatpush1.msra.mxu0 0.0
    %1798 = vmatprep.subr.mxu0 0.0
    %1799 = vmatpush1.msra.mxu0 0.0
    %1800 = vmatprep.subr.mxu0 0.0
    %1801 = vmatpush1.msra.mxu0 0.0
    %1802 = vmatprep.subr.mxu0 0.0
    %1803 = vmatpush1.msra.mxu0 0.0
    %1804 = vmatprep.subr.mxu0 0.0
    %1805 = vmatpush1.msra.mxu0 0.0
    %1806 = vmatprep.subr.mxu0 0.0
    %1807 = vmatpush1.msra.mxu0 0.0
    %1808 = vmatprep.subr.mxu0 0.0
    %1809 = vmatpush1.msra.mxu0 0.0
    %1810 = vmatprep.subr.mxu0 0.0
    %1811 = vmatpush1.msra.mxu0 0.0
    %1812 = vmatprep.subr.mxu0 0.0
    %1813 = vmatpush1.msra.mxu0 0.0
    %1814 = vmatprep.subr.mxu0 0.0
    %1815 = vmatpush1.msra.mxu0 0.0
    %1816 = vmatprep.subr.mxu0 0.0
    %1817 = vmatpush1.msra.mxu0 %v1563
    %1818 = vmatprep.subr.mxu0 0.0
    %1819 = vmatpush2.msra.mxu0 0.0
    %1820 = vmatprep.subr.mxu0 0.0
    %1821 = vmatpush2.msra.mxu0 0.0
    %1822 = vmatprep.subr.mxu0 0.0
    %1823 = vmatpush2.msra.mxu0 0.0
    %1824 = vmatprep.subr.mxu0 0.0
    %1825 = vmatpush2.msra.mxu0 0.0
    %1826 = vmatprep.subr.mxu0 0.0
    %1827 = vmatpush2.msra.mxu0 0.0
    %1828 = vmatprep.subr.mxu0 0.0
    %1829 = vmatpush2.msra.mxu0 0.0
    %1830 = vmatprep.subr.mxu0 0.0
    %1831 = vmatpush2.msra.mxu0 0.0
    %1832 = vmatprep.subr.mxu0 0.0
    %1833 = vmatpush2.msra.mxu0 0.0
    %1834 = vmatprep.subr.mxu0 0.0
    %1835 = vmatpush2.msra.mxu0 0.0
    %1836 = vmatprep.subr.mxu0 0.0
    %1837 = vmatpush2.msra.mxu0 0.0
    %1838 = vmatprep.subr.mxu0 0.0
    %1839 = vmatpush2.msra.mxu0 0.0
    %1840 = vmatprep.subr.mxu0 0.0
    %1841 = vmatpush2.msra.mxu0 0.0
    %1842 = vmatprep.subr.mxu0 0.0
    %1843 = vmatpush2.msra.mxu0 0.0
    %1844 = vmatprep.subr.mxu0 0.0
    %1845 = vmatpush2.msra.mxu0 0.0
    %1846 = vmatprep.subr.mxu0 0.0
    %1847 = vmatpush2.msra.mxu0 0.0
    %1848 = vmatprep.subr.mxu0 0.0
    %1849 = vmatpush2.msra.mxu0 0.0
    %1850 = vmatprep.mubr.f32.mxu0 0.0
    %1851 = vmatmul.mubr.f32.gmra.mxu0 %v1784
    %v1852 = vpop.f32.mrf.mxu0
    %v1853 = vadd.f32 0.0, %v1852
    %v1854 = vpop.f32.mrf.mxu0
    %1855 = vdwg.mxu0
    %v1856 = vsel %vm1422, %v1541, 0
    %1858 = vmatprep.subr.mxu0 0.0
    %1859 = vmatpush1.msra.mxu0 0.0
    %1860 = vmatprep.subr.mxu0 0.0
    %1861 = vmatpush1.msra.mxu0 0.0
    %1862 = vmatprep.subr.mxu0 0.0
    %1863 = vmatpush1.msra.mxu0 0.0
    %1864 = vmatprep.subr.mxu0 0.0
    %1865 = vmatpush1.msra.mxu0 0.0
    %1866 = vmatprep.subr.mxu0 0.0
    %1867 = vmatpush1.msra.mxu0 0.0
    %1868 = vmatprep.subr.mxu0 0.0
    %1869 = vmatpush1.msra.mxu0 0.0
    %1870 = vmatprep.subr.mxu0 0.0
    %1871 = vmatpush1.msra.mxu0 0.0
    %1872 = vmatprep.subr.mxu0 0.0
    %1873 = vmatpush1.msra.mxu0 0.0
    %1874 = vmatprep.subr.mxu0 0.0
    %1875 = vmatpush1.msra.mxu0 0.0
    %1876 = vmatprep.subr.mxu0 0.0
    %1877 = vmatpush1.msra.mxu0 0.0
    %1878 = vmatprep.subr.mxu0 0.0
    %1879 = vmatpush1.msra.mxu0 0.0
    %1880 = vmatprep.subr.mxu0 0.0
    %1881 = vmatpush1.msra.mxu0 0.0
    %1882 = vmatprep.subr.mxu0 0.0
    %1883 = vmatpush1.msra.mxu0 0.0
    %1884 = vmatprep.subr.mxu0 0.0
    %1885 = vmatpush1.msra.mxu0 0.0
    %1886 = vmatprep.subr.mxu0 0.0
    %1887 = vmatpush1.msra.mxu0 0.0
    %1888 = vmatprep.subr.mxu0 0.0
    %1889 = vmatpush1.msra.mxu0 %v1564
    %1890 = vmatprep.subr.mxu0 0.0
    %1891 = vmatpush2.msra.mxu0 0.0
    %1892 = vmatprep.subr.mxu0 0.0
    %1893 = vmatpush2.msra.mxu0 0.0
    %1894 = vmatprep.subr.mxu0 0.0
    %1895 = vmatpush2.msra.mxu0 0.0
    %1896 = vmatprep.subr.mxu0 0.0
    %1897 = vmatpush2.msra.mxu0 0.0
    %1898 = vmatprep.subr.mxu0 0.0
    %1899 = vmatpush2.msra.mxu0 0.0
    %1900 = vmatprep.subr.mxu0 0.0
    %1901 = vmatpush2.msra.mxu0 0.0
    %1902 = vmatprep.subr.mxu0 0.0
    %1903 = vmatpush2.msra.mxu0 0.0
    %1904 = vmatprep.subr.mxu0 0.0
    %1905 = vmatpush2.msra.mxu0 0.0
    %1906 = vmatprep.subr.mxu0 0.0
    %1907 = vmatpush2.msra.mxu0 0.0
    %1908 = vmatprep.subr.mxu0 0.0
    %1909 = vmatpush2.msra.mxu0 0.0
    %1910 = vmatprep.subr.mxu0 0.0
    %1911 = vmatpush2.msra.mxu0 0.0
    %1912 = vmatprep.subr.mxu0 0.0
    %1913 = vmatpush2.msra.mxu0 0.0
    %1914 = vmatprep.subr.mxu0 0.0
    %1915 = vmatpush2.msra.mxu0 0.0
    %1916 = vmatprep.subr.mxu0 0.0
    %1917 = vmatpush2.msra.mxu0 0.0
    %1918 = vmatprep.subr.mxu0 0.0
    %1919 = vmatpush2.msra.mxu0 0.0
    %1920 = vmatprep.subr.mxu0 0.0
    %1921 = vmatpush2.msra.mxu0 0.0
    %1922 = vmatprep.mubr.f32.mxu0 0.0
    %1923 = vmatmul.mubr.f32.gmra.mxu0 %v1856
    %v1924 = vpop.f32.mrf.mxu0
    %v1925 = vadd.f32 0.0, %v1924
    %v1926 = vpop.f32.mrf.mxu0
    %1927 = vdwg.mxu0
    %v1928 = vsel %vm1422, %v1555, 0
    %1930 = vmatprep.subr.mxu0 0.0
    %1931 = vmatpush1.msra.mxu0 0.0
    %1932 = vmatprep.subr.mxu0 0.0
    %1933 = vmatpush1.msra.mxu0 0.0
    %1934 = vmatprep.subr.mxu0 0.0
    %1935 = vmatpush1.msra.mxu0 0.0
    %1936 = vmatprep.subr.mxu0 0.0
    %1937 = vmatpush1.msra.mxu0 0.0
    %1938 = vmatprep.subr.mxu0 0.0
    %1939 = vmatpush1.msra.mxu0 0.0
    %1940 = vmatprep.subr.mxu0 0.0
    %1941 = vmatpush1.msra.mxu0 0.0
    %1942 = vmatprep.subr.mxu0 0.0
    %1943 = vmatpush1.msra.mxu0 0.0
    %1944 = vmatprep.subr.mxu0 0.0
    %1945 = vmatpush1.msra.mxu0 0.0
    %1946 = vmatprep.subr.mxu0 0.0
    %1947 = vmatpush1.msra.mxu0 0.0
    %1948 = vmatprep.subr.mxu0 0.0
    %1949 = vmatpush1.msra.mxu0 0.0
    %1950 = vmatprep.subr.mxu0 0.0
    %1951 = vmatpush1.msra.mxu0 0.0
    %1952 = vmatprep.subr.mxu0 0.0
    %1953 = vmatpush1.msra.mxu0 0.0
    %1954 = vmatprep.subr.mxu0 0.0
    %1955 = vmatpush1.msra.mxu0 0.0
    %1956 = vmatprep.subr.mxu0 0.0
    %1957 = vmatpush1.msra.mxu0 0.0
    %1958 = vmatprep.subr.mxu0 0.0
    %1959 = vmatpush1.msra.mxu0 0.0
    %1960 = vmatprep.subr.mxu0 0.0
    %1961 = vmatpush1.msra.mxu0 %v1565
    %1962 = vmatprep.subr.mxu0 0.0
    %1963 = vmatpush2.msra.mxu0 0.0
    %1964 = vmatprep.subr.mxu0 0.0
    %1965 = vmatpush2.msra.mxu0 0.0
    %1966 = vmatprep.subr.mxu0 0.0
    %1967 = vmatpush2.msra.mxu0 0.0
    %1968 = vmatprep.subr.mxu0 0.0
    %1969 = vmatpush2.msra.mxu0 0.0
    %1970 = vmatprep.subr.mxu0 0.0
    %1971 = vmatpush2.msra.mxu0 0.0
    %1972 = vmatprep.subr.mxu0 0.0
    %1973 = vmatpush2.msra.mxu0 0.0
    %1974 = vmatprep.subr.mxu0 0.0
    %1975 = vmatpush2.msra.mxu0 0.0
    %1976 = vmatprep.subr.mxu0 0.0
    %1977 = vmatpush2.msra.mxu0 0.0
    %1978 = vmatprep.subr.mxu0 0.0
    %1979 = vmatpush2.msra.mxu0 0.0
    %1980 = vmatprep.subr.mxu0 0.0
    %1981 = vmatpush2.msra.mxu0 0.0
    %1982 = vmatprep.subr.mxu0 0.0
    %1983 = vmatpush2.msra.mxu0 0.0
    %1984 = vmatprep.subr.mxu0 0.0
    %1985 = vmatpush2.msra.mxu0 0.0
    %1986 = vmatprep.subr.mxu0 0.0
    %1987 = vmatpush2.msra.mxu0 0.0
    %1988 = vmatprep.subr.mxu0 0.0
    %1989 = vmatpush2.msra.mxu0 0.0
    %1990 = vmatprep.subr.mxu0 0.0
    %1991 = vmatpush2.msra.mxu0 0.0
    %1992 = vmatprep.subr.mxu0 0.0
    %1993 = vmatpush2.msra.mxu0 0.0
    %1994 = vmatprep.mubr.f32.mxu0 0.0
    %1995 = vmatmul.mubr.f32.gmra.mxu0 %v1928
    %v1996 = vpop.f32.mrf.mxu0
    %v1997 = vadd.f32 0.0, %v1996
    %v1998 = vpop.f32.mrf.mxu0
    %1999 = vdwg.mxu0
    %v2000 = vsel %vm1422, %v1557, 0
    %2002 = vmatprep.subr.mxu0 0.0
    %2003 = vmatpush1.msra.mxu0 0.0
    %2004 = vmatprep.subr.mxu0 0.0
    %2005 = vmatpush1.msra.mxu0 0.0
    %2006 = vmatprep.subr.mxu0 0.0
    %2007 = vmatpush1.msra.mxu0 0.0
    %2008 = vmatprep.subr.mxu0 0.0
    %2009 = vmatpush1.msra.mxu0 0.0
    %2010 = vmatprep.subr.mxu0 0.0
    %2011 = vmatpush1.msra.mxu0 0.0
    %2012 = vmatprep.subr.mxu0 0.0
    %2013 = vmatpush1.msra.mxu0 0.0
    %2014 = vmatprep.subr.mxu0 0.0
    %2015 = vmatpush1.msra.mxu0 0.0
    %2016 = vmatprep.subr.mxu0 0.0
    %2017 = vmatpush1.msra.mxu0 0.0
    %2018 = vmatprep.subr.mxu0 0.0
    %2019 = vmatpush1.msra.mxu0 0.0
    %2020 = vmatprep.subr.mxu0 0.0
    %2021 = vmatpush1.msra.mxu0 0.0
    %2022 = vmatprep.subr.mxu0 0.0
    %2023 = vmatpush1.msra.mxu0 0.0
    %2024 = vmatprep.subr.mxu0 0.0
    %2025 = vmatpush1.msra.mxu0 0.0
    %2026 = vmatprep.subr.mxu0 0.0
    %2027 = vmatpush1.msra.mxu0 0.0
    %2028 = vmatprep.subr.mxu0 0.0
    %2029 = vmatpush1.msra.mxu0 0.0
    %2030 = vmatprep.subr.mxu0 0.0
    %2031 = vmatpush1.msra.mxu0 0.0
    %2032 = vmatprep.subr.mxu0 0.0
    %2033 = vmatpush1.msra.mxu0 %v1566
    %2034 = vmatprep.subr.mxu0 0.0
    %2035 = vmatpush2.msra.mxu0 0.0
    %2036 = vmatprep.subr.mxu0 0.0
    %2037 = vmatpush2.msra.mxu0 0.0
    %2038 = vmatprep.subr.mxu0 0.0
    %2039 = vmatpush2.msra.mxu0 0.0
    %2040 = vmatprep.subr.mxu0 0.0
    %2041 = vmatpush2.msra.mxu0 0.0
    %2042 = vmatprep.subr.mxu0 0.0
    %2043 = vmatpush2.msra.mxu0 0.0
    %2044 = vmatprep.subr.mxu0 0.0
    %2045 = vmatpush2.msra.mxu0 0.0
    %2046 = vmatprep.subr.mxu0 0.0
    %2047 = vmatpush2.msra.mxu0 0.0
    %2048 = vmatprep.subr.mxu0 0.0
    %2049 = vmatpush2.msra.mxu0 0.0
    %2050 = vmatprep.subr.mxu0 0.0
    %2051 = vmatpush2.msra.mxu0 0.0
    %2052 = vmatprep.subr.mxu0 0.0
    %2053 = vmatpush2.msra.mxu0 0.0
    %2054 = vmatprep.subr.mxu0 0.0
    %2055 = vmatpush2.msra.mxu0 0.0
    %2056 = vmatprep.subr.mxu0 0.0
    %2057 = vmatpush2.msra.mxu0 0.0
    %2058 = vmatprep.subr.mxu0 0.0
    %2059 = vmatpush2.msra.mxu0 0.0
    %2060 = vmatprep.subr.mxu0 0.0
    %2061 = vmatpush2.msra.mxu0 0.0
    %2062 = vmatprep.subr.mxu0 0.0
    %2063 = vmatpush2.msra.mxu0 0.0
    %2064 = vmatprep.subr.mxu0 0.0
    %2065 = vmatpush2.msra.mxu0 0.0
    %2066 = vmatprep.mubr.f32.mxu0 0.0
    %2067 = vmatmul.mubr.f32.gmra.mxu0 %v2000
    %v2068 = vpop.f32.mrf.mxu0
    %v2069 = vadd.f32 0.0, %v2068
    %v2070 = vpop.f32.mrf.mxu0
    %2071 = vdwg.mxu0
    %v2072 = vsel %vm1422, %v1559, 0
    %2074 = vmatprep.subr.mxu0 0.0
    %2075 = vmatpush1.msra.mxu0 0.0
    %2076 = vmatprep.subr.mxu0 0.0
    %2077 = vmatpush1.msra.mxu0 0.0
    %2078 = vmatprep.subr.mxu0 0.0
    %2079 = vmatpush1.msra.mxu0 0.0
    %2080 = vmatprep.subr.mxu0 0.0
    %2081 = vmatpush1.msra.mxu0 0.0
    %2082 = vmatprep.subr.mxu0 0.0
    %2083 = vmatpush1.msra.mxu0 0.0
    %2084 = vmatprep.subr.mxu0 0.0
    %2085 = vmatpush1.msra.mxu0 0.0
    %2086 = vmatprep.subr.mxu0 0.0
    %2087 = vmatpush1.msra.mxu0 0.0
    %2088 = vmatprep.subr.mxu0 0.0
    %2089 = vmatpush1.msra.mxu0 0.0
    %2090 = vmatprep.subr.mxu0 0.0
    %2091 = vmatpush1.msra.mxu0 0.0
    %2092 = vmatprep.subr.mxu0 0.0
    %2093 = vmatpush1.msra.mxu0 0.0
    %2094 = vmatprep.subr.mxu0 0.0
    %2095 = vmatpush1.msra.mxu0 0.0
    %2096 = vmatprep.subr.mxu0 0.0
    %2097 = vmatpush1.msra.mxu0 0.0
    %2098 = vmatprep.subr.mxu0 0.0
    %2099 = vmatpush1.msra.mxu0 0.0
    %2100 = vmatprep.subr.mxu0 0.0
    %2101 = vmatpush1.msra.mxu0 0.0
    %2102 = vmatprep.subr.mxu0 0.0
    %2103 = vmatpush1.msra.mxu0 0.0
    %2104 = vmatprep.subr.mxu0 0.0
    %2105 = vmatpush1.msra.mxu0 %v1567
    %2106 = vmatprep.subr.mxu0 0.0
    %2107 = vmatpush2.msra.mxu0 0.0
    %2108 = vmatprep.subr.mxu0 0.0
    %2109 = vmatpush2.msra.mxu0 0.0
    %2110 = vmatprep.subr.mxu0 0.0
    %2111 = vmatpush2.msra.mxu0 0.0
    %2112 = vmatprep.subr.mxu0 0.0
    %2113 = vmatpush2.msra.mxu0 0.0
    %2114 = vmatprep.subr.mxu0 0.0
    %2115 = vmatpush2.msra.mxu0 0.0
    %2116 = vmatprep.subr.mxu0 0.0
    %2117 = vmatpush2.msra.mxu0 0.0
    %2118 = vmatprep.subr.mxu0 0.0
    %2119 = vmatpush2.msra.mxu0 0.0
    %2120 = vmatprep.subr.mxu0 0.0
    %2121 = vmatpush2.msra.mxu0 0.0
    %2122 = vmatprep.subr.mxu0 0.0
    %2123 = vmatpush2.msra.mxu0 0.0
    %2124 = vmatprep.subr.mxu0 0.0
    %2125 = vmatpush2.msra.mxu0 0.0
    %2126 = vmatprep.subr.mxu0 0.0
    %2127 = vmatpush2.msra.mxu0 0.0
    %2128 = vmatprep.subr.mxu0 0.0
    %2129 = vmatpush2.msra.mxu0 0.0
    %2130 = vmatprep.subr.mxu0 0.0
    %2131 = vmatpush2.msra.mxu0 0.0
    %2132 = vmatprep.subr.mxu0 0.0
    %2133 = vmatpush2.msra.mxu0 0.0
    %2134 = vmatprep.subr.mxu0 0.0
    %2135 = vmatpush2.msra.mxu0 0.0
    %2136 = vmatprep.subr.mxu0 0.0
    %2137 = vmatpush2.msra.mxu0 0.0
    %2138 = vmatprep.mubr.f32.mxu0 0.0
    %2139 = vmatmul.mubr.f32.gmra.mxu0 %v2072
    %v2140 = vpop.f32.mrf.mxu0
    %v2141 = vadd.f32 0.0, %v2140
    %v2142 = vpop.f32.mrf.mxu0
    %2143 = vdwg.mxu0
    %v2144 = vld [vmem:[#allocation17] sm:$0xff]
    %v2145 = vld [vmem:[#allocation17 + $0x8] sm:$0xff]
    %v2146 = vld [vmem:[#allocation17 + $0x10] sm:$0xff]
    %v2147 = vld [vmem:[#allocation17 + $0x18] sm:$0xff]
    %v2148 = vld [vmem:[#allocation17 + $0x20] sm:$0xff]
    %v2149 = vld [vmem:[#allocation17 + $0x28] sm:$0xff]
    %v2150 = vld [vmem:[#allocation17 + $0x30] sm:$0xff]
    %v2151 = vld [vmem:[#allocation17 + $0x38] sm:$0xff]
    %v2152 = vld [vmem:[#allocation17 + $0x40] sm:$0xff]
    %v2153 = vld [vmem:[#allocation17 + $0x48] sm:$0xff]
    %v2154 = vld [vmem:[#allocation17 + $0x50] sm:$0xff]
    %v2155 = vld [vmem:[#allocation17 + $0x58] sm:$0xff]
    %v2156 = vld [vmem:[#allocation17 + $0x60] sm:$0xff]
    %v2157 = vld [vmem:[#allocation17 + $0x68] sm:$0xff]
    %v2158 = vld [vmem:[#allocation17 + $0x70] sm:$0xff]
    %v2159 = vld [vmem:[#allocation17 + $0x78] sm:$0xff]
    %v2160 = vld [vmem:[#allocation17 + $0x80] sm:$0xff]
    %v2161 = vld [vmem:[#allocation17 + $0x88] sm:$0xff]
    %v2162 = vld [vmem:[#allocation17 + $0x90] sm:$0xff]
    %v2163 = vld [vmem:[#allocation17 + $0x98] sm:$0xff]
    %v2164 = vld [vmem:[#allocation17 + $0xa0] sm:$0xff]
    %v2165 = vld [vmem:[#allocation17 + $0xa8] sm:$0xff]
    %v2166 = vld [vmem:[#allocation17 + $0xb0] sm:$0xff]
    %v2167 = vld [vmem:[#allocation17 + $0xb8] sm:$0xff]
    %v2168 = vld [vmem:[#allocation17 + $0xc0] sm:$0xff]
    %v2169 = vld [vmem:[#allocation17 + $0xc8] sm:$0xff]
    %v2170 = vld [vmem:[#allocation17 + $0xd0] sm:$0xff]
    %v2171 = vld [vmem:[#allocation17 + $0xd8] sm:$0xff]
    %v2172 = vld [vmem:[#allocation17 + $0xe0] sm:$0xff]
    %v2173 = vld [vmem:[#allocation17 + $0xe8] sm:$0xff]
    %v2174 = vld [vmem:[#allocation17 + $0xf0] sm:$0xff]
    %v2175 = vld [vmem:[#allocation17 + $0xf8] sm:$0xff]
    %v2176 = vld [vmem:[#allocation17 + $0x100] sm:$0xff]
    %v2177 = vld [vmem:[#allocation17 + $0x108] sm:$0xff]
    %v2178 = vld [vmem:[#allocation17 + $0x110] sm:$0xff]
    %v2179 = vld [vmem:[#allocation17 + $0x118] sm:$0xff]
    %v2180 = vld [vmem:[#allocation17 + $0x120] sm:$0xff]
    %v2181 = vld [vmem:[#allocation17 + $0x128] sm:$0xff]
    %v2182 = vld [vmem:[#allocation17 + $0x130] sm:$0xff]
    %v2183 = vld [vmem:[#allocation17 + $0x138] sm:$0xff]
    %v2184 = vld [vmem:[#allocation17 + $0x140] sm:$0xff]
    %v2185 = vld [vmem:[#allocation17 + $0x148] sm:$0xff]
    %v2186 = vld [vmem:[#allocation17 + $0x150] sm:$0xff]
    %v2187 = vld [vmem:[#allocation17 + $0x158] sm:$0xff]
    %v2188 = vld [vmem:[#allocation17 + $0x160] sm:$0xff]
    %v2189 = vld [vmem:[#allocation17 + $0x168] sm:$0xff]
    %v2190 = vld [vmem:[#allocation17 + $0x170] sm:$0xff]
    %v2191 = vld [vmem:[#allocation17 + $0x178] sm:$0xff]
    %v2193 = vlaneseq
    %v2194 = vshrl.u32 %v2193, 7
    %v2195 = vsub.s32 0, %v2194
    %v2196 = vrot.slane %v227, %v2195
    %v2197 = vlaneseq
    %v2198 = vshrl.u32 %v2197, 7
    %v2199 = vsub.s32 1, %v2198
    %v2200 = vrot.slane %v227, %v2199
    %v2201 = vlaneseq
    %v2202 = vshrl.u32 %v2201, 7
    %v2203 = vsub.s32 2, %v2202
    %v2204 = vrot.slane %v227, %v2203
    %v2216 = vrot.slane %v1709, 7
    %v2217 = vsel %vm1402, %v2216, %v1637
    %v2218 = vrot.slane %v1781, 6
    %v2219 = vsel %vm1405, %v2218, %v2217
    %v2220 = vrot.slane %v1853, 5
    %v2221 = vsel %vm1408, %v2220, %v2219
    %v2222 = vrot.slane %v1925, 4
    %v2223 = vsel %vm1411, %v2222, %v2221
    %v2224 = vrot.slane %v1997, 3
    %v2225 = vsel %vm1414, %v2224, %v2223
    %v2226 = vrot.slane %v2069, 2
    %v2227 = vsel %vm1417, %v2226, %v2225
    %v2228 = vrot.slane %v2141, 1
    %v2229 = vsel %vm1420, %v2228, %v2227
    %2231 = vmatprep.subr.mxu0 %v2190
    %2232 = vmatpush1.msra.mxu0 %v2189
    %2233 = vmatprep.subr.mxu0 %v2187
    %2234 = vmatpush1.msra.mxu0 %v2186
    %2235 = vmatprep.subr.mxu0 %v2184
    %2236 = vmatpush1.msra.mxu0 %v2183
    %2237 = vmatprep.subr.mxu0 %v2181
    %2238 = vmatpush1.msra.mxu0 %v2180
    %2239 = vmatprep.subr.mxu0 %v2178
    %2240 = vmatpush1.msra.mxu0 %v2177
    %2241 = vmatprep.subr.mxu0 %v2175
    %2242 = vmatpush1.msra.mxu0 %v2174
    %2243 = vmatprep.subr.mxu0 %v2172
    %2244 = vmatpush1.msra.mxu0 %v2171
    %2245 = vmatprep.subr.mxu0 %v2169
    %2246 = vmatpush1.msra.mxu0 %v2168
    %2247 = vmatprep.subr.mxu0 %v2166
    %2248 = vmatpush1.msra.mxu0 %v2165
    %2249 = vmatprep.subr.mxu0 %v2163
    %2250 = vmatpush1.msra.mxu0 %v2162
    %2251 = vmatprep.subr.mxu0 %v2160
    %2252 = vmatpush1.msra.mxu0 %v2159
    %2253 = vmatprep.subr.mxu0 %v2157
    %2254 = vmatpush1.msra.mxu0 %v2156
    %2255 = vmatprep.subr.mxu0 %v2154
    %2256 = vmatpush1.msra.mxu0 %v2153
    %2257 = vmatprep.subr.mxu0 %v2151
    %2258 = vmatpush1.msra.mxu0 %v2150
    %2259 = vmatprep.subr.mxu0 %v2148
    %2260 = vmatpush1.msra.mxu0 %v2147
    %2261 = vmatprep.subr.mxu0 %v2145
    %2262 = vmatpush1.msra.mxu0 %v2144
    %2263 = vmatprep.subr.mxu0 0.0
    %2264 = vmatpush2.msra.mxu0 0.0
    %2265 = vmatprep.subr.mxu0 0.0
    %2266 = vmatpush2.msra.mxu0 0.0
    %2267 = vmatprep.subr.mxu0 0.0
    %2268 = vmatpush2.msra.mxu0 0.0
    %2269 = vmatprep.subr.mxu0 0.0
    %2270 = vmatpush2.msra.mxu0 0.0
    %2271 = vmatprep.subr.mxu0 0.0
    %2272 = vmatpush2.msra.mxu0 0.0
    %2273 = vmatprep.subr.mxu0 0.0
    %2274 = vmatpush2.msra.mxu0 0.0
    %2275 = vmatprep.subr.mxu0 0.0
    %2276 = vmatpush2.msra.mxu0 0.0
    %2277 = vmatprep.subr.mxu0 0.0
    %2278 = vmatpush2.msra.mxu0 0.0
    %2279 = vmatprep.subr.mxu0 0.0
    %2280 = vmatpush2.msra.mxu0 0.0
    %2281 = vmatprep.subr.mxu0 0.0
    %2282 = vmatpush2.msra.mxu0 0.0
    %2283 = vmatprep.subr.mxu0 0.0
    %2284 = vmatpush2.msra.mxu0 0.0
    %2285 = vmatprep.subr.mxu0 0.0
    %2286 = vmatpush2.msra.mxu0 0.0
    %2287 = vmatprep.subr.mxu0 0.0
    %2288 = vmatpush2.msra.mxu0 0.0
    %2289 = vmatprep.subr.mxu0 0.0
    %2290 = vmatpush2.msra.mxu0 0.0
    %2291 = vmatprep.subr.mxu0 0.0
    %2292 = vmatpush2.msra.mxu0 0.0
    %2293 = vmatprep.subr.mxu0 0.0
    %2294 = vmatpush2.msra.mxu0 0.0
    %2295 = vmatprep.mubr.f32.mxu0 0.0
    %2296 = vmatmul.mubr.f32.gmra.mxu0 %v2229
    %v2297 = vpop.f32.mrf.mxu0
    %v2298 = vadd.f32 %v2196, %v2297
    %v2299 = vpop.f32.mrf.mxu0
    %v2300 = vadd.f32 %v2200, %v2299
    %2301 = vdwg.mxu0
    %2302 = vmatprep.subr.mxu0 0.0
    %2303 = vmatpush1.msra.mxu0 %v2191
    %2304 = vmatprep.subr.mxu0 0.0
    %2305 = vmatpush1.msra.mxu0 %v2188
    %2306 = vmatprep.subr.mxu0 0.0
    %2307 = vmatpush1.msra.mxu0 %v2185
    %2308 = vmatprep.subr.mxu0 0.0
    %2309 = vmatpush1.msra.mxu0 %v2182
    %2310 = vmatprep.subr.mxu0 0.0
    %2311 = vmatpush1.msra.mxu0 %v2179
    %2312 = vmatprep.subr.mxu0 0.0
    %2313 = vmatpush1.msra.mxu0 %v2176
    %2314 = vmatprep.subr.mxu0 0.0
    %2315 = vmatpush1.msra.mxu0 %v2173
    %2316 = vmatprep.subr.mxu0 0.0
    %2317 = vmatpush1.msra.mxu0 %v2170
    %2318 = vmatprep.subr.mxu0 0.0
    %2319 = vmatpush1.msra.mxu0 %v2167
    %2320 = vmatprep.subr.mxu0 0.0
    %2321 = vmatpush1.msra.mxu0 %v2164
    %2322 = vmatprep.subr.mxu0 0.0
    %2323 = vmatpush1.msra.mxu0 %v2161
    %2324 = vmatprep.subr.mxu0 0.0
    %2325 = vmatpush1.msra.mxu0 %v2158
    %2326 = vmatprep.subr.mxu0 0.0
    %2327 = vmatpush1.msra.mxu0 %v2155
    %2328 = vmatprep.subr.mxu0 0.0
    %2329 = vmatpush1.msra.mxu0 %v2152
    %2330 = vmatprep.subr.mxu0 0.0
    %2331 = vmatpush1.msra.mxu0 %v2149
    %2332 = vmatprep.subr.mxu0 0.0
    %2333 = vmatpush1.msra.mxu0 %v2146
    %2334 = vmatprep.subr.mxu0 0.0
    %2335 = vmatpush2.msra.mxu0 0.0
    %2336 = vmatprep.subr.mxu0 0.0
    %2337 = vmatpush2.msra.mxu0 0.0
    %2338 = vmatprep.subr.mxu0 0.0
    %2339 = vmatpush2.msra.mxu0 0.0
    %2340 = vmatprep.subr.mxu0 0.0
    %2341 = vmatpush2.msra.mxu0 0.0
    %2342 = vmatprep.subr.mxu0 0.0
    %2343 = vmatpush2.msra.mxu0 0.0
    %2344 = vmatprep.subr.mxu0 0.0
    %2345 = vmatpush2.msra.mxu0 0.0
    %2346 = vmatprep.subr.mxu0 0.0
    %2347 = vmatpush2.msra.mxu0 0.0
    %2348 = vmatprep.subr.mxu0 0.0
    %2349 = vmatpush2.msra.mxu0 0.0
    %2350 = vmatprep.subr.mxu0 0.0
    %2351 = vmatpush2.msra.mxu0 0.0
    %2352 = vmatprep.subr.mxu0 0.0
    %2353 = vmatpush2.msra.mxu0 0.0
    %2354 = vmatprep.subr.mxu0 0.0
    %2355 = vmatpush2.msra.mxu0 0.0
    %2356 = vmatprep.subr.mxu0 0.0
    %2357 = vmatpush2.msra.mxu0 0.0
    %2358 = vmatprep.subr.mxu0 0.0
    %2359 = vmatpush2.msra.mxu0 0.0
    %2360 = vmatprep.subr.mxu0 0.0
    %2361 = vmatpush2.msra.mxu0 0.0
    %2362 = vmatprep.subr.mxu0 0.0
    %2363 = vmatpush2.msra.mxu0 0.0
    %2364 = vmatprep.subr.mxu0 0.0
    %2365 = vmatpush2.msra.mxu0 0.0
    %2366 = vmatprep.mubr.f32.mxu0 0.0
    %2367 = vmatmul.mubr.f32.gmra.mxu0 %v2229
    %v2368 = vpop.f32.mrf.mxu0
    %v2369 = vadd.f32 %v2204, %v2368
    %v2370 = vpop.f32.mrf.mxu0
    %2371 = vdwg.mxu0
    %v2372 = vld [vmem:[#allocation19] sm:$0xff]
    %v2373 = vld [vmem:[#allocation19 + $0x8] sm:$0xff]
    %v2374 = vld [vmem:[#allocation19 + $0x10] sm:$0xff]
    %v2375 = vld [vmem:[#allocation19 + $0x18] sm:$0xff]
    %v2376 = vld [vmem:[#allocation19 + $0x20] sm:$0xff]
    %v2377 = vld [vmem:[#allocation19 + $0x28] sm:$0xff]
    %v2378 = vld [vmem:[#allocation19 + $0x30] sm:$0xff]
    %v2379 = vld [vmem:[#allocation19 + $0x38] sm:$0xff]
    %v2380 = vld [vmem:[#allocation19 + $0x40] sm:$0xff]
    %v2381 = vld [vmem:[#allocation19 + $0x48] sm:$0xff]
    %v2382 = vld [vmem:[#allocation19 + $0x50] sm:$0xff]
    %v2383 = vld [vmem:[#allocation19 + $0x58] sm:$0xff]
    %v2384 = vld [vmem:[#allocation19 + $0x60] sm:$0xff]
    %v2385 = vld [vmem:[#allocation19 + $0x68] sm:$0xff]
    %v2386 = vld [vmem:[#allocation19 + $0x70] sm:$0xff]
    %v2387 = vld [vmem:[#allocation19 + $0x78] sm:$0xff]
    %v2388 = vld [vmem:[#allocation19 + $0x80] sm:$0xff]
    %v2389 = vld [vmem:[#allocation19 + $0x88] sm:$0xff]
    %v2390 = vld [vmem:[#allocation19 + $0x90] sm:$0xff]
    %v2391 = vld [vmem:[#allocation19 + $0x98] sm:$0xff]
    %v2392 = vld [vmem:[#allocation19 + $0xa0] sm:$0xff]
    %v2393 = vld [vmem:[#allocation19 + $0xa8] sm:$0xff]
    %v2394 = vld [vmem:[#allocation19 + $0xb0] sm:$0xff]
    %v2395 = vld [vmem:[#allocation19 + $0xb8] sm:$0xff]
    %v2396 = vld [vmem:[#allocation19 + $0xc0] sm:$0xff]
    %v2397 = vld [vmem:[#allocation19 + $0xc8] sm:$0xff]
    %v2398 = vld [vmem:[#allocation19 + $0xd0] sm:$0xff]
    %v2399 = vld [vmem:[#allocation19 + $0xd8] sm:$0xff]
    %v2400 = vld [vmem:[#allocation19 + $0xe0] sm:$0xff]
    %v2401 = vld [vmem:[#allocation19 + $0xe8] sm:$0xff]
    %v2402 = vld [vmem:[#allocation19 + $0xf0] sm:$0xff]
    %v2403 = vld [vmem:[#allocation19 + $0xf8] sm:$0xff]
    %v2404 = vld [vmem:[#allocation19 + $0x100] sm:$0xff]
    %v2405 = vld [vmem:[#allocation19 + $0x108] sm:$0xff]
    %v2406 = vld [vmem:[#allocation19 + $0x110] sm:$0xff]
    %v2407 = vld [vmem:[#allocation19 + $0x118] sm:$0xff]
    %v2408 = vld [vmem:[#allocation19 + $0x120] sm:$0xff]
    %v2409 = vld [vmem:[#allocation19 + $0x128] sm:$0xff]
    %v2410 = vld [vmem:[#allocation19 + $0x130] sm:$0xff]
    %v2411 = vld [vmem:[#allocation19 + $0x138] sm:$0xff]
    %v2412 = vld [vmem:[#allocation19 + $0x140] sm:$0xff]
    %v2413 = vld [vmem:[#allocation19 + $0x148] sm:$0xff]
    %v2414 = vld [vmem:[#allocation19 + $0x150] sm:$0xff]
    %v2415 = vld [vmem:[#allocation19 + $0x158] sm:$0xff]
    %v2416 = vld [vmem:[#allocation19 + $0x160] sm:$0xff]
    %v2417 = vld [vmem:[#allocation19 + $0x168] sm:$0xff]
    %v2418 = vld [vmem:[#allocation19 + $0x170] sm:$0xff]
    %v2419 = vld [vmem:[#allocation19 + $0x178] sm:$0xff]
    %v2421 = vlaneseq
    %v2422 = vshrl.u32 %v2421, 7
    %v2423 = vsub.s32 0, %v2422
    %v2424 = vrot.slane %v228, %v2423
    %v2425 = vlaneseq
    %v2426 = vshrl.u32 %v2425, 7
    %v2427 = vsub.s32 1, %v2426
    %v2428 = vrot.slane %v228, %v2427
    %v2429 = vlaneseq
    %v2430 = vshrl.u32 %v2429, 7
    %v2431 = vsub.s32 2, %v2430
    %v2432 = vrot.slane %v228, %v2431
    %2436 = vmatprep.subr.mxu0 %v2418
    %2437 = vmatpush1.msra.mxu0 %v2417
    %2438 = vmatprep.subr.mxu0 %v2415
    %2439 = vmatpush1.msra.mxu0 %v2414
    %2440 = vmatprep.subr.mxu0 %v2412
    %2441 = vmatpush1.msra.mxu0 %v2411
    %2442 = vmatprep.subr.mxu0 %v2409
    %2443 = vmatpush1.msra.mxu0 %v2408
    %2444 = vmatprep.subr.mxu0 %v2406
    %2445 = vmatpush1.msra.mxu0 %v2405
    %2446 = vmatprep.subr.mxu0 %v2403
    %2447 = vmatpush1.msra.mxu0 %v2402
    %2448 = vmatprep.subr.mxu0 %v2400
    %2449 = vmatpush1.msra.mxu0 %v2399
    %2450 = vmatprep.subr.mxu0 %v2397
    %2451 = vmatpush1.msra.mxu0 %v2396
    %2452 = vmatprep.subr.mxu0 %v2394
    %2453 = vmatpush1.msra.mxu0 %v2393
    %2454 = vmatprep.subr.mxu0 %v2391
    %2455 = vmatpush1.msra.mxu0 %v2390
    %2456 = vmatprep.subr.mxu0 %v2388
    %2457 = vmatpush1.msra.mxu0 %v2387
    %2458 = vmatprep.subr.mxu0 %v2385
    %2459 = vmatpush1.msra.mxu0 %v2384
    %2460 = vmatprep.subr.mxu0 %v2382
    %2461 = vmatpush1.msra.mxu0 %v2381
    %2462 = vmatprep.subr.mxu0 %v2379
    %2463 = vmatpush1.msra.mxu0 %v2378
    %2464 = vmatprep.subr.mxu0 %v2376
    %2465 = vmatpush1.msra.mxu0 %v2375
    %2466 = vmatprep.subr.mxu0 %v2373
    %2467 = vmatpush1.msra.mxu0 %v2372
    %2468 = vmatprep.subr.mxu0 0.0
    %2469 = vmatpush2.msra.mxu0 0.0
    %2470 = vmatprep.subr.mxu0 0.0
    %2471 = vmatpush2.msra.mxu0 0.0
    %2472 = vmatprep.subr.mxu0 0.0
    %2473 = vmatpush2.msra.mxu0 0.0
    %2474 = vmatprep.subr.mxu0 0.0
    %2475 = vmatpush2.msra.mxu0 0.0
    %2476 = vmatprep.subr.mxu0 0.0
    %2477 = vmatpush2.msra.mxu0 0.0
    %2478 = vmatprep.subr.mxu0 0.0
    %2479 = vmatpush2.msra.mxu0 0.0
    %2480 = vmatprep.subr.mxu0 0.0
    %2481 = vmatpush2.msra.mxu0 0.0
    %2482 = vmatprep.subr.mxu0 0.0
    %2483 = vmatpush2.msra.mxu0 0.0
    %2484 = vmatprep.subr.mxu0 0.0
    %2485 = vmatpush2.msra.mxu0 0.0
    %2486 = vmatprep.subr.mxu0 0.0
    %2487 = vmatpush2.msra.mxu0 0.0
    %2488 = vmatprep.subr.mxu0 0.0
    %2489 = vmatpush2.msra.mxu0 0.0
    %2490 = vmatprep.subr.mxu0 0.0
    %2491 = vmatpush2.msra.mxu0 0.0
    %2492 = vmatprep.subr.mxu0 0.0
    %2493 = vmatpush2.msra.mxu0 0.0
    %2494 = vmatprep.subr.mxu0 0.0
    %2495 = vmatpush2.msra.mxu0 0.0
    %2496 = vmatprep.subr.mxu0 0.0
    %2497 = vmatpush2.msra.mxu0 0.0
    %2498 = vmatprep.subr.mxu0 0.0
    %2499 = vmatpush2.msra.mxu0 0.0
    %2500 = vmatprep.mubr.f32.mxu0 0.0
    %2501 = vmatmul.mubr.f32.gmra.mxu0 %v757
    %v2502 = vpop.f32.mrf.mxu0
    %v2503 = vadd.f32 %v2424, %v2502
    %v2504 = vpop.f32.mrf.mxu0
    %v2505 = vadd.f32 %v2428, %v2504
    %2506 = vdwg.mxu0
    %2507 = vmatprep.subr.mxu0 0.0
    %2508 = vmatpush1.msra.mxu0 %v2419
    %2509 = vmatprep.subr.mxu0 0.0
    %2510 = vmatpush1.msra.mxu0 %v2416
    %2511 = vmatprep.subr.mxu0 0.0
    %2512 = vmatpush1.msra.mxu0 %v2413
    %2513 = vmatprep.subr.mxu0 0.0
    %2514 = vmatpush1.msra.mxu0 %v2410
    %2515 = vmatprep.subr.mxu0 0.0
    %2516 = vmatpush1.msra.mxu0 %v2407
    %2517 = vmatprep.subr.mxu0 0.0
    %2518 = vmatpush1.msra.mxu0 %v2404
    %2519 = vmatprep.subr.mxu0 0.0
    %2520 = vmatpush1.msra.mxu0 %v2401
    %2521 = vmatprep.subr.mxu0 0.0
    %2522 = vmatpush1.msra.mxu0 %v2398
    %2523 = vmatprep.subr.mxu0 0.0
    %2524 = vmatpush1.msra.mxu0 %v2395
    %2525 = vmatprep.subr.mxu0 0.0
    %2526 = vmatpush1.msra.mxu0 %v2392
    %2527 = vmatprep.subr.mxu0 0.0
    %2528 = vmatpush1.msra.mxu0 %v2389
    %2529 = vmatprep.subr.mxu0 0.0
    %2530 = vmatpush1.msra.mxu0 %v2386
    %2531 = vmatprep.subr.mxu0 0.0
    %2532 = vmatpush1.msra.mxu0 %v2383
    %2533 = vmatprep.subr.mxu0 0.0
    %2534 = vmatpush1.msra.mxu0 %v2380
    %2535 = vmatprep.subr.mxu0 0.0
    %2536 = vmatpush1.msra.mxu0 %v2377
    %2537 = vmatprep.subr.mxu0 0.0
    %2538 = vmatpush1.msra.mxu0 %v2374
    %2539 = vmatprep.subr.mxu0 0.0
    %2540 = vmatpush2.msra.mxu0 0.0
    %2541 = vmatprep.subr.mxu0 0.0
    %2542 = vmatpush2.msra.mxu0 0.0
    %2543 = vmatprep.subr.mxu0 0.0
    %2544 = vmatpush2.msra.mxu0 0.0
    %2545 = vmatprep.subr.mxu0 0.0
    %2546 = vmatpush2.msra.mxu0 0.0
    %2547 = vmatprep.subr.mxu0 0.0
    %2548 = vmatpush2.msra.mxu0 0.0
    %2549 = vmatprep.subr.mxu0 0.0
    %2550 = vmatpush2.msra.mxu0 0.0
    %2551 = vmatprep.subr.mxu0 0.0
    %2552 = vmatpush2.msra.mxu0 0.0
    %2553 = vmatprep.subr.mxu0 0.0
    %2554 = vmatpush2.msra.mxu0 0.0
    %2555 = vmatprep.subr.mxu0 0.0
    %2556 = vmatpush2.msra.mxu0 0.0
    %2557 = vmatprep.subr.mxu0 0.0
    %2558 = vmatpush2.msra.mxu0 0.0
    %2559 = vmatprep.subr.mxu0 0.0
    %2560 = vmatpush2.msra.mxu0 0.0
    %2561 = vmatprep.subr.mxu0 0.0
    %2562 = vmatpush2.msra.mxu0 0.0
    %2563 = vmatprep.subr.mxu0 0.0
    %2564 = vmatpush2.msra.mxu0 0.0
    %2565 = vmatprep.subr.mxu0 0.0
    %2566 = vmatpush2.msra.mxu0 0.0
    %2567 = vmatprep.subr.mxu0 0.0
    %2568 = vmatpush2.msra.mxu0 0.0
    %2569 = vmatprep.subr.mxu0 0.0
    %2570 = vmatpush2.msra.mxu0 0.0
    %2571 = vmatprep.mubr.f32.mxu0 0.0
    %2572 = vmatmul.mubr.f32.gmra.mxu0 %v757
    %v2573 = vpop.f32.mrf.mxu0
    %v2574 = vadd.f32 %v2432, %v2573
    %v2575 = vpop.f32.mrf.mxu0
    %2576 = vdwg.mxu0
    %v2577 = vadd.f32 %v2298, %v2503
    %v2578 = vxor.u32 %v2577, 2147483648
    %v2579 = vmul.f32 %v2578, 1.442695
    %v2580 = vpow.pop %v2579
    %v2581 = vadd.f32 %v2580, 1.0
    %v2582 = vrcp.pop %v2581
    %v2583 = vmul.f32 1.0, %v2582
    %v2584 = vadd.f32 %v2300, %v2505
    %v2585 = vxor.u32 %v2584, 2147483648
    %v2586 = vmul.f32 %v2585, 1.442695
    %v2587 = vpow.pop %v2586
    %v2588 = vadd.f32 %v2587, 1.0
    %v2589 = vrcp.pop %v2588
    %v2590 = vmul.f32 1.0, %v2589
    %v2591 = vmul.f32 %v2583, %v2574
    %v2592 = vadd.f32 %v2369, %v2591
    %v2593 = vtanh.pop %v2592
    %v2594 = vsub.f32 1.0, %v2590
    %v2595 = vmul.f32 %v2594, %v2593
    %v2596 = vmul.f32 %v2590, %v757
    %v2597 = vadd.f32 %v2595, %v2596
    %v2598 = vld [vmem:[#allocation20] sm:$0xff]
    %v2599 = vld [vmem:[#allocation20 + $0x8] sm:$0xff]
    %v2600 = vld [vmem:[#allocation20 + $0x10] sm:$0xff]
    %v2601 = vld [vmem:[#allocation20 + $0x18] sm:$0xff]
    %v2602 = vld [vmem:[#allocation20 + $0x20] sm:$0xff]
    %v2603 = vld [vmem:[#allocation20 + $0x28] sm:$0xff]
    %v2604 = vld [vmem:[#allocation20 + $0x30] sm:$0xff]
    %v2605 = vld [vmem:[#allocation20 + $0x38] sm:$0xff]
    %v2606 = vld [vmem:[#allocation20 + $0x40] sm:$0xff]
    %v2607 = vld [vmem:[#allocation20 + $0x48] sm:$0xff]
    %v2608 = vld [vmem:[#allocation20 + $0x50] sm:$0xff]
    %v2609 = vld [vmem:[#allocation20 + $0x58] sm:$0xff]
    %v2610 = vld [vmem:[#allocation20 + $0x60] sm:$0xff]
    %v2611 = vld [vmem:[#allocation20 + $0x68] sm:$0xff]
    %v2612 = vld [vmem:[#allocation20 + $0x70] sm:$0xff]
    %v2613 = vld [vmem:[#allocation20 + $0x78] sm:$0xff]
    %v2614 = vld [vmem:[#allocation20 + $0x80] sm:$0xff]
    %v2615 = vld [vmem:[#allocation20 + $0x88] sm:$0xff]
    %v2616 = vld [vmem:[#allocation20 + $0x90] sm:$0xff]
    %v2617 = vld [vmem:[#allocation20 + $0x98] sm:$0xff]
    %v2618 = vld [vmem:[#allocation20 + $0xa0] sm:$0xff]
    %v2619 = vld [vmem:[#allocation20 + $0xa8] sm:$0xff]
    %v2620 = vld [vmem:[#allocation20 + $0xb0] sm:$0xff]
    %v2621 = vld [vmem:[#allocation20 + $0xb8] sm:$0xff]
    %v2622 = vld [vmem:[#allocation20 + $0xc0] sm:$0xff]
    %v2623 = vld [vmem:[#allocation20 + $0xc8] sm:$0xff]
    %v2624 = vld [vmem:[#allocation20 + $0xd0] sm:$0xff]
    %v2625 = vld [vmem:[#allocation20 + $0xd8] sm:$0xff]
    %v2626 = vld [vmem:[#allocation20 + $0xe0] sm:$0xff]
    %v2627 = vld [vmem:[#allocation20 + $0xe8] sm:$0xff]
    %v2628 = vld [vmem:[#allocation20 + $0xf0] sm:$0xff]
    %v2629 = vld [vmem:[#allocation20 + $0xf8] sm:$0xff]
    %v2630 = vld [vmem:[#allocation20 + $0x100] sm:$0xff]
    %v2631 = vld [vmem:[#allocation20 + $0x108] sm:$0xff]
    %v2632 = vld [vmem:[#allocation20 + $0x110] sm:$0xff]
    %v2633 = vld [vmem:[#allocation20 + $0x118] sm:$0xff]
    %v2634 = vld [vmem:[#allocation20 + $0x120] sm:$0xff]
    %v2635 = vld [vmem:[#allocation20 + $0x128] sm:$0xff]
    %v2636 = vld [vmem:[#allocation20 + $0x130] sm:$0xff]
    %v2637 = vld [vmem:[#allocation20 + $0x138] sm:$0xff]
    %v2638 = vld [vmem:[#allocation20 + $0x140] sm:$0xff]
    %v2639 = vld [vmem:[#allocation20 + $0x148] sm:$0xff]
    %v2640 = vld [vmem:[#allocation20 + $0x150] sm:$0xff]
    %v2641 = vld [vmem:[#allocation20 + $0x158] sm:$0xff]
    %v2642 = vld [vmem:[#allocation20 + $0x160] sm:$0xff]
    %v2643 = vld [vmem:[#allocation20 + $0x168] sm:$0xff]
    %v2644 = vld [vmem:[#allocation20 + $0x170] sm:$0xff]
    %v2645 = vld [vmem:[#allocation20 + $0x178] sm:$0xff]
    %v2646 = vld [vmem:[#allocation20 + $0x180] sm:$0xff]
    %v2647 = vld [vmem:[#allocation20 + $0x188] sm:$0xff]
    %v2648 = vld [vmem:[#allocation20 + $0x190] sm:$0xff]
    %v2649 = vld [vmem:[#allocation20 + $0x198] sm:$0xff]
    %v2650 = vld [vmem:[#allocation20 + $0x1a0] sm:$0xff]
    %v2651 = vld [vmem:[#allocation20 + $0x1a8] sm:$0xff]
    %v2652 = vld [vmem:[#allocation20 + $0x1b0] sm:$0xff]
    %v2653 = vld [vmem:[#allocation20 + $0x1b8] sm:$0xff]
    %v2654 = vld [vmem:[#allocation20 + $0x1c0] sm:$0xff]
    %v2655 = vld [vmem:[#allocation20 + $0x1c8] sm:$0xff]
    %v2656 = vld [vmem:[#allocation20 + $0x1d0] sm:$0xff]
    %v2657 = vld [vmem:[#allocation20 + $0x1d8] sm:$0xff]
    %v2658 = vld [vmem:[#allocation20 + $0x1e0] sm:$0xff]
    %v2659 = vld [vmem:[#allocation20 + $0x1e8] sm:$0xff]
    %v2660 = vld [vmem:[#allocation20 + $0x1f0] sm:$0xff]
    %v2661 = vld [vmem:[#allocation20 + $0x1f8] sm:$0xff]
    %v2662 = vld [vmem:[%s5] sm:$0xff]
    %v2663 = vld [vmem:[#allocation22] sm:$0xff]
    %v2664 = vld [vmem:[#allocation22 + $0x8] sm:$0xff]
    %v2665 = vld [vmem:[#allocation22 + $0x10] sm:$0xff]
    %v2666 = vld [vmem:[#allocation22 + $0x18] sm:$0xff]
    %v2667 = vld [vmem:[#allocation22 + $0x20] sm:$0xff]
    %v2668 = vld [vmem:[#allocation22 + $0x28] sm:$0xff]
    %v2669 = vld [vmem:[#allocation22 + $0x30] sm:$0xff]
    %v2670 = vld [vmem:[#allocation22 + $0x38] sm:$0xff]
    %v2671 = vld [vmem:[#allocation22 + $0x40] sm:$0xff]
    %v2672 = vld [vmem:[#allocation22 + $0x48] sm:$0xff]
    %v2673 = vld [vmem:[#allocation22 + $0x50] sm:$0xff]
    %v2674 = vld [vmem:[#allocation22 + $0x58] sm:$0xff]
    %v2675 = vld [vmem:[#allocation22 + $0x60] sm:$0xff]
    %v2676 = vld [vmem:[#allocation22 + $0x68] sm:$0xff]
    %v2677 = vld [vmem:[#allocation22 + $0x70] sm:$0xff]
    %v2678 = vld [vmem:[#allocation22 + $0x78] sm:$0xff]
    %v2679 = vld [vmem:[#allocation22 + $0x80] sm:$0xff]
    %v2680 = vld [vmem:[#allocation22 + $0x88] sm:$0xff]
    %v2681 = vld [vmem:[#allocation22 + $0x90] sm:$0xff]
    %v2682 = vld [vmem:[#allocation22 + $0x98] sm:$0xff]
    %v2683 = vld [vmem:[#allocation22 + $0xa0] sm:$0xff]
    %v2684 = vld [vmem:[#allocation22 + $0xa8] sm:$0xff]
    %v2685 = vld [vmem:[#allocation22 + $0xb0] sm:$0xff]
    %v2686 = vld [vmem:[#allocation22 + $0xb8] sm:$0xff]
    %v2687 = vld [vmem:[#allocation22 + $0xc0] sm:$0xff]
    %v2688 = vld [vmem:[#allocation22 + $0xc8] sm:$0xff]
    %v2689 = vld [vmem:[#allocation22 + $0xd0] sm:$0xff]
    %v2690 = vld [vmem:[#allocation22 + $0xd8] sm:$0xff]
    %v2691 = vld [vmem:[#allocation22 + $0xe0] sm:$0xff]
    %v2692 = vld [vmem:[#allocation22 + $0xe8] sm:$0xff]
    %v2693 = vld [vmem:[#allocation22 + $0xf0] sm:$0xff]
    %v2694 = vld [vmem:[#allocation22 + $0xf8] sm:$0xff]
    %v2695 = vld [vmem:[#allocation22 + $0x100] sm:$0xff]
    %v2696 = vld [vmem:[#allocation22 + $0x108] sm:$0xff]
    %v2697 = vld [vmem:[#allocation22 + $0x110] sm:$0xff]
    %v2698 = vld [vmem:[#allocation22 + $0x118] sm:$0xff]
    %v2699 = vld [vmem:[#allocation22 + $0x120] sm:$0xff]
    %v2700 = vld [vmem:[#allocation22 + $0x128] sm:$0xff]
    %v2701 = vld [vmem:[#allocation22 + $0x130] sm:$0xff]
    %v2702 = vld [vmem:[#allocation22 + $0x138] sm:$0xff]
    %v2703 = vld [vmem:[#allocation22 + $0x140] sm:$0xff]
    %v2704 = vld [vmem:[#allocation22 + $0x148] sm:$0xff]
    %v2705 = vld [vmem:[#allocation22 + $0x150] sm:$0xff]
    %v2706 = vld [vmem:[#allocation22 + $0x158] sm:$0xff]
    %v2707 = vld [vmem:[#allocation22 + $0x160] sm:$0xff]
    %v2708 = vld [vmem:[#allocation22 + $0x168] sm:$0xff]
    %v2709 = vld [vmem:[#allocation22 + $0x170] sm:$0xff]
    %v2710 = vld [vmem:[#allocation22 + $0x178] sm:$0xff]
    %v2711 = vld [vmem:[#allocation22 + $0x180] sm:$0xff]
    %v2712 = vld [vmem:[#allocation22 + $0x188] sm:$0xff]
    %v2713 = vld [vmem:[#allocation22 + $0x190] sm:$0xff]
    %v2714 = vld [vmem:[#allocation22 + $0x198] sm:$0xff]
    %v2715 = vld [vmem:[#allocation22 + $0x1a0] sm:$0xff]
    %v2716 = vld [vmem:[#allocation22 + $0x1a8] sm:$0xff]
    %v2717 = vld [vmem:[#allocation22 + $0x1b0] sm:$0xff]
    %v2718 = vld [vmem:[#allocation22 + $0x1b8] sm:$0xff]
    %v2719 = vld [vmem:[#allocation22 + $0x1c0] sm:$0xff]
    %v2720 = vld [vmem:[#allocation22 + $0x1c8] sm:$0xff]
    %v2721 = vld [vmem:[#allocation22 + $0x1d0] sm:$0xff]
    %v2722 = vld [vmem:[#allocation22 + $0x1d8] sm:$0xff]
    %v2723 = vld [vmem:[#allocation22 + $0x1e0] sm:$0xff]
    %v2724 = vld [vmem:[#allocation22 + $0x1e8] sm:$0xff]
    %v2725 = vld [vmem:[#allocation22 + $0x1f0] sm:$0xff]
    %v2726 = vld [vmem:[#allocation22 + $0x1f8] sm:$0xff]
    %2727 = vmatprep.subr.mxu0 %v2724
    %2728 = vmatpush1.msra.mxu0 %v2723
    %2729 = vmatprep.subr.mxu0 %v2720
    %2730 = vmatpush1.msra.mxu0 %v2719
    %2731 = vmatprep.subr.mxu0 %v2716
    %2732 = vmatpush1.msra.mxu0 %v2715
    %2733 = vmatprep.subr.mxu0 %v2712
    %2734 = vmatpush1.msra.mxu0 %v2711
    %2735 = vmatprep.subr.mxu0 %v2708
    %2736 = vmatpush1.msra.mxu0 %v2707
    %2737 = vmatprep.subr.mxu0 %v2704
    %2738 = vmatpush1.msra.mxu0 %v2703
    %2739 = vmatprep.subr.mxu0 %v2700
    %2740 = vmatpush1.msra.mxu0 %v2699
    %2741 = vmatprep.subr.mxu0 %v2696
    %2742 = vmatpush1.msra.mxu0 %v2695
    %2743 = vmatprep.subr.mxu0 %v2692
    %2744 = vmatpush1.msra.mxu0 %v2691
    %2745 = vmatprep.subr.mxu0 %v2688
    %2746 = vmatpush1.msra.mxu0 %v2687
    %2747 = vmatprep.subr.mxu0 %v2684
    %2748 = vmatpush1.msra.mxu0 %v2683
    %2749 = vmatprep.subr.mxu0 %v2680
    %2750 = vmatpush1.msra.mxu0 %v2679
    %2751 = vmatprep.subr.mxu0 %v2676
    %2752 = vmatpush1.msra.mxu0 %v2675
    %2753 = vmatprep.subr.mxu0 %v2672
    %2754 = vmatpush1.msra.mxu0 %v2671
    %2755 = vmatprep.subr.mxu0 %v2668
    %2756 = vmatpush1.msra.mxu0 %v2667
    %2757 = vmatprep.subr.mxu0 %v2664
    %2758 = vmatpush1.msra.mxu0 %v2663
    %2759 = vmatprep.subr.mxu0 0.0
    %2760 = vmatpush2.msra.mxu0 0.0
    %2761 = vmatprep.subr.mxu0 0.0
    %2762 = vmatpush2.msra.mxu0 0.0
    %2763 = vmatprep.subr.mxu0 0.0
    %2764 = vmatpush2.msra.mxu0 0.0
    %2765 = vmatprep.subr.mxu0 0.0
    %2766 = vmatpush2.msra.mxu0 0.0
    %2767 = vmatprep.subr.mxu0 0.0
    %2768 = vmatpush2.msra.mxu0 0.0
    %2769 = vmatprep.subr.mxu0 0.0
    %2770 = vmatpush2.msra.mxu0 0.0
    %2771 = vmatprep.subr.mxu0 0.0
    %2772 = vmatpush2.msra.mxu0 0.0
    %2773 = vmatprep.subr.mxu0 0.0
    %2774 = vmatpush2.msra.mxu0 0.0
    %2775 = vmatprep.subr.mxu0 0.0
    %2776 = vmatpush2.msra.mxu0 0.0
    %2777 = vmatprep.subr.mxu0 0.0
    %2778 = vmatpush2.msra.mxu0 0.0
    %2779 = vmatprep.subr.mxu0 0.0
    %2780 = vmatpush2.msra.mxu0 0.0
    %2781 = vmatprep.subr.mxu0 0.0
    %2782 = vmatpush2.msra.mxu0 0.0
    %2783 = vmatprep.subr.mxu0 0.0
    %2784 = vmatpush2.msra.mxu0 0.0
    %2785 = vmatprep.subr.mxu0 0.0
    %2786 = vmatpush2.msra.mxu0 0.0
    %2787 = vmatprep.subr.mxu0 0.0
    %2788 = vmatpush2.msra.mxu0 0.0
    %2789 = vmatprep.subr.mxu0 0.0
    %2790 = vmatpush2.msra.mxu0 0.0
    %2791 = vmatprep.mubr.f32.mxu0 0.0
    %2792 = vmatmul.mubr.f32.gmra.mxu0 %v2662
    %v2793 = vpop.f32.mrf.mxu0
    %v2794 = vadd.f32 0.0, %v2793
    %v2795 = vpop.f32.mrf.mxu0
    %v2796 = vadd.f32 0.0, %v2795
    %2797 = vdwg.mxu0
    %2798 = vmatprep.subr.mxu0 %v2726
    %2799 = vmatpush1.msra.mxu0 %v2725
    %2800 = vmatprep.subr.mxu0 %v2722
    %2801 = vmatpush1.msra.mxu0 %v2721
    %2802 = vmatprep.subr.mxu0 %v2718
    %2803 = vmatpush1.msra.mxu0 %v2717
    %2804 = vmatprep.subr.mxu0 %v2714
    %2805 = vmatpush1.msra.mxu0 %v2713
    %2806 = vmatprep.subr.mxu0 %v2710
    %2807 = vmatpush1.msra.mxu0 %v2709
    %2808 = vmatprep.subr.mxu0 %v2706
    %2809 = vmatpush1.msra.mxu0 %v2705
    %2810 = vmatprep.subr.mxu0 %v2702
    %2811 = vmatpush1.msra.mxu0 %v2701
    %2812 = vmatprep.subr.mxu0 %v2698
    %2813 = vmatpush1.msra.mxu0 %v2697
    %2814 = vmatprep.subr.mxu0 %v2694
    %2815 = vmatpush1.msra.mxu0 %v2693
    %2816 = vmatprep.subr.mxu0 %v2690
    %2817 = vmatpush1.msra.mxu0 %v2689
    %2818 = vmatprep.subr.mxu0 %v2686
    %2819 = vmatpush1.msra.mxu0 %v2685
    %2820 = vmatprep.subr.mxu0 %v2682
    %2821 = vmatpush1.msra.mxu0 %v2681
    %2822 = vmatprep.subr.mxu0 %v2678
    %2823 = vmatpush1.msra.mxu0 %v2677
    %2824 = vmatprep.subr.mxu0 %v2674
    %2825 = vmatpush1.msra.mxu0 %v2673
    %2826 = vmatprep.subr.mxu0 %v2670
    %2827 = vmatpush1.msra.mxu0 %v2669
    %2828 = vmatprep.subr.mxu0 %v2666
    %2829 = vmatpush1.msra.mxu0 %v2665
    %2830 = vmatprep.subr.mxu0 0.0
    %2831 = vmatpush2.msra.mxu0 0.0
    %2832 = vmatprep.subr.mxu0 0.0
    %2833 = vmatpush2.msra.mxu0 0.0
    %2834 = vmatprep.subr.mxu0 0.0
    %2835 = vmatpush2.msra.mxu0 0.0
    %2836 = vmatprep.subr.mxu0 0.0
    %2837 = vmatpush2.msra.mxu0 0.0
    %2838 = vmatprep.subr.mxu0 0.0
    %2839 = vmatpush2.msra.mxu0 0.0
    %2840 = vmatprep.subr.mxu0 0.0
    %2841 = vmatpush2.msra.mxu0 0.0
    %2842 = vmatprep.subr.mxu0 0.0
    %2843 = vmatpush2.msra.mxu0 0.0
    %2844 = vmatprep.subr.mxu0 0.0
    %2845 = vmatpush2.msra.mxu0 0.0
    %2846 = vmatprep.subr.mxu0 0.0
    %2847 = vmatpush2.msra.mxu0 0.0
    %2848 = vmatprep.subr.mxu0 0.0
    %2849 = vmatpush2.msra.mxu0 0.0
    %2850 = vmatprep.subr.mxu0 0.0
    %2851 = vmatpush2.msra.mxu0 0.0
    %2852 = vmatprep.subr.mxu0 0.0
    %2853 = vmatpush2.msra.mxu0 0.0
    %2854 = vmatprep.subr.mxu0 0.0
    %2855 = vmatpush2.msra.mxu0 0.0
    %2856 = vmatprep.subr.mxu0 0.0
    %2857 = vmatpush2.msra.mxu0 0.0
    %2858 = vmatprep.subr.mxu0 0.0
    %2859 = vmatpush2.msra.mxu0 0.0
    %2860 = vmatprep.subr.mxu0 0.0
    %2861 = vmatpush2.msra.mxu0 0.0
    %2862 = vmatprep.mubr.f32.mxu0 0.0
    %2863 = vmatmul.mubr.f32.gmra.mxu0 %v2662
    %v2864 = vpop.f32.mrf.mxu0
    %v2865 = vadd.f32 0.0, %v2864
    %v2866 = vpop.f32.mrf.mxu0
    %v2867 = vadd.f32 0.0, %v2866
    %2868 = vdwg.mxu0
    %2869 = vmatprep.subr.mxu0 %v2659
    %2870 = vmatpush1.msra.mxu0 %v2658
    %2871 = vmatprep.subr.mxu0 %v2655
    %2872 = vmatpush1.msra.mxu0 %v2654
    %2873 = vmatprep.subr.mxu0 %v2651
    %2874 = vmatpush1.msra.mxu0 %v2650
    %2875 = vmatprep.subr.mxu0 %v2647
    %2876 = vmatpush1.msra.mxu0 %v2646
    %2877 = vmatprep.subr.mxu0 %v2643
    %2878 = vmatpush1.msra.mxu0 %v2642
    %2879 = vmatprep.subr.mxu0 %v2639
    %2880 = vmatpush1.msra.mxu0 %v2638
    %2881 = vmatprep.subr.mxu0 %v2635
    %2882 = vmatpush1.msra.mxu0 %v2634
    %2883 = vmatprep.subr.mxu0 %v2631
    %2884 = vmatpush1.msra.mxu0 %v2630
    %2885 = vmatprep.subr.mxu0 %v2627
    %2886 = vmatpush1.msra.mxu0 %v2626
    %2887 = vmatprep.subr.mxu0 %v2623
    %2888 = vmatpush1.msra.mxu0 %v2622
    %2889 = vmatprep.subr.mxu0 %v2619
    %2890 = vmatpush1.msra.mxu0 %v2618
    %2891 = vmatprep.subr.mxu0 %v2615
    %2892 = vmatpush1.msra.mxu0 %v2614
    %2893 = vmatprep.subr.mxu0 %v2611
    %2894 = vmatpush1.msra.mxu0 %v2610
    %2895 = vmatprep.subr.mxu0 %v2607
    %2896 = vmatpush1.msra.mxu0 %v2606
    %2897 = vmatprep.subr.mxu0 %v2603
    %2898 = vmatpush1.msra.mxu0 %v2602
    %2899 = vmatprep.subr.mxu0 %v2599
    %2900 = vmatpush1.msra.mxu0 %v2598
    %2901 = vmatprep.subr.mxu0 0.0
    %2902 = vmatpush2.msra.mxu0 0.0
    %2903 = vmatprep.subr.mxu0 0.0
    %2904 = vmatpush2.msra.mxu0 0.0
    %2905 = vmatprep.subr.mxu0 0.0
    %2906 = vmatpush2.msra.mxu0 0.0
    %2907 = vmatprep.subr.mxu0 0.0
    %2908 = vmatpush2.msra.mxu0 0.0
    %2909 = vmatprep.subr.mxu0 0.0
    %2910 = vmatpush2.msra.mxu0 0.0
    %2911 = vmatprep.subr.mxu0 0.0
    %2912 = vmatpush2.msra.mxu0 0.0
    %2913 = vmatprep.subr.mxu0 0.0
    %2914 = vmatpush2.msra.mxu0 0.0
    %2915 = vmatprep.subr.mxu0 0.0
    %2916 = vmatpush2.msra.mxu0 0.0
    %2917 = vmatprep.subr.mxu0 0.0
    %2918 = vmatpush2.msra.mxu0 0.0
    %2919 = vmatprep.subr.mxu0 0.0
    %2920 = vmatpush2.msra.mxu0 0.0
    %2921 = vmatprep.subr.mxu0 0.0
    %2922 = vmatpush2.msra.mxu0 0.0
    %2923 = vmatprep.subr.mxu0 0.0
    %2924 = vmatpush2.msra.mxu0 0.0
    %2925 = vmatprep.subr.mxu0 0.0
    %2926 = vmatpush2.msra.mxu0 0.0
    %2927 = vmatprep.subr.mxu0 0.0
    %2928 = vmatpush2.msra.mxu0 0.0
    %2929 = vmatprep.subr.mxu0 0.0
    %2930 = vmatpush2.msra.mxu0 0.0
    %2931 = vmatprep.subr.mxu0 0.0
    %2932 = vmatpush2.msra.mxu0 0.0
    %2933 = vmatprep.mubr.f32.mxu0 0.0
    %2934 = vmatmul.mubr.f32.gmra.mxu0 %v2597
    %v2935 = vpop.f32.mrf.mxu0
    %v2936 = vadd.f32 %v2794, %v2935
    %v2937 = vpop.f32.mrf.mxu0
    %v2938 = vadd.f32 %v2796, %v2937
    %2939 = vdwg.mxu0
    %2940 = vmatprep.subr.mxu0 %v2661
    %2941 = vmatpush1.msra.mxu0 %v2660
    %2942 = vmatprep.subr.mxu0 %v2657
    %2943 = vmatpush1.msra.mxu0 %v2656
    %2944 = vmatprep.subr.mxu0 %v2653
    %2945 = vmatpush1.msra.mxu0 %v2652
    %2946 = vmatprep.subr.mxu0 %v2649
    %2947 = vmatpush1.msra.mxu0 %v2648
    %2948 = vmatprep.subr.mxu0 %v2645
    %2949 = vmatpush1.msra.mxu0 %v2644
    %2950 = vmatprep.subr.mxu0 %v2641
    %2951 = vmatpush1.msra.mxu0 %v2640
    %2952 = vmatprep.subr.mxu0 %v2637
    %2953 = vmatpush1.msra.mxu0 %v2636
    %2954 = vmatprep.subr.mxu0 %v2633
    %2955 = vmatpush1.msra.mxu0 %v2632
    %2956 = vmatprep.subr.mxu0 %v2629
    %2957 = vmatpush1.msra.mxu0 %v2628
    %2958 = vmatprep.subr.mxu0 %v2625
    %2959 = vmatpush1.msra.mxu0 %v2624
    %2960 = vmatprep.subr.mxu0 %v2621
    %2961 = vmatpush1.msra.mxu0 %v2620
    %2962 = vmatprep.subr.mxu0 %v2617
    %2963 = vmatpush1.msra.mxu0 %v2616
    %2964 = vmatprep.subr.mxu0 %v2613
    %2965 = vmatpush1.msra.mxu0 %v2612
    %2966 = vmatprep.subr.mxu0 %v2609
    %2967 = vmatpush1.msra.mxu0 %v2608
    %2968 = vmatprep.subr.mxu0 %v2605
    %2969 = vmatpush1.msra.mxu0 %v2604
    %2970 = vmatprep.subr.mxu0 %v2601
    %2971 = vmatpush1.msra.mxu0 %v2600
    %2972 = vmatprep.subr.mxu0 0.0
    %2973 = vmatpush2.msra.mxu0 0.0
    %2974 = vmatprep.subr.mxu0 0.0
    %2975 = vmatpush2.msra.mxu0 0.0
    %2976 = vmatprep.subr.mxu0 0.0
    %2977 = vmatpush2.msra.mxu0 0.0
    %2978 = vmatprep.subr.mxu0 0.0
    %2979 = vmatpush2.msra.mxu0 0.0
    %2980 = vmatprep.subr.mxu0 0.0
    %2981 = vmatpush2.msra.mxu0 0.0
    %2982 = vmatprep.subr.mxu0 0.0
    %2983 = vmatpush2.msra.mxu0 0.0
    %2984 = vmatprep.subr.mxu0 0.0
    %2985 = vmatpush2.msra.mxu0 0.0
    %2986 = vmatprep.subr.mxu0 0.0
    %2987 = vmatpush2.msra.mxu0 0.0
    %2988 = vmatprep.subr.mxu0 0.0
    %2989 = vmatpush2.msra.mxu0 0.0
    %2990 = vmatprep.subr.mxu0 0.0
    %2991 = vmatpush2.msra.mxu0 0.0
    %2992 = vmatprep.subr.mxu0 0.0
    %2993 = vmatpush2.msra.mxu0 0.0
    %2994 = vmatprep.subr.mxu0 0.0
    %2995 = vmatpush2.msra.mxu0 0.0
    %2996 = vmatprep.subr.mxu0 0.0
    %2997 = vmatpush2.msra.mxu0 0.0
    %2998 = vmatprep.subr.mxu0 0.0
    %2999 = vmatpush2.msra.mxu0 0.0
    %3000 = vmatprep.subr.mxu0 0.0
    %3001 = vmatpush2.msra.mxu0 0.0
    %3002 = vmatprep.subr.mxu0 0.0
    %3003 = vmatpush2.msra.mxu0 0.0
    %3004 = vmatprep.mubr.f32.mxu0 0.0
    %3005 = vmatmul.mubr.f32.gmra.mxu0 %v2597
    %v3006 = vpop.f32.mrf.mxu0
    %v3007 = vadd.f32 %v2865, %v3006
    %v3008 = vpop.f32.mrf.mxu0
    %v3009 = vadd.f32 %v2867, %v3008
    %3010 = vdwg.mxu0
    %v3012 = vlaneseq
    %v3013 = vshrl.u32 %v3012, 7
    %v3014 = vsub.s32 0, %v3013
    %v3015 = vrot.slane %v229, %v3014
    %v3016 = vlaneseq
    %v3017 = vshrl.u32 %v3016, 7
    %v3018 = vsub.s32 1, %v3017
    %v3019 = vrot.slane %v229, %v3018
    %v3020 = vlaneseq
    %v3021 = vshrl.u32 %v3020, 7
    %v3022 = vsub.s32 2, %v3021
    %v3023 = vrot.slane %v229, %v3022
    %v3024 = vlaneseq
    %v3025 = vshrl.u32 %v3024, 7
    %v3026 = vsub.s32 3, %v3025
    %v3027 = vrot.slane %v229, %v3026
    %v3032 = vadd.f32 %v2936, %v3015
    %v3033 = vadd.f32 %v2938, %v3019
    %v3034 = vadd.f32 %v3007, %v3023
    %v3035 = vadd.f32 %v3009, %v3027
    %v3036 = vxor.u32 %v3032, 2147483648
    %v3037 = vmul.f32 %v3036, 1.442695
    %v3038 = vpow.pop %v3037
    %v3039 = vadd.f32 %v3038, 1.0
    %v3040 = vrcp.pop %v3039
    %v3041 = vmul.f32 1.0, %v3040
    %v3042 = vxor.u32 %v3033, 2147483648
    %v3043 = vmul.f32 %v3042, 1.442695
    %v3044 = vpow.pop %v3043
    %v3045 = vadd.f32 %v3044, 1.0
    %v3046 = vrcp.pop %v3045
    %v3047 = vmul.f32 1.0, %v3046
    %v3048 = vtanh.pop %v3034
    %v3049 = vxor.u32 %v3035, 2147483648
    %v3050 = vmul.f32 %v3049, 1.442695
    %v3051 = vpow.pop %v3050
    %v3052 = vadd.f32 %v3051, 1.0
    %v3053 = vrcp.pop %v3052
    %v3054 = vmul.f32 1.0, %v3053
    %v3055 = vld [vmem:[#allocation11] sm:$0xff]
    %v3056 = vmul.f32 %v3047, %v3055
    %v3057 = vmul.f32 %v3041, %v3048
    %v3058 = vadd.f32 %v3056, %v3057
    %v3059 = vtanh.pop %v3058
    %v3060 = vmul.f32 %v3054, %v3059
    %3061 = vst [vmem:[#allocation26] sm:$0xff] %v3060
    %3062 = vst [vmem:[#allocation27] sm:$0xff] %v3058
    %v3063 = vpack.c.bf16 %v3060, %v3060
    %3064 = vst [vmem:[#allocation29] sm:$0xf] %v3063
    %v3065 = vpack.c.bf16 %v225, %v225
    %3066 = vst [vmem:[#allocation29 + $0x4] sm:$0xf] %v3065
    // Predicated region
    $region114: #{tpu_custom_call.1} parent=1 // pred_check
      _
    $region115: #{tpu_custom_call.1} parent=1 // pred_check_branch
      %3068 = sbr.rel (0) target = $region117
    $region116: #{tpu_custom_call.1} parent=1 // pred_region
      %s3070 = ssub.s32 128, 128
      %3071 = vsyncadd [#allocation4], %s3070
      %s3073 = sshll.u32 [#allocation23], 4
      %s3074 = int_to_ptr.vmem [resolvable:$true] %s3073
      %3076 = dma.vmem_to_hbm [thread:$0]  %s3074, 128, %s15, [#allocation4]
    $region117: #{tpu_custom_call.1} parent=1 // pred_fallthru
      _
    // Predicated region
    $region118: #{tpu_custom_call.1} parent=1 // pred_check
      _
    $region119: #{tpu_custom_call.1} parent=1 // pred_check_branch
      %3078 = sbr.rel (0) target = $region121
    $region120: #{tpu_custom_call.1} parent=1 // pred_region
      %s3080 = ssub.s32 128, 128
      %3081 = vsyncadd [#allocation25], %s3080
      %s3083 = sshll.u32 [#allocation24], 4
      %s3084 = int_to_ptr.vmem [resolvable:$true] %s3083
      %3086 = dma.vmem_to_hbm [thread:$0]  %s3084, 128, %s16, [#allocation25]
    $region121: #{tpu_custom_call.1} parent=1 // pred_fallthru
      _
    // Predicated region
    $region122: #{tpu_custom_call.1} parent=1 // pred_check
      _
    $region123: #{tpu_custom_call.1} parent=1 // pred_check_branch
      %3088 = sbr.rel (0) target = $region125
    $region124: #{tpu_custom_call.1} parent=1 // pred_region
      %s3090 = ssub.s32 128, 128
      %3091 = vsyncadd [#allocation25], %s3090
      %s3093 = sshll.u32 [#allocation26], 4
      %s3094 = int_to_ptr.vmem [resolvable:$true] %s3093
      %3096 = dma.vmem_to_hbm [thread:$0]  %s3094, 128, %s17, [#allocation25]
    $region125: #{tpu_custom_call.1} parent=1 // pred_fallthru
      _
    // Predicated region
    $region126: #{tpu_custom_call.1} parent=1 // pred_check
      _
    $region127: #{tpu_custom_call.1} parent=1 // pred_check_branch
      %3098 = sbr.rel (0) target = $region129
    $region128: #{tpu_custom_call.1} parent=1 // pred_region
      %s3100 = ssub.s32 128, 128
      %3101 = vsyncadd [#allocation28], %s3100
      %s3103 = sshll.u32 [#allocation27], 4
      %s3104 = int_to_ptr.vmem [resolvable:$true] %s3103
      %3106 = dma.vmem_to_hbm [thread:$0]  %s3104, 128, %s18, [#allocation28]
    $region129: #{tpu_custom_call.1} parent=1 // pred_fallthru
      _
    // Predicated region
    $region130: #{tpu_custom_call.1} parent=1 // pred_check
      _
    $region131: #{tpu_custom_call.1} parent=1 // pred_check_branch
      %3108 = sbr.rel (0) target = $region133
    $region132: #{tpu_custom_call.1} parent=1 // pred_region
      %s3110 = ssub.s32 128, 128
      %3111 = vsyncadd [#allocation28], %s3110
      %s3113 = sshll.u32 [#allocation29], 4
      %s3114 = int_to_ptr.vmem [resolvable:$true] %s3113
      %3116 = dma.vmem_to_hbm [thread:$0]  %s3114, 128, %s19, [#allocation28]
    $region133: #{tpu_custom_call.1} parent=1 // pred_fallthru
      _
    // Predicated region
    $region134: #{tpu_custom_call.1} parent=1 // pred_check
      _
    $region135: #{tpu_custom_call.1} parent=1 // pred_check_branch
      %3118 = sbr.rel (0) target = $region137
    $region136: #{tpu_custom_call.1} parent=1 // pred_region
      %3119 = dma.done [#allocation4], 128
    $region137: #{tpu_custom_call.1} parent=1 // pred_fallthru
      _
    // Predicated region
    $region138: #{tpu_custom_call.1} parent=1 // pred_check
      _
    $region139: #{tpu_custom_call.1} parent=1 // pred_check_branch
      %3121 = sbr.rel (0) target = $region141
    $region140: #{tpu_custom_call.1} parent=1 // pred_region
      %3122 = dma.done [#allocation25], 128
    $region141: #{tpu_custom_call.1} parent=1 // pred_fallthru
      _
    // Predicated region
    $region142: #{tpu_custom_call.1} parent=1 // pred_check
      _
    $region143: #{tpu_custom_call.1} parent=1 // pred_check_branch
      %3124 = sbr.rel (0) target = $region145
    $region144: #{tpu_custom_call.1} parent=1 // pred_region
      %3125 = dma.done [#allocation25], 128
    $region145: #{tpu_custom_call.1} parent=1 // pred_fallthru
      _
    // Predicated region
    $region146: #{tpu_custom_call.1} parent=1 // pred_check
      _
    $region147: #{tpu_custom_call.1} parent=1 // pred_check_branch
      %3127 = sbr.rel (0) target = $region149
    $region148: #{tpu_custom_call.1} parent=1 // pred_region
      %3128 = dma.done [#allocation28], 128
    $region149: #{tpu_custom_call.1} parent=1 // pred_fallthru
      _
    // Predicated region
    $region150: #{tpu_custom_call.1} parent=1 // pred_check
      _
    $region151: #{tpu_custom_call.1} parent=1 // pred_check_branch
      %3130 = sbr.rel (0) target = $region153
    $region152: #{tpu_custom_call.1} parent=1 // pred_region
      %3131 = dma.done [#allocation28], 128
    $region153: #{tpu_custom_call.1} parent=1 // pred_fallthru
      _
    %3132 = vsyncpa [#allocation3], 1
    %3133 = vsyncpa [#allocation6], 1
    %3134 = vsyncpa [#allocation9], 1
    %3135 = vsyncpa [#allocation12], 1
    %3136 = vsyncpa [#allocation15], 1
    %3137 = vsyncpa [#allocation18], 1
    %3138 = vsyncpa [#allocation21], 1
    %3139 = vsyncpa [#allocation4], 1
    %3140 = vsyncpa [#allocation25], 1
    %3141 = vsyncpa [#allocation28], 1

</llo_original>
